<compile_context>
chip_gen: v7x
topology: tpu7x:2x2x1
jax: 0.10.0
libtpu: 0.0.40
codegen_flags: <defaults>
</compile_context>

<pallas_src>
import functools
import math

import jax
import jax.numpy as jnp
import numpy as np
from jax import lax
from jax.experimental import pallas as pl
from jax.experimental.pallas import tpu as pltpu

_MASK_FILL = float(-2.0 ** 32 + 1)


def _layernorm(y, gamma, beta, eps=1e-5):
    mean = jnp.mean(y, axis=-1, keepdims=True)
    var = jnp.mean((y - mean) ** 2, axis=-1, keepdims=True)
    inv = lax.rsqrt(var + eps)
    return (y - mean) * inv * gamma + beta


def _mm(a, w_ref, b_ref):
    # operands in compute dtype (bf16 option), f32 accumulation on the MXU
    return (jnp.dot(a.astype(w_ref.dtype), w_ref[...],
                    preferred_element_type=jnp.float32) + b_ref[...])


def _attention_ffn(xq, Qh, KhT, Vh, out_ref, score_ref,
                   wo_ref, bo_ref, g1_ref, be1_ref,
                   w1_ref, b1_ref, w2_ref, b2_ref, g2_ref, be2_ref,
                   *, causal_mask, q_row0, compute_dtype):
    """Shared attention + FFN tail.

    xq : (TQ, D) f32 residual rows
    Qh : (h, TQ, q)  compute dtype
    KhT: (h, q,  S)  compute dtype (pre-transposed -> no XLU transpose here)
    Vh : (h, S,  v)  compute dtype
    """
    h, tq, _ = Qh.shape
    s_len = KhT.shape[-1]
    v_dim = Vh.shape[-1]
    cd = compute_dtype

    # scores already include the 1/sqrt(q) scale (folded into W_q in wrapper)
    scores = jnp.einsum("hsd,hdt->hst", Qh, KhT,
                        preferred_element_type=jnp.float32)        # (h, TQ, S)

    if score_ref is not None:
        # torch stores the scaled score BEFORE masking / softmax; single
        # lane-dense slab already in torch's (h, b, s, s) layout.
        score_ref[...] = scores.reshape(h, 1, tq, s_len).astype(score_ref.dtype)

    if causal_mask:
        # 2-D iotas, broadcast over the head axis (pattern identical per head)
        row = q_row0 + lax.broadcasted_iota(jnp.int32, (tq, s_len), 0)
        col = lax.broadcasted_iota(jnp.int32, (tq, s_len), 1)
        scores = jnp.where((col <= row)[None], scores, jnp.float32(_MASK_FILL))

    # softmax over the key axis (statistics in f32; exact EUP reciprocal)
    s_max = jnp.max(scores, axis=-1, keepdims=True)
    p = jnp.exp(scores - s_max)
    p = p * pl.reciprocal(jnp.sum(p, axis=-1, keepdims=True), approx=False)

    attn = jnp.einsum("hst,htv->hsv", p.astype(cd), Vh,
                      preferred_element_type=jnp.float32)           # (h, TQ, v)
    attn_heads = pltpu.einshape("hrd->rhd", attn).reshape(tq, h * v_dim)

    mha = _mm(attn_heads, wo_ref, bo_ref)                           # (TQ, D)

    # residual + LayerNorm 1 (dropout == identity)
    y = _layernorm(mha + xq, g1_ref[...], be1_ref[...])

    # FeedForward
    hdn = jnp.maximum(_mm(y, w1_ref, b1_ref), 0.0)
    ff = _mm(hdn, w2_ref, b2_ref)

    # residual + LayerNorm 2
    out_ref[0] = _layernorm(ff + y, g2_ref[...], be2_ref[...]).astype(out_ref.dtype)


def encoder_kernel_fused(*refs, h, q_dim, v_dim, causal_mask, compute_dtype,
                         with_score):
    """Single query tile per batch row: one fused QKV projection, x passed once."""
    (x_ref, wqkv_ref, bqkv_ref, wo_ref, bo_ref,
     g1_ref, be1_ref, w1_ref, b1_ref, w2_ref, b2_ref, g2_ref, be2_ref) = refs[:13]
    out_ref = refs[13]
    score_ref = refs[14] if with_score else None

    x = x_ref[0]                              # (S, D)
    s_len = x.shape[0]
    hq, hv = h * q_dim, h * v_dim

    qkv = _mm(x, wqkv_ref, bqkv_ref)          # (S, 2*hq + hv): one MXU pass
    Q = qkv[:, :hq]
    K = qkv[:, hq:2 * hq]
    V = qkv[:, 2 * hq:2 * hq + hv]

    Qh = pltpu.einshape("rhd->hrd", Q.reshape(s_len, h, q_dim)).astype(compute_dtype)
    KhT = pltpu.einshape("rhd->hdr", K.reshape(s_len, h, q_dim)).astype(compute_dtype)
    Vh = pltpu.einshape("rhd->hrd", V.reshape(s_len, h, v_dim)).astype(compute_dtype)

    _attention_ffn(x, Qh, KhT, Vh, out_ref, score_ref,
                   wo_ref, bo_ref, g1_ref, be1_ref,
                   w1_ref, b1_ref, w2_ref, b2_ref, g2_ref, be2_ref,
                   causal_mask=causal_mask, q_row0=0, compute_dtype=compute_dtype)


def encoder_kernel_tiled(*refs, h, q_dim, v_dim, causal_mask, compute_dtype,
                         q_tile, with_score):
    """Multiple query tiles: K/V computed once per batch row into VMEM scratch."""
    (xq_ref, xf_ref, wq_ref, bq_ref, wkv_ref, bkv_ref, wo_ref, bo_ref,
     g1_ref, be1_ref, w1_ref, b1_ref, w2_ref, b2_ref, g2_ref, be2_ref) = refs[:16]
    if with_score:
        out_ref, score_ref, kT_ref, v_ref = refs[16:20]
    else:
        out_ref, kT_ref, v_ref = refs[16:19]
        score_ref = None

    t = pl.program_id(1)
    s_len = xf_ref.shape[1]
    hq = h * q_dim

    # K / V are identical for every query tile of this batch row: compute once
    # (t == 0), pre-transposed to (h, q, S) / (h, S, v), reuse across tiles.
    @pl.when(t == 0)
    def _():
        xf = xf_ref[0]                                  # (S, D)
        kv = _mm(xf, wkv_ref, bkv_ref)                  # (S, hq + hv), fused
        K = kv[:, :hq]
        V = kv[:, hq:]
        kT_ref[...] = pltpu.einshape("rhd->hdr",
                                     K.reshape(s_len, h, q_dim)).astype(kT_ref.dtype)
        v_ref[...] = pltpu.einshape("rhd->hrd",
                                    V.reshape(s_len, h, v_dim)).astype(v_ref.dtype)

    xq = xq_ref[0]                                      # (TQ, D)
    tq = xq.shape[0]
    Q = _mm(xq, wq_ref, bq_ref)                         # (TQ, hq)
    Qh = pltpu.einshape("rhd->hrd", Q.reshape(tq, h, q_dim)).astype(compute_dtype)

    _attention_ffn(xq, Qh, kT_ref[...], v_ref[...], out_ref, score_ref,
                   wo_ref, bo_ref, g1_ref, be1_ref,
                   w1_ref, b1_ref, w2_ref, b2_ref, g2_ref, be2_ref,
                   causal_mask=causal_mask, q_row0=t * q_tile,
                   compute_dtype=compute_dtype)


def encoder_forward(x, params, *, h, q_dim, v_dim, mask=False, stage="test",
                    return_score=True, compute_dtype=jnp.float32,
                    score_dtype=jnp.float32, seq_tile=None,
                    single_buffer_weights=True):
    """x: (B, S, D) float32.

    Returns (out (B,S,D) f32, score (h*B,S,S) score_dtype) or just out if
    return_score=False.
    """
    B, S, D = x.shape
    causal = bool(mask) and stage == "train"
    cd = np.dtype(compute_dtype)
    sd = np.dtype(score_dtype)

    (wq, bq, wk, bk, wv, bv, wo, bo, g1, be1,
     w1, b1, w2, b2, g2, be2) = params
    d_hidden = w1.shape[1]

    # Fold the 1/sqrt(q) attention scale into W_q / b_q (score unchanged:
    # torch stores the already-scaled score).
    scale = 1.0 / math.sqrt(q_dim)
    wq_s, bq_s = wq * scale, bq * scale

    def wcast(w):
        return w.astype(cd) if cd != np.dtype(jnp.float32) else w

    # query-row tiling: single tile (fully fused QKV) unless S is large
    if seq_tile is None:
        seq_tile = 512            # 128-MiB-VMEM friendly; bounds resident set
    if 0 < seq_tile < S and S % seq_tile == 0 and seq_tile % 8 == 0:
        tq, n_qt = seq_tile, S // seq_tile
    else:
        tq, n_qt = S, 1
    fused = (n_qt == 1)

    if fused:
        wqkv = wcast(jnp.concatenate([wq_s, wk, wv], axis=1))
        bqkv = jnp.concatenate([bq_s, bk, bv], axis=1)
        plist = (wqkv, bqkv, wcast(wo), bo, g1, be1,
                 wcast(w1), b1, wcast(w2), b2, g2, be2)
        kernel = functools.partial(
            encoder_kernel_fused, h=h, q_dim=q_dim, v_dim=v_dim,
            causal_mask=causal, compute_dtype=cd, with_score=return_score)
        grid = (B,)
        x_specs = [pl.BlockSpec((1, S, D), lambda b: (b, 0, 0))]
        out_specs = [pl.BlockSpec((1, S, D), lambda b: (b, 0, 0))]
        score_spec = pl.BlockSpec((h, 1, S, S), lambda b: (0, b, 0, 0))
        scratch = []
        dim_sem = ("parallel",)
        inputs = (x,)
    else:
        wkv = wcast(jnp.concatenate([wk, wv], axis=1))
        bkv = jnp.concatenate([bk, bv], axis=1)
        plist = (wcast(wq_s), bq_s, wkv, bkv, wcast(wo), bo, g1, be1,
                 wcast(w1), b1, wcast(w2), b2, g2, be2)
        kernel = functools.partial(
            encoder_kernel_tiled, h=h, q_dim=q_dim, v_dim=v_dim,
            causal_mask=causal, compute_dtype=cd, q_tile=tq,
            with_score=return_score)
        grid = (B, n_qt)
        x_specs = [pl.BlockSpec((1, tq, D), lambda b, t: (b, t, 0)),   # query rows
                   pl.BlockSpec((1, S, D), lambda b, t: (b, 0, 0))]    # full seq (K/V)
        out_specs = [pl.BlockSpec((1, tq, D), lambda b, t: (b, t, 0))]
        score_spec = pl.BlockSpec((h, 1, tq, S), lambda b, t: (0, b, t, 0))
        scratch = [pltpu.VMEM((h, q_dim, S), cd),      # K^T cached per batch row
                   pltpu.VMEM((h, S, v_dim), cd)]      # V   cached per batch row
        # t axis must be "arbitrary": the K/V scratch is reused across it
        dim_sem = ("parallel", "arbitrary")
        inputs = (x, x)

    n_grid = len(grid)

    def w_spec(p, buffered):
        zero = (0,) * p.ndim
        imap = (lambda b: zero) if n_grid == 1 else (lambda b, t: zero)
        if buffered:
            # grid-invariant operand: single-buffer to halve its VMEM footprint
            return pl.BlockSpec(p.shape, imap, pipeline_mode=pl.Buffered(1))
        return pl.BlockSpec(p.shape, imap)

    out_struct = jax.ShapeDtypeStruct((B, S, D), jnp.float32)
    if return_score:
        out_shape = (out_struct, jax.ShapeDtypeStruct((h, B, S, S), sd))
        out_specs_full = out_specs + [score_spec]
    else:
        out_shape = (out_struct,)
        out_specs_full = out_specs

    # advisory cost estimate for XLA scheduling
    flops = 2 * B * (S * D * (2 * h * q_dim + h * v_dim)
                     + h * S * S * (q_dim + v_dim)
                     + S * h * v_dim * D
                     + 2 * S * D * d_hidden)
    transcendentals = B * h * S * S
    weight_bytes = sum(int(p.size) * p.dtype.itemsize for p in plist)
    score_hbm = B * h * S * S * sd.itemsize if return_score else 0
    bytes_accessed = int(x.size * 4 * (1 if fused else 2)
                         + B * S * D * 4 + score_hbm + weight_bytes)

    # VMEM budget from actual resident buffers (+ headroom for temporaries)
    wbuf = weight_bytes * (1 if single_buffer_weights else 2)
    iobuf = (tq * D * 4 * 2 + (0 if fused else S * D * 4 * 2)
             + tq * D * 4 * 2
             + (h * tq * S * sd.itemsize * 2 if return_score else 0))
    kv_scr = 0 if fused else h * S * (q_dim + v_dim) * cd.itemsize
    temps = (4 * h * tq * S * 4
             + h * (tq * q_dim + S * (q_dim + v_dim)) * cd.itemsize
             + h * tq * v_dim * 4
             + 2 * tq * d_hidden * 4 + 6 * tq * D * 4)
    vmem_limit = int(1.5 * (wbuf + iobuf + kv_scr + temps)) + (8 << 20)
    vmem_limit = max(24 << 20, min(vmem_limit, 100 << 20))

    def _call(buffered):
        in_specs = x_specs + [w_spec(p, buffered) for p in plist]
        return pl.pallas_call(
            kernel,
            out_shape=out_shape,
            grid_spec=pltpu.PrefetchScalarGridSpec(
                num_scalar_prefetch=0,
                grid=grid,
                in_specs=in_specs,
                out_specs=out_specs_full,
                scratch_shapes=scratch),
            compiler_params=pltpu.CompilerParams(
                dimension_semantics=dim_sem,
                vmem_limit_bytes=int(vmem_limit)),
            cost_estimate=pl.CostEstimate(
                flops=int(flops), transcendentals=int(transcendentals),
                bytes_accessed=int(bytes_accessed)),
        )(*inputs, *plist)

    try:
        res = jax.block_until_ready(_call(single_buffer_weights))
    except Exception:
        if not single_buffer_weights:
            raise
        # pipeline_mode=pl.Buffered(1) not supported on this jax version:
        # fall back to default double-buffered weight blocks.
        res = _call(False)

    if return_score:
        out, score = res
        # already in torch's head-stacked layout: (h, B, S, S) -> (h*B, S, S)
        return out, score.reshape(h * B, S, S)
    return res[0]


def init_params(key, d_model, d_hidden, q, v, h):
    """Deterministic init; linear weights as (in, out), biases as (1, out)."""
    ks = jax.random.split(key, 12)

    def linear(k, in_dim, out_dim):
        kw, kb = jax.random.split(k)
        bound = 1.0 / math.sqrt(in_dim)
        w = jax.random.uniform(kw, (in_dim, out_dim), jnp.float32, -bound, bound)
        b = jax.random.uniform(kb, (1, out_dim), jnp.float32, -bound, bound)
        return w, b

    wq, bq = linear(ks[0], d_model, q * h)
    wk, bk = linear(ks[1], d_model, q * h)
    wv, bv = linear(ks[2], d_model, v * h)
    wo, bo = linear(ks[3], v * h, d_model)
    w1, b1 = linear(ks[4], d_model, d_hidden)
    w2, b2 = linear(ks[5], d_hidden, d_model)
    g1 = jnp.ones((1, d_model), jnp.float32)
    be1 = jnp.zeros((1, d_model), jnp.float32)
    g2 = jnp.ones((1, d_model), jnp.float32)
    be2 = jnp.zeros((1, d_model), jnp.float32)
    return (wq, bq, wk, bk, wv, bv, wo, bo, g1, be1, w1, b1, w2, b2, g2, be2)


def reference_forward(x, params, *, h, q_dim, v_dim, causal=False):
    """Pure-JAX reference mirroring the torch code (dropout = identity)."""
    (wq, bq, wk, bk, wv, bv, wo, bo, g1, be1, w1, b1, w2, b2, g2, be2) = params
    B, S, D = x.shape
    Q = jnp.concatenate(jnp.split(x @ wq + bq, h, axis=-1), axis=0)
    K = jnp.concatenate(jnp.split(x @ wk + bk, h, axis=-1), axis=0)
    V = jnp.concatenate(jnp.split(x @ wv + bv, h, axis=-1), axis=0)
    score = Q @ jnp.swapaxes(K, -1, -2) / math.sqrt(q_dim)
    s = score
    if causal:
        tril = jnp.tril(jnp.ones((S, S), jnp.float32))
        s = jnp.where(tril > 0, score, jnp.float32(_MASK_FILL))
    p = jax.nn.softmax(s, axis=-1)
    attn = p @ V
    attn_heads = jnp.concatenate(jnp.split(attn, h, axis=0), axis=-1)
    mha = attn_heads @ wo + bo

    def ln(y, g, b, eps=1e-5):
        m = y.mean(-1, keepdims=True)
        var = ((y - m) ** 2).mean(-1, keepdims=True)
        return (y - m) / jnp.sqrt(var + eps) * g + b

    y = ln(mha + x, g1, be1)
    ff = jnp.maximum(y @ w1 + b1, 0.0) @ w2 + b2
    out = ln(ff + y, g2, be2)
    return out, score


if __name__ == "__main__":
    B, S = 2, 8
    d_model, d_hidden = 32, 64
    q_dim, v_dim, h = 8, 8, 4

    key = jax.random.PRNGKey(0)
    kx, kp, kx2 = jax.random.split(key, 3)
    x = jax.random.normal(kx, (B, S, d_model), jnp.float32)
    params = init_params(kp, d_model, d_hidden, q_dim, v_dim, h)

    # 1) f32, eval path, single query tile (fused QKV projection)
    out, score = encoder_forward(x, params, h=h, q_dim=q_dim, v_dim=v_dim,
                                 mask=False, stage="test")
    out, score = jax.block_until_ready((out, score))
    ref_out, ref_score = reference_forward(x, params, h=h, q_dim=q_dim, v_dim=v_dim)
    assert out.shape == (B, S, d_model)
    assert score.shape == (h * B, S, S)
    assert jnp.allclose(score, ref_score, atol=1e-4, rtol=1e-4)
    assert jnp.allclose(out, ref_out, atol=5e-3, rtol=5e-3)

    # 2) causal-mask train path (dropout still identity)
    out_m, score_m = encoder_forward(x, params, h=h, q_dim=q_dim, v_dim=v_dim,
                                     mask=True, stage="train")
    out_m = jax.block_until_ready(out_m)
    ref_out_m, ref_score_m = reference_forward(x, params, h=h, q_dim=q_dim,
                                               v_dim=v_dim, causal=True)
    assert jnp.allclose(score_m, ref_score_m, atol=1e-4, rtol=1e-4)
    assert jnp.allclose(out_m, ref_out_m, atol=5e-3, rtol=5e-3)

    # 3) multi query-tile path: K/V cached in VMEM scratch across the t axis
    S2 = 16
    x2 = jax.random.normal(kx2, (B, S2, d_model), jnp.float32)
    out_t, score_t = encoder_forward(x2, params, h=h, q_dim=q_dim, v_dim=v_dim,
                                     mask=True, stage="train", seq_tile=8)
    out_t = jax.block_until_ready(out_t)
    ref_out_t, ref_score_t = reference_forward(x2, params, h=h, q_dim=q_dim,
                                               v_dim=v_dim, causal=True)
    assert score_t.shape == (h * B, S2, S2)
    assert jnp.allclose(score_t, ref_score_t, atol=1e-4, rtol=1e-4)
    assert jnp.allclose(out_t, ref_out_t, atol=5e-3, rtol=5e-3)

    # 4) score writeback skipped (saves the O(h*S^2) HBM traffic)
    out_ns = encoder_forward(x, params, h=h, q_dim=q_dim, v_dim=v_dim,
                             return_score=False)
    out_ns = jax.block_until_ready(out_ns)
    assert jnp.allclose(out_ns, ref_out, atol=5e-3, rtol=5e-3)

    # 5) bf16 MXU path (weights + matmul operands bf16, stats/LN in f32)
    out_bf, score_bf = encoder_forward(x, params, h=h, q_dim=q_dim, v_dim=v_dim,
                                       compute_dtype=jnp.bfloat16,
                                       score_dtype=jnp.bfloat16)
    out_bf = jax.block_until_ready(out_bf)
    err = float(jnp.max(jnp.abs(out_bf.astype(jnp.float32) - ref_out)))
    serr = float(jnp.max(jnp.abs(score_bf.astype(jnp.float32) - ref_score)))
    assert err < 0.25 and serr < 0.1, (err, serr)

    print("KERNEL_OK")
</pallas_src>

<mosaic_0001>
module attributes {stable_mosaic.version = 11 : i64} {
  func.func @encoder_kernel_fused(%arg0: i32, %arg1: memref<1x8x32xf32, #tpu.memory_space<vmem>>, %arg2: memref<32x96xf32, #tpu.memory_space<vmem>>, %arg3: memref<1x96xf32, #tpu.memory_space<vmem>>, %arg4: memref<32x32xf32, #tpu.memory_space<vmem>>, %arg5: memref<1x32xf32, #tpu.memory_space<vmem>>, %arg6: memref<1x32xf32, #tpu.memory_space<vmem>>, %arg7: memref<1x32xf32, #tpu.memory_space<vmem>>, %arg8: memref<32x64xf32, #tpu.memory_space<vmem>>, %arg9: memref<1x64xf32, #tpu.memory_space<vmem>>, %arg10: memref<64x32xf32, #tpu.memory_space<vmem>>, %arg11: memref<1x32xf32, #tpu.memory_space<vmem>>, %arg12: memref<1x32xf32, #tpu.memory_space<vmem>>, %arg13: memref<1x32xf32, #tpu.memory_space<vmem>>, %arg14: memref<1x8x32xf32, #tpu.memory_space<vmem>>, %arg15: memref<4x1x8x8xf32, #tpu.memory_space<vmem>>) attributes {dimension_semantics = [#tpu.dimension_semantics<parallel>], iteration_bounds = array<i64: 2>, scalar_prefetch = 0 : i64, scratch_operands = 0 : i64, tpu.core_type = #tpu.core_type<tc>, window_params = [{transform_indices = @transform_0, window_bounds = array<i64: 1, 8, 32>}, {pipeline_mode = #tpu.pipeline_mode<synchronous>, transform_indices = @transform_1, window_bounds = array<i64: 32, 96>}, {pipeline_mode = #tpu.pipeline_mode<synchronous>, transform_indices = @transform_2, window_bounds = array<i64: 1, 96>}, {pipeline_mode = #tpu.pipeline_mode<synchronous>, transform_indices = @transform_3, window_bounds = array<i64: 32, 32>}, {pipeline_mode = #tpu.pipeline_mode<synchronous>, transform_indices = @transform_4, window_bounds = array<i64: 1, 32>}, {pipeline_mode = #tpu.pipeline_mode<synchronous>, transform_indices = @transform_5, window_bounds = array<i64: 1, 32>}, {pipeline_mode = #tpu.pipeline_mode<synchronous>, transform_indices = @transform_6, window_bounds = array<i64: 1, 32>}, {pipeline_mode = #tpu.pipeline_mode<synchronous>, transform_indices = @transform_7, window_bounds = array<i64: 32, 64>}, {pipeline_mode = #tpu.pipeline_mode<synchronous>, transform_indices = @transform_8, window_bounds = array<i64: 1, 64>}, {pipeline_mode = #tpu.pipeline_mode<synchronous>, transform_indices = @transform_9, window_bounds = array<i64: 64, 32>}, {pipeline_mode = #tpu.pipeline_mode<synchronous>, transform_indices = @transform_10, window_bounds = array<i64: 1, 32>}, {pipeline_mode = #tpu.pipeline_mode<synchronous>, transform_indices = @transform_11, window_bounds = array<i64: 1, 32>}, {pipeline_mode = #tpu.pipeline_mode<synchronous>, transform_indices = @transform_12, window_bounds = array<i64: 1, 32>}, {transform_indices = @transform_13, window_bounds = array<i64: 1, 8, 32>}, {transform_indices = @transform_14, window_bounds = array<i64: 4, 1, 8, 8>}]} {
    %c0 = arith.constant 0 : index
    %c0_0 = arith.constant 0 : index
    %c0_1 = arith.constant 0 : index
    %0 = vector.load %arg1[%c0, %c0_0, %c0_1] : memref<1x8x32xf32, #tpu.memory_space<vmem>>, vector<1x8x32xf32>
    %1 = vector.shape_cast %0 : vector<1x8x32xf32> to vector<8x32xf32>
    %c0_2 = arith.constant 0 : index
    %c0_3 = arith.constant 0 : index
    %2 = vector.load %arg2[%c0_2, %c0_3] : memref<32x96xf32, #tpu.memory_space<vmem>>, vector<32x96xf32>
    %cst = arith.constant dense<0.000000e+00> : vector<8x96xf32>
    %3 = tpu.matmul %1, %2, %cst {dimension_numbers = #tpu.dot_dimension_numbers<[1], [0], [0], [1], [0, 0, 1, 1], [], []>} : vector<8x32xf32>, vector<32x96xf32>, vector<8x96xf32> -> vector<8x96xf32>
    %c0_4 = arith.constant 0 : index
    %c0_5 = arith.constant 0 : index
    %4 = vector.load %arg3[%c0_4, %c0_5] : memref<1x96xf32, #tpu.memory_space<vmem>>, vector<1x96xf32>
    %5 = vector.broadcast %4 : vector<1x96xf32> to vector<8x96xf32>
    %6 = arith.addf %3, %5 : vector<8x96xf32>
    %7 = vector.extract_strided_slice %6 {offsets = [0, 0], sizes = [8, 32], strides = [1, 1]} : vector<8x96xf32> to vector<8x32xf32>
    %8 = vector.extract_strided_slice %6 {offsets = [0, 32], sizes = [8, 32], strides = [1, 1]} : vector<8x96xf32> to vector<8x32xf32>
    %9 = vector.extract_strided_slice %6 {offsets = [0, 64], sizes = [8, 32], strides = [1, 1]} : vector<8x96xf32> to vector<8x32xf32>
    %10 = vector.shape_cast %7 : vector<8x32xf32> to vector<8x4x8xf32>
    %11 = tpu.transpose %10, [1, 0, 2] : vector<8x4x8xf32> -> vector<4x8x8xf32>
    %12 = vector.shape_cast %8 : vector<8x32xf32> to vector<8x4x8xf32>
    %13 = tpu.transpose %12, [1, 2, 0] : vector<8x4x8xf32> -> vector<4x8x8xf32>
    %14 = vector.shape_cast %9 : vector<8x32xf32> to vector<8x4x8xf32>
    %15 = tpu.transpose %14, [1, 0, 2] : vector<8x4x8xf32> -> vector<4x8x8xf32>
    "tpu.trace_start"() <{level = 10 : i32, message = "hsd,hdt->hst"}> : () -> ()
    %cst_6 = arith.constant dense<0.000000e+00> : vector<4x8x8xf32>
    %16 = tpu.matmul %11, %13, %cst_6 {dimension_numbers = #tpu.dot_dimension_numbers<[2], [1], [1], [2], [0, 0, 0, 1, 1, 2], [0], [0]>} : vector<4x8x8xf32>, vector<4x8x8xf32>, vector<4x8x8xf32> -> vector<4x8x8xf32>
    "tpu.trace_stop"() : () -> ()
    %17 = vector.shape_cast %16 : vector<4x8x8xf32> to vector<4x1x8x8xf32>
    %c0_7 = arith.constant 0 : index
    %c0_8 = arith.constant 0 : index
    %c0_9 = arith.constant 0 : index
    %c0_10 = arith.constant 0 : index
    %18 = vector.load %arg15[%c0_7, %c0_8, %c0_9, %c0_10] : memref<4x1x8x8xf32, #tpu.memory_space<vmem>>, vector<4x1x8x8xf32>
    tpu.vector_store %arg15[%c0_7, %c0_8, %c0_9, %c0_10], %17 {strides = array<i32>} : memref<4x1x8x8xf32, #tpu.memory_space<vmem>>, vector<4x1x8x8xf32>,
    %cst_11 = arith.constant dense<0xFF800000> : vector<4x8xf32>
    %19 = vector.multi_reduction <maximumf>, %16, %cst_11 [2] : vector<4x8x8xf32> to vector<4x8xf32>
    %20 = vector.shape_cast %19 : vector<4x8xf32> to vector<4x8x1xf32>
    %21 = vector.broadcast %20 : vector<4x8x1xf32> to vector<4x8x8xf32>
    %22 = arith.subf %16, %21 : vector<4x8x8xf32>
    %23 = math.exp %22 : vector<4x8x8xf32>
    %cst_12 = arith.constant dense<0.000000e+00> : vector<4x8xf32>
    %24 = vector.multi_reduction <add>, %23, %cst_12 [2] : vector<4x8x8xf32> to vector<4x8xf32>
    %25 = vector.shape_cast %24 : vector<4x8xf32> to vector<4x8x1xf32>
    %26 = tpu.reciprocal %25 : vector<4x8x1xf32> -> vector<4x8x1xf32>
    %27 = vector.broadcast %26 : vector<4x8x1xf32> to vector<4x8x8xf32>
    %28 = arith.mulf %23, %27 : vector<4x8x8xf32>
    "tpu.trace_start"() <{level = 10 : i32, message = "hst,htv->hsv"}> : () -> ()
    %cst_13 = arith.constant dense<0.000000e+00> : vector<4x8x8xf32>
    %29 = tpu.matmul %28, %15, %cst_13 {dimension_numbers = #tpu.dot_dimension_numbers<[2], [1], [1], [2], [0, 0, 0, 1, 1, 2], [0], [0]>} : vector<4x8x8xf32>, vector<4x8x8xf32>, vector<4x8x8xf32> -> vector<4x8x8xf32>
    "tpu.trace_stop"() : () -> ()
    %30 = tpu.transpose %29, [1, 0, 2] : vector<4x8x8xf32> -> vector<8x4x8xf32>
    %31 = vector.shape_cast %30 : vector<8x4x8xf32> to vector<8x32xf32>
    %c0_14 = arith.constant 0 : index
    %c0_15 = arith.constant 0 : index
    %32 = vector.load %arg4[%c0_14, %c0_15] : memref<32x32xf32, #tpu.memory_space<vmem>>, vector<32x32xf32>
    %cst_16 = arith.constant dense<0.000000e+00> : vector<8x32xf32>
    %33 = tpu.matmul %31, %32, %cst_16 {dimension_numbers = #tpu.dot_dimension_numbers<[1], [0], [0], [1], [0, 0, 1, 1], [], []>} : vector<8x32xf32>, vector<32x32xf32>, vector<8x32xf32> -> vector<8x32xf32>
    %c0_17 = arith.constant 0 : index
    %c0_18 = arith.constant 0 : index
    %34 = vector.load %arg5[%c0_17, %c0_18] : memref<1x32xf32, #tpu.memory_space<vmem>>, vector<1x32xf32>
    %35 = vector.broadcast %34 : vector<1x32xf32> to vector<8x32xf32>
    %36 = arith.addf %33, %35 : vector<8x32xf32>
    %37 = arith.addf %36, %1 : vector<8x32xf32>
    %c0_19 = arith.constant 0 : index
    %c0_20 = arith.constant 0 : index
    %38 = vector.load %arg6[%c0_19, %c0_20] : memref<1x32xf32, #tpu.memory_space<vmem>>, vector<1x32xf32>
    %c0_21 = arith.constant 0 : index
    %c0_22 = arith.constant 0 : index
    %39 = vector.load %arg7[%c0_21, %c0_22] : memref<1x32xf32, #tpu.memory_space<vmem>>, vector<1x32xf32>
    %cst_23 = arith.constant dense<0.000000e+00> : vector<8xf32>
    %40 = vector.multi_reduction <add>, %37, %cst_23 [1] : vector<8x32xf32> to vector<8xf32>
    %41 = vector.shape_cast %40 : vector<8xf32> to vector<8x1xf32>
    %cst_24 = arith.constant 3.200000e+01 : f32
    %42 = vector.broadcast %cst_24 : f32 to vector<8x1xf32>
    %43 = arith.divf %41, %42 : vector<8x1xf32>
    %44 = vector.broadcast %43 : vector<8x1xf32> to vector<8x32xf32>
    %45 = arith.subf %37, %44 : vector<8x32xf32>
    %46 = arith.mulf %45, %45 : vector<8x32xf32>
    %cst_25 = arith.constant dense<0.000000e+00> : vector<8xf32>
    %47 = vector.multi_reduction <add>, %46, %cst_25 [1] : vector<8x32xf32> to vector<8xf32>
    %48 = vector.shape_cast %47 : vector<8xf32> to vector<8x1xf32>
    %cst_26 = arith.constant 3.200000e+01 : f32
    %49 = vector.broadcast %cst_26 : f32 to vector<8x1xf32>
    %50 = arith.divf %48, %49 : vector<8x1xf32>
    %cst_27 = arith.constant 9.99999974E-6 : f32
    %51 = vector.broadcast %cst_27 : f32 to vector<8x1xf32>
    %52 = arith.addf %50, %51 : vector<8x1xf32>
    %53 = math.rsqrt %52 : vector<8x1xf32>
    %54 = vector.broadcast %43 : vector<8x1xf32> to vector<8x32xf32>
    %55 = arith.subf %37, %54 : vector<8x32xf32>
    %56 = vector.broadcast %53 : vector<8x1xf32> to vector<8x32xf32>
    %57 = arith.mulf %55, %56 : vector<8x32xf32>
    %58 = vector.broadcast %38 : vector<1x32xf32> to vector<8x32xf32>
    %59 = arith.mulf %57, %58 : vector<8x32xf32>
    %60 = vector.broadcast %39 : vector<1x32xf32> to vector<8x32xf32>
    %61 = arith.addf %59, %60 : vector<8x32xf32>
    %c0_28 = arith.constant 0 : index
    %c0_29 = arith.constant 0 : index
    %62 = vector.load %arg8[%c0_28, %c0_29] : memref<32x64xf32, #tpu.memory_space<vmem>>, vector<32x64xf32>
    %cst_30 = arith.constant dense<0.000000e+00> : vector<8x64xf32>
    %63 = tpu.matmul %61, %62, %cst_30 {dimension_numbers = #tpu.dot_dimension_numbers<[1], [0], [0], [1], [0, 0, 1, 1], [], []>} : vector<8x32xf32>, vector<32x64xf32>, vector<8x64xf32> -> vector<8x64xf32>
    %c0_31 = arith.constant 0 : index
    %c0_32 = arith.constant 0 : index
    %64 = vector.load %arg9[%c0_31, %c0_32] : memref<1x64xf32, #tpu.memory_space<vmem>>, vector<1x64xf32>
    %65 = vector.broadcast %64 : vector<1x64xf32> to vector<8x64xf32>
    %66 = arith.addf %63, %65 : vector<8x64xf32>
    %cst_33 = arith.constant 0.000000e+00 : f32
    %67 = vector.broadcast %cst_33 : f32 to vector<8x64xf32>
    %68 = arith.maximumf %66, %67 : vector<8x64xf32>
    %c0_34 = arith.constant 0 : index
    %c0_35 = arith.constant 0 : index
    %69 = vector.load %arg10[%c0_34, %c0_35] : memref<64x32xf32, #tpu.memory_space<vmem>>, vector<64x32xf32>
    %cst_36 = arith.constant dense<0.000000e+00> : vector<8x32xf32>
    %70 = tpu.matmul %68, %69, %cst_36 {dimension_numbers = #tpu.dot_dimension_numbers<[1], [0], [0], [1], [0, 0, 1, 1], [], []>} : vector<8x64xf32>, vector<64x32xf32>, vector<8x32xf32> -> vector<8x32xf32>
    %c0_37 = arith.constant 0 : index
    %c0_38 = arith.constant 0 : index
    %71 = vector.load %arg11[%c0_37, %c0_38] : memref<1x32xf32, #tpu.memory_space<vmem>>, vector<1x32xf32>
    %72 = vector.broadcast %71 : vector<1x32xf32> to vector<8x32xf32>
    %73 = arith.addf %70, %72 : vector<8x32xf32>
    %74 = arith.addf %73, %61 : vector<8x32xf32>
    %c0_39 = arith.constant 0 : index
    %c0_40 = arith.constant 0 : index
    %75 = vector.load %arg12[%c0_39, %c0_40] : memref<1x32xf32, #tpu.memory_space<vmem>>, vector<1x32xf32>
    %c0_41 = arith.constant 0 : index
    %c0_42 = arith.constant 0 : index
    %76 = vector.load %arg13[%c0_41, %c0_42] : memref<1x32xf32, #tpu.memory_space<vmem>>, vector<1x32xf32>
    %cst_43 = arith.constant dense<0.000000e+00> : vector<8xf32>
    %77 = vector.multi_reduction <add>, %74, %cst_43 [1] : vector<8x32xf32> to vector<8xf32>
    %78 = vector.shape_cast %77 : vector<8xf32> to vector<8x1xf32>
    %cst_44 = arith.constant 3.200000e+01 : f32
    %79 = vector.broadcast %cst_44 : f32 to vector<8x1xf32>
    %80 = arith.divf %78, %79 : vector<8x1xf32>
    %81 = vector.broadcast %80 : vector<8x1xf32> to vector<8x32xf32>
    %82 = arith.subf %74, %81 : vector<8x32xf32>
    %83 = arith.mulf %82, %82 : vector<8x32xf32>
    %cst_45 = arith.constant dense<0.000000e+00> : vector<8xf32>
    %84 = vector.multi_reduction <add>, %83, %cst_45 [1] : vector<8x32xf32> to vector<8xf32>
    %85 = vector.shape_cast %84 : vector<8xf32> to vector<8x1xf32>
    %cst_46 = arith.constant 3.200000e+01 : f32
    %86 = vector.broadcast %cst_46 : f32 to vector<8x1xf32>
    %87 = arith.divf %85, %86 : vector<8x1xf32>
    %cst_47 = arith.constant 9.99999974E-6 : f32
    %88 = vector.broadcast %cst_47 : f32 to vector<8x1xf32>
    %89 = arith.addf %87, %88 : vector<8x1xf32>
    %90 = math.rsqrt %89 : vector<8x1xf32>
    %91 = vector.broadcast %80 : vector<8x1xf32> to vector<8x32xf32>
    %92 = arith.subf %74, %91 : vector<8x32xf32>
    %93 = vector.broadcast %90 : vector<8x1xf32> to vector<8x32xf32>
    %94 = arith.mulf %92, %93 : vector<8x32xf32>
    %95 = vector.broadcast %75 : vector<1x32xf32> to vector<8x32xf32>
    %96 = arith.mulf %94, %95 : vector<8x32xf32>
    %97 = vector.broadcast %76 : vector<1x32xf32> to vector<8x32xf32>
    %98 = arith.addf %96, %97 : vector<8x32xf32>
    %c0_48 = arith.constant 0 : index
    %c0_49 = arith.constant 0 : index
    %c0_50 = arith.constant 0 : index
    %99 = vector.load %arg14[%c0_48, %c0_49, %c0_50] : memref<1x8x32xf32, #tpu.memory_space<vmem>>, vector<1x8x32xf32>
    %100 = vector.shape_cast %99 : vector<1x8x32xf32> to vector<8x32xf32>
    %101 = vector.shape_cast %98 : vector<8x32xf32> to vector<1x8x32xf32>
    tpu.vector_store %arg14[%c0_48, %c0_49, %c0_50], %101 {strides = array<i32>} : memref<1x8x32xf32, #tpu.memory_space<vmem>>, vector<1x8x32xf32>,
    return
  }
  func.func @transform_0(%arg0: i32) -> (i32, i32, i32) {
    %c0_i32 = arith.constant 0 : i32
    %c0_i32_0 = arith.constant 0 : i32
    %c0_i32_1 = arith.constant 0 : i32
    return %arg0, %c0_i32, %c0_i32_0 : i32, i32, i32
  }
  func.func @transform_1(%arg0: i32) -> (i32, i32) {
    %c0_i32 = arith.constant 0 : i32
    %c0_i32_0 = arith.constant 0 : i32
    %c0_i32_1 = arith.constant 0 : i32
    return %c0_i32, %c0_i32_0 : i32, i32
  }
  func.func @transform_2(%arg0: i32) -> (i32, i32) {
    %c0_i32 = arith.constant 0 : i32
    %c0_i32_0 = arith.constant 0 : i32
    %c0_i32_1 = arith.constant 0 : i32
    return %c0_i32, %c0_i32_0 : i32, i32
  }
  func.func @transform_3(%arg0: i32) -> (i32, i32) {
    %c0_i32 = arith.constant 0 : i32
    %c0_i32_0 = arith.constant 0 : i32
    %c0_i32_1 = arith.constant 0 : i32
    return %c0_i32, %c0_i32_0 : i32, i32
  }
  func.func @transform_4(%arg0: i32) -> (i32, i32) {
    %c0_i32 = arith.constant 0 : i32
    %c0_i32_0 = arith.constant 0 : i32
    %c0_i32_1 = arith.constant 0 : i32
    return %c0_i32, %c0_i32_0 : i32, i32
  }
  func.func @transform_5(%arg0: i32) -> (i32, i32) {
    %c0_i32 = arith.constant 0 : i32
    %c0_i32_0 = arith.constant 0 : i32
    %c0_i32_1 = arith.constant 0 : i32
    return %c0_i32, %c0_i32_0 : i32, i32
  }
  func.func @transform_6(%arg0: i32) -> (i32, i32) {
    %c0_i32 = arith.constant 0 : i32
    %c0_i32_0 = arith.constant 0 : i32
    %c0_i32_1 = arith.constant 0 : i32
    return %c0_i32, %c0_i32_0 : i32, i32
  }
  func.func @transform_7(%arg0: i32) -> (i32, i32) {
    %c0_i32 = arith.constant 0 : i32
    %c0_i32_0 = arith.constant 0 : i32
    %c0_i32_1 = arith.constant 0 : i32
    return %c0_i32, %c0_i32_0 : i32, i32
  }
  func.func @transform_8(%arg0: i32) -> (i32, i32) {
    %c0_i32 = arith.constant 0 : i32
    %c0_i32_0 = arith.constant 0 : i32
    %c0_i32_1 = arith.constant 0 : i32
    return %c0_i32, %c0_i32_0 : i32, i32
  }
  func.func @transform_9(%arg0: i32) -> (i32, i32) {
    %c0_i32 = arith.constant 0 : i32
    %c0_i32_0 = arith.constant 0 : i32
    %c0_i32_1 = arith.constant 0 : i32
    return %c0_i32, %c0_i32_0 : i32, i32
  }
  func.func @transform_10(%arg0: i32) -> (i32, i32) {
    %c0_i32 = arith.constant 0 : i32
    %c0_i32_0 = arith.constant 0 : i32
    %c0_i32_1 = arith.constant 0 : i32
    return %c0_i32, %c0_i32_0 : i32, i32
  }
  func.func @transform_11(%arg0: i32) -> (i32, i32) {
    %c0_i32 = arith.constant 0 : i32
    %c0_i32_0 = arith.constant 0 : i32
    %c0_i32_1 = arith.constant 0 : i32
    return %c0_i32, %c0_i32_0 : i32, i32
  }
  func.func @transform_12(%arg0: i32) -> (i32, i32) {
    %c0_i32 = arith.constant 0 : i32
    %c0_i32_0 = arith.constant 0 : i32
    %c0_i32_1 = arith.constant 0 : i32
    return %c0_i32, %c0_i32_0 : i32, i32
  }
  func.func @transform_13(%arg0: i32) -> (i32, i32, i32) {
    %c0_i32 = arith.constant 0 : i32
    %c0_i32_0 = arith.constant 0 : i32
    %c0_i32_1 = arith.constant 0 : i32
    return %arg0, %c0_i32, %c0_i32_0 : i32, i32, i32
  }
  func.func @transform_14(%arg0: i32) -> (i32, i32, i32, i32) {
    %c0_i32 = arith.constant 0 : i32
    %c0_i32_0 = arith.constant 0 : i32
    %c0_i32_1 = arith.constant 0 : i32
    %c0_i32_2 = arith.constant 0 : i32
    return %c0_i32, %arg0, %c0_i32_0, %c0_i32_1 : i32, i32, i32, i32
  }
}

module attributes {stable_mosaic.version = 11 : i64} {
  func.func @encoder_kernel_fused(%arg0: i32, %arg1: memref<1x8x32xf32, #tpu.memory_space<vmem>>, %arg2: memref<32x96xf32, #tpu.memory_space<vmem>>, %arg3: memref<1x96xf32, #tpu.memory_space<vmem>>, %arg4: memref<32x32xf32, #tpu.memory_space<vmem>>, %arg5: memref<1x32xf32, #tpu.memory_space<vmem>>, %arg6: memref<1x32xf32, #tpu.memory_space<vmem>>, %arg7: memref<1x32xf32, #tpu.memory_space<vmem>>, %arg8: memref<32x64xf32, #tpu.memory_space<vmem>>, %arg9: memref<1x64xf32, #tpu.memory_space<vmem>>, %arg10: memref<64x32xf32, #tpu.memory_space<vmem>>, %arg11: memref<1x32xf32, #tpu.memory_space<vmem>>, %arg12: memref<1x32xf32, #tpu.memory_space<vmem>>, %arg13: memref<1x32xf32, #tpu.memory_space<vmem>>, %arg14: memref<1x8x32xf32, #tpu.memory_space<vmem>>, %arg15: memref<4x1x8x8xf32, #tpu.memory_space<vmem>>) attributes {dimension_semantics = [#tpu.dimension_semantics<parallel>], iteration_bounds = array<i64: 2>, scalar_prefetch = 0 : i64, scratch_operands = 0 : i64, tpu.core_type = #tpu.core_type<tc>, window_params = [{transform_indices = @transform_0, window_bounds = array<i64: 1, 8, 32>}, {pipeline_mode = #tpu.pipeline_mode<synchronous>, transform_indices = @transform_1, window_bounds = array<i64: 32, 96>}, {pipeline_mode = #tpu.pipeline_mode<synchronous>, transform_indices = @transform_2, window_bounds = array<i64: 1, 96>}, {pipeline_mode = #tpu.pipeline_mode<synchronous>, transform_indices = @transform_3, window_bounds = array<i64: 32, 32>}, {pipeline_mode = #tpu.pipeline_mode<synchronous>, transform_indices = @transform_4, window_bounds = array<i64: 1, 32>}, {pipeline_mode = #tpu.pipeline_mode<synchronous>, transform_indices = @transform_5, window_bounds = array<i64: 1, 32>}, {pipeline_mode = #tpu.pipeline_mode<synchronous>, transform_indices = @transform_6, window_bounds = array<i64: 1, 32>}, {pipeline_mode = #tpu.pipeline_mode<synchronous>, transform_indices = @transform_7, window_bounds = array<i64: 32, 64>}, {pipeline_mode = #tpu.pipeline_mode<synchronous>, transform_indices = @transform_8, window_bounds = array<i64: 1, 64>}, {pipeline_mode = #tpu.pipeline_mode<synchronous>, transform_indices = @transform_9, window_bounds = array<i64: 64, 32>}, {pipeline_mode = #tpu.pipeline_mode<synchronous>, transform_indices = @transform_10, window_bounds = array<i64: 1, 32>}, {pipeline_mode = #tpu.pipeline_mode<synchronous>, transform_indices = @transform_11, window_bounds = array<i64: 1, 32>}, {pipeline_mode = #tpu.pipeline_mode<synchronous>, transform_indices = @transform_12, window_bounds = array<i64: 1, 32>}, {transform_indices = @transform_13, window_bounds = array<i64: 1, 8, 32>}, {transform_indices = @transform_14, window_bounds = array<i64: 4, 1, 8, 8>}]} {
    %c0 = arith.constant 0 : index
    %c0_0 = arith.constant 0 : index
    %c0_1 = arith.constant 0 : index
    %0 = vector.load %arg1[%c0, %c0_0, %c0_1] : memref<1x8x32xf32, #tpu.memory_space<vmem>>, vector<1x8x32xf32>
    %1 = vector.shape_cast %0 : vector<1x8x32xf32> to vector<8x32xf32>
    %c0_2 = arith.constant 0 : index
    %c0_3 = arith.constant 0 : index
    %2 = vector.load %arg2[%c0_2, %c0_3] : memref<32x96xf32, #tpu.memory_space<vmem>>, vector<32x96xf32>
    %cst = arith.constant dense<0.000000e+00> : vector<8x96xf32>
    %3 = tpu.matmul %1, %2, %cst {dimension_numbers = #tpu.dot_dimension_numbers<[1], [0], [0], [1], [0, 0, 1, 1], [], []>} : vector<8x32xf32>, vector<32x96xf32>, vector<8x96xf32> -> vector<8x96xf32>
    %c0_4 = arith.constant 0 : index
    %c0_5 = arith.constant 0 : index
    %4 = vector.load %arg3[%c0_4, %c0_5] : memref<1x96xf32, #tpu.memory_space<vmem>>, vector<1x96xf32>
    %5 = vector.broadcast %4 : vector<1x96xf32> to vector<8x96xf32>
    %6 = arith.addf %3, %5 : vector<8x96xf32>
    %7 = vector.extract_strided_slice %6 {offsets = [0, 0], sizes = [8, 32], strides = [1, 1]} : vector<8x96xf32> to vector<8x32xf32>
    %8 = vector.extract_strided_slice %6 {offsets = [0, 32], sizes = [8, 32], strides = [1, 1]} : vector<8x96xf32> to vector<8x32xf32>
    %9 = vector.extract_strided_slice %6 {offsets = [0, 64], sizes = [8, 32], strides = [1, 1]} : vector<8x96xf32> to vector<8x32xf32>
    %10 = vector.shape_cast %7 : vector<8x32xf32> to vector<8x4x8xf32>
    %11 = tpu.transpose %10, [1, 0, 2] : vector<8x4x8xf32> -> vector<4x8x8xf32>
    %12 = vector.shape_cast %8 : vector<8x32xf32> to vector<8x4x8xf32>
    %13 = tpu.transpose %12, [1, 2, 0] : vector<8x4x8xf32> -> vector<4x8x8xf32>
    %14 = vector.shape_cast %9 : vector<8x32xf32> to vector<8x4x8xf32>
    %15 = tpu.transpose %14, [1, 0, 2] : vector<8x4x8xf32> -> vector<4x8x8xf32>
    "tpu.trace_start"() <{level = 10 : i32, message = "hsd,hdt->hst"}> : () -> ()
    %cst_6 = arith.constant dense<0.000000e+00> : vector<4x8x8xf32>
    %16 = tpu.matmul %11, %13, %cst_6 {dimension_numbers = #tpu.dot_dimension_numbers<[2], [1], [1], [2], [0, 0, 0, 1, 1, 2], [0], [0]>} : vector<4x8x8xf32>, vector<4x8x8xf32>, vector<4x8x8xf32> -> vector<4x8x8xf32>
    "tpu.trace_stop"() : () -> ()
    %17 = vector.shape_cast %16 : vector<4x8x8xf32> to vector<4x1x8x8xf32>
    %c0_7 = arith.constant 0 : index
    %c0_8 = arith.constant 0 : index
    %c0_9 = arith.constant 0 : index
    %c0_10 = arith.constant 0 : index
    %18 = vector.load %arg15[%c0_7, %c0_8, %c0_9, %c0_10] : memref<4x1x8x8xf32, #tpu.memory_space<vmem>>, vector<4x1x8x8xf32>
    tpu.vector_store %arg15[%c0_7, %c0_8, %c0_9, %c0_10], %17 {strides = array<i32>} : memref<4x1x8x8xf32, #tpu.memory_space<vmem>>, vector<4x1x8x8xf32>,
    %cst_11 = arith.constant dense<0xFF800000> : vector<4x8xf32>
    %19 = vector.multi_reduction <maximumf>, %16, %cst_11 [2] : vector<4x8x8xf32> to vector<4x8xf32>
    %20 = vector.shape_cast %19 : vector<4x8xf32> to vector<4x8x1xf32>
    %21 = vector.broadcast %20 : vector<4x8x1xf32> to vector<4x8x8xf32>
    %22 = arith.subf %16, %21 : vector<4x8x8xf32>
    %23 = math.exp %22 : vector<4x8x8xf32>
    %cst_12 = arith.constant dense<0.000000e+00> : vector<4x8xf32>
    %24 = vector.multi_reduction <add>, %23, %cst_12 [2] : vector<4x8x8xf32> to vector<4x8xf32>
    %25 = vector.shape_cast %24 : vector<4x8xf32> to vector<4x8x1xf32>
    %26 = tpu.reciprocal %25 : vector<4x8x1xf32> -> vector<4x8x1xf32>
    %27 = vector.broadcast %26 : vector<4x8x1xf32> to vector<4x8x8xf32>
    %28 = arith.mulf %23, %27 : vector<4x8x8xf32>
    "tpu.trace_start"() <{level = 10 : i32, message = "hst,htv->hsv"}> : () -> ()
    %cst_13 = arith.constant dense<0.000000e+00> : vector<4x8x8xf32>
    %29 = tpu.matmul %28, %15, %cst_13 {dimension_numbers = #tpu.dot_dimension_numbers<[2], [1], [1], [2], [0, 0, 0, 1, 1, 2], [0], [0]>} : vector<4x8x8xf32>, vector<4x8x8xf32>, vector<4x8x8xf32> -> vector<4x8x8xf32>
    "tpu.trace_stop"() : () -> ()
    %30 = tpu.transpose %29, [1, 0, 2] : vector<4x8x8xf32> -> vector<8x4x8xf32>
    %31 = vector.shape_cast %30 : vector<8x4x8xf32> to vector<8x32xf32>
    %c0_14 = arith.constant 0 : index
    %c0_15 = arith.constant 0 : index
    %32 = vector.load %arg4[%c0_14, %c0_15] : memref<32x32xf32, #tpu.memory_space<vmem>>, vector<32x32xf32>
    %cst_16 = arith.constant dense<0.000000e+00> : vector<8x32xf32>
    %33 = tpu.matmul %31, %32, %cst_16 {dimension_numbers = #tpu.dot_dimension_numbers<[1], [0], [0], [1], [0, 0, 1, 1], [], []>} : vector<8x32xf32>, vector<32x32xf32>, vector<8x32xf32> -> vector<8x32xf32>
    %c0_17 = arith.constant 0 : index
    %c0_18 = arith.constant 0 : index
    %34 = vector.load %arg5[%c0_17, %c0_18] : memref<1x32xf32, #tpu.memory_space<vmem>>, vector<1x32xf32>
    %35 = vector.broadcast %34 : vector<1x32xf32> to vector<8x32xf32>
    %36 = arith.addf %33, %35 : vector<8x32xf32>
    %37 = arith.addf %36, %1 : vector<8x32xf32>
    %c0_19 = arith.constant 0 : index
    %c0_20 = arith.constant 0 : index
    %38 = vector.load %arg6[%c0_19, %c0_20] : memref<1x32xf32, #tpu.memory_space<vmem>>, vector<1x32xf32>
    %c0_21 = arith.constant 0 : index
    %c0_22 = arith.constant 0 : index
    %39 = vector.load %arg7[%c0_21, %c0_22] : memref<1x32xf32, #tpu.memory_space<vmem>>, vector<1x32xf32>
    %cst_23 = arith.constant dense<0.000000e+00> : vector<8xf32>
    %40 = vector.multi_reduction <add>, %37, %cst_23 [1] : vector<8x32xf32> to vector<8xf32>
    %41 = vector.shape_cast %40 : vector<8xf32> to vector<8x1xf32>
    %cst_24 = arith.constant 3.200000e+01 : f32
    %42 = vector.broadcast %cst_24 : f32 to vector<8x1xf32>
    %43 = arith.divf %41, %42 : vector<8x1xf32>
    %44 = vector.broadcast %43 : vector<8x1xf32> to vector<8x32xf32>
    %45 = arith.subf %37, %44 : vector<8x32xf32>
    %46 = arith.mulf %45, %45 : vector<8x32xf32>
    %cst_25 = arith.constant dense<0.000000e+00> : vector<8xf32>
    %47 = vector.multi_reduction <add>, %46, %cst_25 [1] : vector<8x32xf32> to vector<8xf32>
    %48 = vector.shape_cast %47 : vector<8xf32> to vector<8x1xf32>
    %cst_26 = arith.constant 3.200000e+01 : f32
    %49 = vector.broadcast %cst_26 : f32 to vector<8x1xf32>
    %50 = arith.divf %48, %49 : vector<8x1xf32>
    %cst_27 = arith.constant 9.99999974E-6 : f32
    %51 = vector.broadcast %cst_27 : f32 to vector<8x1xf32>
    %52 = arith.addf %50, %51 : vector<8x1xf32>
    %53 = math.rsqrt %52 : vector<8x1xf32>
    %54 = vector.broadcast %43 : vector<8x1xf32> to vector<8x32xf32>
    %55 = arith.subf %37, %54 : vector<8x32xf32>
    %56 = vector.broadcast %53 : vector<8x1xf32> to vector<8x32xf32>
    %57 = arith.mulf %55, %56 : vector<8x32xf32>
    %58 = vector.broadcast %38 : vector<1x32xf32> to vector<8x32xf32>
    %59 = arith.mulf %57, %58 : vector<8x32xf32>
    %60 = vector.broadcast %39 : vector<1x32xf32> to vector<8x32xf32>
    %61 = arith.addf %59, %60 : vector<8x32xf32>
    %c0_28 = arith.constant 0 : index
    %c0_29 = arith.constant 0 : index
    %62 = vector.load %arg8[%c0_28, %c0_29] : memref<32x64xf32, #tpu.memory_space<vmem>>, vector<32x64xf32>
    %cst_30 = arith.constant dense<0.000000e+00> : vector<8x64xf32>
    %63 = tpu.matmul %61, %62, %cst_30 {dimension_numbers = #tpu.dot_dimension_numbers<[1], [0], [0], [1], [0, 0, 1, 1], [], []>} : vector<8x32xf32>, vector<32x64xf32>, vector<8x64xf32> -> vector<8x64xf32>
    %c0_31 = arith.constant 0 : index
    %c0_32 = arith.constant 0 : index
    %64 = vector.load %arg9[%c0_31, %c0_32] : memref<1x64xf32, #tpu.memory_space<vmem>>, vector<1x64xf32>
    %65 = vector.broadcast %64 : vector<1x64xf32> to vector<8x64xf32>
    %66 = arith.addf %63, %65 : vector<8x64xf32>
    %cst_33 = arith.constant 0.000000e+00 : f32
    %67 = vector.broadcast %cst_33 : f32 to vector<8x64xf32>
    %68 = arith.maximumf %66, %67 : vector<8x64xf32>
    %c0_34 = arith.constant 0 : index
    %c0_35 = arith.constant 0 : index
    %69 = vector.load %arg10[%c0_34, %c0_35] : memref<64x32xf32, #tpu.memory_space<vmem>>, vector<64x32xf32>
    %cst_36 = arith.constant dense<0.000000e+00> : vector<8x32xf32>
    %70 = tpu.matmul %68, %69, %cst_36 {dimension_numbers = #tpu.dot_dimension_numbers<[1], [0], [0], [1], [0, 0, 1, 1], [], []>} : vector<8x64xf32>, vector<64x32xf32>, vector<8x32xf32> -> vector<8x32xf32>
    %c0_37 = arith.constant 0 : index
    %c0_38 = arith.constant 0 : index
    %71 = vector.load %arg11[%c0_37, %c0_38] : memref<1x32xf32, #tpu.memory_space<vmem>>, vector<1x32xf32>
    %72 = vector.broadcast %71 : vector<1x32xf32> to vector<8x32xf32>
    %73 = arith.addf %70, %72 : vector<8x32xf32>
    %74 = arith.addf %73, %61 : vector<8x32xf32>
    %c0_39 = arith.constant 0 : index
    %c0_40 = arith.constant 0 : index
    %75 = vector.load %arg12[%c0_39, %c0_40] : memref<1x32xf32, #tpu.memory_space<vmem>>, vector<1x32xf32>
    %c0_41 = arith.constant 0 : index
    %c0_42 = arith.constant 0 : index
    %76 = vector.load %arg13[%c0_41, %c0_42] : memref<1x32xf32, #tpu.memory_space<vmem>>, vector<1x32xf32>
    %cst_43 = arith.constant dense<0.000000e+00> : vector<8xf32>
    %77 = vector.multi_reduction <add>, %74, %cst_43 [1] : vector<8x32xf32> to vector<8xf32>
    %78 = vector.shape_cast %77 : vector<8xf32> to vector<8x1xf32>
    %cst_44 = arith.constant 3.200000e+01 : f32
    %79 = vector.broadcast %cst_44 : f32 to vector<8x1xf32>
    %80 = arith.divf %78, %79 : vector<8x1xf32>
    %81 = vector.broadcast %80 : vector<8x1xf32> to vector<8x32xf32>
    %82 = arith.subf %74, %81 : vector<8x32xf32>
    %83 = arith.mulf %82, %82 : vector<8x32xf32>
    %cst_45 = arith.constant dense<0.000000e+00> : vector<8xf32>
    %84 = vector.multi_reduction <add>, %83, %cst_45 [1] : vector<8x32xf32> to vector<8xf32>
    %85 = vector.shape_cast %84 : vector<8xf32> to vector<8x1xf32>
    %cst_46 = arith.constant 3.200000e+01 : f32
    %86 = vector.broadcast %cst_46 : f32 to vector<8x1xf32>
    %87 = arith.divf %85, %86 : vector<8x1xf32>
    %cst_47 = arith.constant 9.99999974E-6 : f32
    %88 = vector.broadcast %cst_47 : f32 to vector<8x1xf32>
    %89 = arith.addf %87, %88 : vector<8x1xf32>
    %90 = math.rsqrt %89 : vector<8x1xf32>
    %91 = vector.broadcast %80 : vector<8x1xf32> to vector<8x32xf32>
    %92 = arith.subf %74, %91 : vector<8x32xf32>
    %93 = vector.broadcast %90 : vector<8x1xf32> to vector<8x32xf32>
    %94 = arith.mulf %92, %93 : vector<8x32xf32>
    %95 = vector.broadcast %75 : vector<1x32xf32> to vector<8x32xf32>
    %96 = arith.mulf %94, %95 : vector<8x32xf32>
    %97 = vector.broadcast %76 : vector<1x32xf32> to vector<8x32xf32>
    %98 = arith.addf %96, %97 : vector<8x32xf32>
    %c0_48 = arith.constant 0 : index
    %c0_49 = arith.constant 0 : index
    %c0_50 = arith.constant 0 : index
    %99 = vector.load %arg14[%c0_48, %c0_49, %c0_50] : memref<1x8x32xf32, #tpu.memory_space<vmem>>, vector<1x8x32xf32>
    %100 = vector.shape_cast %99 : vector<1x8x32xf32> to vector<8x32xf32>
    %101 = vector.shape_cast %98 : vector<8x32xf32> to vector<1x8x32xf32>
    tpu.vector_store %arg14[%c0_48, %c0_49, %c0_50], %101 {strides = array<i32>} : memref<1x8x32xf32, #tpu.memory_space<vmem>>, vector<1x8x32xf32>,
    return
  }
  func.func @transform_0(%arg0: i32) -> (i32, i32, i32) {
    %c0_i32 = arith.constant 0 : i32
    %c0_i32_0 = arith.constant 0 : i32
    %c0_i32_1 = arith.constant 0 : i32
    return %arg0, %c0_i32, %c0_i32_0 : i32, i32, i32
  }
  func.func @transform_1(%arg0: i32) -> (i32, i32) {
    %c0_i32 = arith.constant 0 : i32
    %c0_i32_0 = arith.constant 0 : i32
    %c0_i32_1 = arith.constant 0 : i32
    return %c0_i32, %c0_i32_0 : i32, i32
  }
  func.func @transform_2(%arg0: i32) -> (i32, i32) {
    %c0_i32 = arith.constant 0 : i32
    %c0_i32_0 = arith.constant 0 : i32
    %c0_i32_1 = arith.constant 0 : i32
    return %c0_i32, %c0_i32_0 : i32, i32
  }
  func.func @transform_3(%arg0: i32) -> (i32, i32) {
    %c0_i32 = arith.constant 0 : i32
    %c0_i32_0 = arith.constant 0 : i32
    %c0_i32_1 = arith.constant 0 : i32
    return %c0_i32, %c0_i32_0 : i32, i32
  }
  func.func @transform_4(%arg0: i32) -> (i32, i32) {
    %c0_i32 = arith.constant 0 : i32
    %c0_i32_0 = arith.constant 0 : i32
    %c0_i32_1 = arith.constant 0 : i32
    return %c0_i32, %c0_i32_0 : i32, i32
  }
  func.func @transform_5(%arg0: i32) -> (i32, i32) {
    %c0_i32 = arith.constant 0 : i32
    %c0_i32_0 = arith.constant 0 : i32
    %c0_i32_1 = arith.constant 0 : i32
    return %c0_i32, %c0_i32_0 : i32, i32
  }
  func.func @transform_6(%arg0: i32) -> (i32, i32) {
    %c0_i32 = arith.constant 0 : i32
    %c0_i32_0 = arith.constant 0 : i32
    %c0_i32_1 = arith.constant 0 : i32
    return %c0_i32, %c0_i32_0 : i32, i32
  }
  func.func @transform_7(%arg0: i32) -> (i32, i32) {
    %c0_i32 = arith.constant 0 : i32
    %c0_i32_0 = arith.constant 0 : i32
    %c0_i32_1 = arith.constant 0 : i32
    return %c0_i32, %c0_i32_0 : i32, i32
  }
  func.func @transform_8(%arg0: i32) -> (i32, i32) {
    %c0_i32 = arith.constant 0 : i32
    %c0_i32_0 = arith.constant 0 : i32
    %c0_i32_1 = arith.constant 0 : i32
    return %c0_i32, %c0_i32_0 : i32, i32
  }
  func.func @transform_9(%arg0: i32) -> (i32, i32) {
    %c0_i32 = arith.constant 0 : i32
    %c0_i32_0 = arith.constant 0 : i32
    %c0_i32_1 = arith.constant 0 : i32
    return %c0_i32, %c0_i32_0 : i32, i32
  }
  func.func @transform_10(%arg0: i32) -> (i32, i32) {
    %c0_i32 = arith.constant 0 : i32
    %c0_i32_0 = arith.constant 0 : i32
    %c0_i32_1 = arith.constant 0 : i32
    return %c0_i32, %c0_i32_0 : i32, i32
  }
  func.func @transform_11(%arg0: i32) -> (i32, i32) {
    %c0_i32 = arith.constant 0 : i32
    %c0_i32_0 = arith.constant 0 : i32
    %c0_i32_1 = arith.constant 0 : i32
    return %c0_i32, %c0_i32_0 : i32, i32
  }
  func.func @transform_12(%arg0: i32) -> (i32, i32) {
    %c0_i32 = arith.constant 0 : i32
    %c0_i32_0 = arith.constant 0 : i32
    %c0_i32_1 = arith.constant 0 : i32
    return %c0_i32, %c0_i32_0 : i32, i32
  }
  func.func @transform_13(%arg0: i32) -> (i32, i32, i32) {
    %c0_i32 = arith.constant 0 : i32
    %c0_i32_0 = arith.constant 0 : i32
    %c0_i32_1 = arith.constant 0 : i32
    return %arg0, %c0_i32, %c0_i32_0 : i32, i32, i32
  }
  func.func @transform_14(%arg0: i32) -> (i32, i32, i32, i32) {
    %c0_i32 = arith.constant 0 : i32
    %c0_i32_0 = arith.constant 0 : i32
    %c0_i32_1 = arith.constant 0 : i32
    %c0_i32_2 = arith.constant 0 : i32
    return %c0_i32, %arg0, %c0_i32_0, %c0_i32_1 : i32, i32, i32, i32
  }
}

</mosaic_0001>

<llo_original>
// kernel: tpu_custom_call.1
$region0: #{tpu_custom_call.1}
  #allocation0 [shape = 'u32[]', space=smem, size = 0x4, offset = 0x4, fixed_abs, tag = 'smem constant byte address 0x4 - core index']
  #allocation1 [shape = 'u32[144,128]{1,0:T(1,128)}', space=vmem, size = 0x12000, scoped, tag = 'internal scratch']
  %s0 = inlined_call_operand.hbm [shape: f32[2,8,32], index: 0, kind: input, shape index: {}]
  %s1 = inlined_call_operand.vmem [shape: f32[32,96], index: 1, kind: input, shape index: {}]
  %s2 = inlined_call_operand.vmem [shape: f32[1,96], index: 2, kind: input, shape index: {}]
  %s3 = inlined_call_operand.vmem [shape: f32[32,32], index: 3, kind: input, shape index: {}]
  %s4 = inlined_call_operand.vmem [shape: f32[1,32], index: 4, kind: input, shape index: {}]
  %s5 = inlined_call_operand.hbm [shape: f32[1,32], index: 5, kind: input, shape index: {}]
  %s6 = inlined_call_operand.hbm [shape: f32[1,32], index: 6, kind: input, shape index: {}]
  %s7 = inlined_call_operand.vmem [shape: f32[32,64], index: 7, kind: input, shape index: {}]
  %s8 = inlined_call_operand.hbm [shape: f32[1,64], index: 8, kind: input, shape index: {}]
  %s9 = inlined_call_operand.vmem [shape: f32[64,32], index: 9, kind: input, shape index: {}]
  %s10 = inlined_call_operand.vmem [shape: f32[1,32], index: 10, kind: input, shape index: {}]
  %s11 = inlined_call_operand.vmem [shape: f32[1,32], index: 11, kind: input, shape index: {}]
  %s12 = inlined_call_operand.vmem [shape: f32[1,32], index: 12, kind: input, shape index: {}]
  %s13 = inlined_call_operand.hbm [shape: f32[2,8,32], index: 13, kind: output, shape index: {0}]
  %s14 = inlined_call_operand.hbm [shape: f32[4,2,8,8], index: 14, kind: output, shape index: {1}]
  %15 = xla_tuple %s13, %s14
  %s16 = sld [smem:[#allocation0]]
  $region109: #{tpu_custom_call.1} parent=0
    _
  %s18 = ssub.s32 1, %s16
  %s19 = scalar_select 0, %s18, %s16
  $region1: #{tpu_custom_call.1} parent=0
    #allocation2 [shape = 'u8[8192]{0}', space=vmem, size = 0x2000, scoped, tag = 'input window, operand 0']
    #allocation3 [shape = 's32[2]{0}', space=sflag, size = 0x8, scoped, tag = 'scoped memory for tpu_custom_call.1']
    #allocation4 [shape = 's32[2]{0}', space=sflag, size = 0x8, scoped, tag = 'scoped memory for tpu_custom_call.1']
    #allocation5 [shape = 'u8[512]{0}', space=vmem, size = 0x400, scoped, tag = 'input window, operand 5, single buffered']
    #allocation6 [shape = 's32[1]{0}', space=sflag, size = 0x4, scoped, tag = 'scoped memory for tpu_custom_call.1']
    #allocation7 [shape = 'u8[512]{0}', space=vmem, size = 0x400, scoped, tag = 'input window, operand 6, single buffered']
    #allocation8 [shape = 'u8[512]{0}', space=vmem, size = 0x400, scoped, tag = 'input window, operand 8, single buffered']
    #allocation9 [shape = 's32[1]{0}', space=sflag, size = 0x4, scoped, tag = 'scoped memory for tpu_custom_call.1']
    #allocation10 [shape = 'u8[8192]{0}', space=vmem, size = 0x2000, scoped, tag = 'output window, operand 0']
    #allocation11 [shape = 'u8[32768]{0}', space=vmem, size = 0x8000, scoped, tag = 'output window, operand 1']
    #allocation12 [shape = 's32[2]{0}', space=sflag, size = 0x8, scoped, tag = 'scoped memory for tpu_custom_call.1']
    %20 = vsyncpa [#allocation3], 0
    %s21 = scalar_lea.sflag [#allocation3], 1
    %22 = vsyncpa %s21, 0
    %23 = vsyncpa [#allocation6], 0
    %24 = vsyncpa [#allocation9], 0
    %25 = vsyncpa [#allocation4], 0
    %s26 = scalar_lea.sflag [#allocation4], 1
    %27 = vsyncpa %s26, 0
    %28 = vsyncpa [#allocation12], 0
    %s29 = scalar_lea.sflag [#allocation12], 1
    %30 = vsyncpa %s29, 0
    loop: start=0, step=1, limit=4
    $region2: #{tpu_custom_call.1} parent=1 // loop_pre_header
      _
    $region3: #{tpu_custom_call.1} parent=1 // loop_header
      %s32 = sphi 0, %s36
      %p33 = scmp.ge.s32.totalorder %s32, 4
      %s42 = sphi 0, %s44
      %s45 = sphi 0, %s42
      %s46 = sphi 0, %s45
      %s62 = sphi 0, %s46
      %s66 = sphi 0, %s66
      %s68 = sphi 0, %s66
      %s69 = sphi 0, %s68
      %s83 = sphi 0, %s69
      %s87 = sphi 0, %s87
      %s89 = sphi 0, %s87
      %s90 = sphi 0, %s89
      %s104 = sphi 0, %s90
      %s108 = sphi 0, %s108
      %s110 = sphi 0, %s108
      %s111 = sphi 0, %s110
      %s125 = sphi 0, %s111
      %s129 = sphi 0, %s129
      %s131 = sphi 0, %s129
      %s132 = sphi 0, %s131
      %s146 = sphi 0, %s132
      %s150 = sphi 0, %s150
      %s152 = sphi 0, %s150
      %s153 = sphi 0, %s152
      %s167 = sphi 0, %s153
      %s171 = sphi 0, %s171
      %s173 = sphi 0, %s171
      %s174 = sphi 0, %s173
      %s188 = sphi 0, %s174
      %s192 = sphi 0, %s192
      %s194 = sphi 0, %s192
      %s195 = sphi 0, %s194
      %s209 = sphi 0, %s195
      %s213 = sphi 0, %s213
      %s215 = sphi 0, %s213
      %s216 = sphi 0, %s215
      %s230 = sphi 0, %s216
      %s234 = sphi 0, %s234
      %s236 = sphi 0, %s234
      %s237 = sphi 0, %s236
      %s251 = sphi 0, %s237
      %s255 = sphi 0, %s255
      %s257 = sphi 0, %s255
      %s258 = sphi 0, %s257
      %s272 = sphi 0, %s258
      %s276 = sphi 0, %s276
      %s278 = sphi 0, %s276
      %s279 = sphi 0, %s278
      %s293 = sphi 0, %s279
      %s297 = sphi 0, %s297
      %s299 = sphi 0, %s297
      %s300 = sphi 0, %s299
      %s314 = sphi 0, %s300
      %s320 = sphi 0, %s322
      %s323 = sphi 0, %s320
      %s324 = sphi 0, %s323
      %s340 = sphi 0, %s324
      %s346 = sphi 0, %s348
      %s349 = sphi 0, %s346
      %s350 = sphi 0, %s349
      %s366 = sphi 0, %s350
    $region4: #{tpu_custom_call.1} parent=1 // loop_header_branch
      %35 = sbr.rel (%p33) target = $region8
    $region5: #{tpu_custom_call.1} parent=1 // loop_body
      %s37 = ssub.s32 %s32, 1
      %s38 = ssub.s32 %s32, 2
      %s39 = sadd.s32 %s32, 1
      %s40 = ssub.s32 %s32, %s39
      %p41 = scmp.eq.s32.totalorder %s40, 0
      %s43 = sadd.s32 %s42, 1
      %s44 = scalar_select %p41, %s42, %s43
      %p47 = pneg %p41
      %p48 = scmp.eq.s32.totalorder %s32, 1
      %p49 = por %p47, %p48
      %p50 = scmp.ne.s32.totalorder %s42, %s45
      %p51 = scmp.eq.s32.totalorder %s32, 0
      %p52 = por %p50, %p51
      %p53 = scmp.ne.s32.totalorder %s42, %s45
      %p54 = scmp.eq.s32.totalorder %s37, 1
      %p55 = por %p53, %p54
      %p56 = scmp.ne.s32.totalorder %s45, %s46
      %p57 = scmp.eq.s32.totalorder %s37, 0
      %p58 = por %p56, %p57
      %p59 = scmp.ne.s32.totalorder %s45, %s46
      %p60 = scmp.eq.s32.totalorder %s38, 1
      %p61 = por %p59, %p60
      %p63 = scmp.ne.s32.totalorder %s46, %s62
      %p64 = scmp.eq.s32.totalorder %s38, 0
      %p65 = por %p63, %p64
      %s67 = sadd.s32 %s66, 1
      %p70 = scmp.eq.s32.totalorder %s32, 1
      %p71 = scmp.ne.s32.totalorder %s66, %s68
      %p72 = scmp.eq.s32.totalorder %s32, 0
      %p73 = por %p71, %p72
      %p74 = scmp.ne.s32.totalorder %s66, %s68
      %p75 = scmp.eq.s32.totalorder %s37, 1
      %p76 = por %p74, %p75
      %p77 = scmp.ne.s32.totalorder %s68, %s69
      %p78 = scmp.eq.s32.totalorder %s37, 0
      %p79 = por %p77, %p78
      %p80 = scmp.ne.s32.totalorder %s68, %s69
      %p81 = scmp.eq.s32.totalorder %s38, 1
      %p82 = por %p80, %p81
      %p84 = scmp.ne.s32.totalorder %s69, %s83
      %p85 = scmp.eq.s32.totalorder %s38, 0
      %p86 = por %p84, %p85
      %s88 = sadd.s32 %s87, 1
      %p91 = scmp.eq.s32.totalorder %s32, 1
      %p92 = scmp.ne.s32.totalorder %s87, %s89
      %p93 = scmp.eq.s32.totalorder %s32, 0
      %p94 = por %p92, %p93
      %p95 = scmp.ne.s32.totalorder %s87, %s89
      %p96 = scmp.eq.s32.totalorder %s37, 1
      %p97 = por %p95, %p96
      %p98 = scmp.ne.s32.totalorder %s89, %s90
      %p99 = scmp.eq.s32.totalorder %s37, 0
      %p100 = por %p98, %p99
      %p101 = scmp.ne.s32.totalorder %s89, %s90
      %p102 = scmp.eq.s32.totalorder %s38, 1
      %p103 = por %p101, %p102
      %p105 = scmp.ne.s32.totalorder %s90, %s104
      %p106 = scmp.eq.s32.totalorder %s38, 0
      %p107 = por %p105, %p106
      %s109 = sadd.s32 %s108, 1
      %p112 = scmp.eq.s32.totalorder %s32, 1
      %p113 = scmp.ne.s32.totalorder %s108, %s110
      %p114 = scmp.eq.s32.totalorder %s32, 0
      %p115 = por %p113, %p114
      %p116 = scmp.ne.s32.totalorder %s108, %s110
      %p117 = scmp.eq.s32.totalorder %s37, 1
      %p118 = por %p116, %p117
      %p119 = scmp.ne.s32.totalorder %s110, %s111
      %p120 = scmp.eq.s32.totalorder %s37, 0
      %p121 = por %p119, %p120
      %p122 = scmp.ne.s32.totalorder %s110, %s111
      %p123 = scmp.eq.s32.totalorder %s38, 1
      %p124 = por %p122, %p123
      %p126 = scmp.ne.s32.totalorder %s111, %s125
      %p127 = scmp.eq.s32.totalorder %s38, 0
      %p128 = por %p126, %p127
      %s130 = sadd.s32 %s129, 1
      %p133 = scmp.eq.s32.totalorder %s32, 1
      %p134 = scmp.ne.s32.totalorder %s129, %s131
      %p135 = scmp.eq.s32.totalorder %s32, 0
      %p136 = por %p134, %p135
      %p137 = scmp.ne.s32.totalorder %s129, %s131
      %p138 = scmp.eq.s32.totalorder %s37, 1
      %p139 = por %p137, %p138
      %p140 = scmp.ne.s32.totalorder %s131, %s132
      %p141 = scmp.eq.s32.totalorder %s37, 0
      %p142 = por %p140, %p141
      %p143 = scmp.ne.s32.totalorder %s131, %s132
      %p144 = scmp.eq.s32.totalorder %s38, 1
      %p145 = por %p143, %p144
      %p147 = scmp.ne.s32.totalorder %s132, %s146
      %p148 = scmp.eq.s32.totalorder %s38, 0
      %p149 = por %p147, %p148
      %s151 = sadd.s32 %s150, 1
      %p154 = scmp.eq.s32.totalorder %s32, 1
      %p155 = scmp.ne.s32.totalorder %s150, %s152
      %p156 = scmp.eq.s32.totalorder %s32, 0
      %p157 = por %p155, %p156
      %p158 = scmp.ne.s32.totalorder %s150, %s152
      %p159 = scmp.eq.s32.totalorder %s37, 1
      %p160 = por %p158, %p159
      %p161 = scmp.ne.s32.totalorder %s152, %s153
      %p162 = scmp.eq.s32.totalorder %s37, 0
      %p163 = por %p161, %p162
      %p164 = scmp.ne.s32.totalorder %s152, %s153
      %p165 = scmp.eq.s32.totalorder %s38, 1
      %p166 = por %p164, %p165
      %p168 = scmp.ne.s32.totalorder %s153, %s167
      %p169 = scmp.eq.s32.totalorder %s38, 0
      %p170 = por %p168, %p169
      %s172 = sadd.s32 %s171, 1
      %p175 = scmp.eq.s32.totalorder %s32, 1
      %p176 = scmp.ne.s32.totalorder %s171, %s173
      %p177 = scmp.eq.s32.totalorder %s32, 0
      %p178 = por %p176, %p177
      %p179 = scmp.ne.s32.totalorder %s171, %s173
      %p180 = scmp.eq.s32.totalorder %s37, 1
      %p181 = por %p179, %p180
      %p182 = scmp.ne.s32.totalorder %s173, %s174
      %p183 = scmp.eq.s32.totalorder %s37, 0
      %p184 = por %p182, %p183
      %p185 = scmp.ne.s32.totalorder %s173, %s174
      %p186 = scmp.eq.s32.totalorder %s38, 1
      %p187 = por %p185, %p186
      %p189 = scmp.ne.s32.totalorder %s174, %s188
      %p190 = scmp.eq.s32.totalorder %s38, 0
      %p191 = por %p189, %p190
      %s193 = sadd.s32 %s192, 1
      %p196 = scmp.eq.s32.totalorder %s32, 1
      %p197 = scmp.ne.s32.totalorder %s192, %s194
      %p198 = scmp.eq.s32.totalorder %s32, 0
      %p199 = por %p197, %p198
      %p200 = scmp.ne.s32.totalorder %s192, %s194
      %p201 = scmp.eq.s32.totalorder %s37, 1
      %p202 = por %p200, %p201
      %p203 = scmp.ne.s32.totalorder %s194, %s195
      %p204 = scmp.eq.s32.totalorder %s37, 0
      %p205 = por %p203, %p204
      %p206 = scmp.ne.s32.totalorder %s194, %s195
      %p207 = scmp.eq.s32.totalorder %s38, 1
      %p208 = por %p206, %p207
      %p210 = scmp.ne.s32.totalorder %s195, %s209
      %p211 = scmp.eq.s32.totalorder %s38, 0
      %p212 = por %p210, %p211
      %s214 = sadd.s32 %s213, 1
      %p217 = scmp.eq.s32.totalorder %s32, 1
      %p218 = scmp.ne.s32.totalorder %s213, %s215
      %p219 = scmp.eq.s32.totalorder %s32, 0
      %p220 = por %p218, %p219
      %p221 = scmp.ne.s32.totalorder %s213, %s215
      %p222 = scmp.eq.s32.totalorder %s37, 1
      %p223 = por %p221, %p222
      %p224 = scmp.ne.s32.totalorder %s215, %s216
      %p225 = scmp.eq.s32.totalorder %s37, 0
      %p226 = por %p224, %p225
      %p227 = scmp.ne.s32.totalorder %s215, %s216
      %p228 = scmp.eq.s32.totalorder %s38, 1
      %p229 = por %p227, %p228
      %p231 = scmp.ne.s32.totalorder %s216, %s230
      %p232 = scmp.eq.s32.totalorder %s38, 0
      %p233 = por %p231, %p232
      %s235 = sadd.s32 %s234, 1
      %p238 = scmp.eq.s32.totalorder %s32, 1
      %p239 = scmp.ne.s32.totalorder %s234, %s236
      %p240 = scmp.eq.s32.totalorder %s32, 0
      %p241 = por %p239, %p240
      %p242 = scmp.ne.s32.totalorder %s234, %s236
      %p243 = scmp.eq.s32.totalorder %s37, 1
      %p244 = por %p242, %p243
      %p245 = scmp.ne.s32.totalorder %s236, %s237
      %p246 = scmp.eq.s32.totalorder %s37, 0
      %p247 = por %p245, %p246
      %p248 = scmp.ne.s32.totalorder %s236, %s237
      %p249 = scmp.eq.s32.totalorder %s38, 1
      %p250 = por %p248, %p249
      %p252 = scmp.ne.s32.totalorder %s237, %s251
      %p253 = scmp.eq.s32.totalorder %s38, 0
      %p254 = por %p252, %p253
      %s256 = sadd.s32 %s255, 1
      %p259 = scmp.eq.s32.totalorder %s32, 1
      %p260 = scmp.ne.s32.totalorder %s255, %s257
      %p261 = scmp.eq.s32.totalorder %s32, 0
      %p262 = por %p260, %p261
      %p263 = scmp.ne.s32.totalorder %s255, %s257
      %p264 = scmp.eq.s32.totalorder %s37, 1
      %p265 = por %p263, %p264
      %p266 = scmp.ne.s32.totalorder %s257, %s258
      %p267 = scmp.eq.s32.totalorder %s37, 0
      %p268 = por %p266, %p267
      %p269 = scmp.ne.s32.totalorder %s257, %s258
      %p270 = scmp.eq.s32.totalorder %s38, 1
      %p271 = por %p269, %p270
      %p273 = scmp.ne.s32.totalorder %s258, %s272
      %p274 = scmp.eq.s32.totalorder %s38, 0
      %p275 = por %p273, %p274
      %s277 = sadd.s32 %s276, 1
      %p280 = scmp.eq.s32.totalorder %s32, 1
      %p281 = scmp.ne.s32.totalorder %s276, %s278
      %p282 = scmp.eq.s32.totalorder %s32, 0
      %p283 = por %p281, %p282
      %p284 = scmp.ne.s32.totalorder %s276, %s278
      %p285 = scmp.eq.s32.totalorder %s37, 1
      %p286 = por %p284, %p285
      %p287 = scmp.ne.s32.totalorder %s278, %s279
      %p288 = scmp.eq.s32.totalorder %s37, 0
      %p289 = por %p287, %p288
      %p290 = scmp.ne.s32.totalorder %s278, %s279
      %p291 = scmp.eq.s32.totalorder %s38, 1
      %p292 = por %p290, %p291
      %p294 = scmp.ne.s32.totalorder %s279, %s293
      %p295 = scmp.eq.s32.totalorder %s38, 0
      %p296 = por %p294, %p295
      %s298 = sadd.s32 %s297, 1
      %p301 = scmp.eq.s32.totalorder %s32, 1
      %p302 = scmp.ne.s32.totalorder %s297, %s299
      %p303 = scmp.eq.s32.totalorder %s32, 0
      %p304 = por %p302, %p303
      %p305 = scmp.ne.s32.totalorder %s297, %s299
      %p306 = scmp.eq.s32.totalorder %s37, 1
      %p307 = por %p305, %p306
      %p308 = scmp.ne.s32.totalorder %s299, %s300
      %p309 = scmp.eq.s32.totalorder %s37, 0
      %p310 = por %p308, %p309
      %p311 = scmp.ne.s32.totalorder %s299, %s300
      %p312 = scmp.eq.s32.totalorder %s38, 1
      %p313 = por %p311, %p312
      %p315 = scmp.ne.s32.totalorder %s300, %s314
      %p316 = scmp.eq.s32.totalorder %s38, 0
      %p317 = por %p315, %p316
      %s318 = ssub.s32 %s32, %s39
      %p319 = scmp.eq.s32.totalorder %s318, 0
      %s321 = sadd.s32 %s320, 1
      %s322 = scalar_select %p319, %s320, %s321
      %p325 = pneg %p319
      %p326 = scmp.eq.s32.totalorder %s32, 1
      %p327 = por %p325, %p326
      %p328 = scmp.ne.s32.totalorder %s320, %s323
      %p329 = scmp.eq.s32.totalorder %s32, 0
      %p330 = por %p328, %p329
      %p331 = scmp.ne.s32.totalorder %s320, %s323
      %p332 = scmp.eq.s32.totalorder %s37, 1
      %p333 = por %p331, %p332
      %p334 = scmp.ne.s32.totalorder %s323, %s324
      %p335 = scmp.eq.s32.totalorder %s37, 0
      %p336 = por %p334, %p335
      %p337 = scmp.ne.s32.totalorder %s323, %s324
      %p338 = scmp.eq.s32.totalorder %s38, 1
      %p339 = por %p337, %p338
      %p341 = scmp.ne.s32.totalorder %s324, %s340
      %p342 = scmp.eq.s32.totalorder %s38, 0
      %p343 = por %p341, %p342
      %s344 = ssub.s32 %s32, %s39
      %p345 = scmp.eq.s32.totalorder %s344, 0
      %s347 = sadd.s32 %s346, 1
      %s348 = scalar_select %p345, %s346, %s347
      %p351 = pneg %p345
      %p352 = scmp.eq.s32.totalorder %s32, 1
      %p353 = por %p351, %p352
      %p354 = scmp.ne.s32.totalorder %s346, %s349
      %p355 = scmp.eq.s32.totalorder %s32, 0
      %p356 = por %p354, %p355
      %p357 = scmp.ne.s32.totalorder %s346, %s349
      %p358 = scmp.eq.s32.totalorder %s37, 1
      %p359 = por %p357, %p358
      %p360 = scmp.ne.s32.totalorder %s349, %s350
      %p361 = scmp.eq.s32.totalorder %s37, 0
      %p362 = por %p360, %p361
      %p363 = scmp.ne.s32.totalorder %s349, %s350
      %p364 = scmp.eq.s32.totalorder %s38, 1
      %p365 = por %p363, %p364
      %p367 = scmp.ne.s32.totalorder %s350, %s366
      %p368 = scmp.eq.s32.totalorder %s38, 0
      %p369 = por %p367, %p368
      %p370 = scmp.le.s32.totalorder 1, %s32
      %p371 = scmp.lt.s32.totalorder %s32, 3
      %p372 = pnand %p370, %p371
      %p373 = pneg %p372
      // Predicated region
      $region9: #{tpu_custom_call.1} parent=5 // pred_check
        _
      $region10: #{tpu_custom_call.1} parent=5 // pred_check_branch
        %375 = sbr.rel (%p372) target = $region12
      $region11: #{tpu_custom_call.1} parent=5 // pred_region
        %s376 = ssub.s32 %s32, 1
        // Predicated region
        $region13: #{tpu_custom_call.1} parent=11 // pred_check
          %p377 = pneg %p79
        $region14: #{tpu_custom_call.1} parent=11 // pred_check_branch
          %379 = sbr.rel (%p377) target = $region16
        $region15: #{tpu_custom_call.1} parent=11 // pred_region
          _
        $region16: #{tpu_custom_call.1} parent=11 // pred_fallthru
          _
        // Predicated region
        $region17: #{tpu_custom_call.1} parent=11 // pred_check
          %p380 = pneg %p100
        $region18: #{tpu_custom_call.1} parent=11 // pred_check_branch
          %382 = sbr.rel (%p380) target = $region20
        $region19: #{tpu_custom_call.1} parent=11 // pred_region
          _
        $region20: #{tpu_custom_call.1} parent=11 // pred_fallthru
          _
        // Predicated region
        $region21: #{tpu_custom_call.1} parent=11 // pred_check
          %p383 = pneg %p121
        $region22: #{tpu_custom_call.1} parent=11 // pred_check_branch
          %385 = sbr.rel (%p383) target = $region24
        $region23: #{tpu_custom_call.1} parent=11 // pred_region
          _
        $region24: #{tpu_custom_call.1} parent=11 // pred_fallthru
          _
        // Predicated region
        $region25: #{tpu_custom_call.1} parent=11 // pred_check
          %p386 = pneg %p142
        $region26: #{tpu_custom_call.1} parent=11 // pred_check_branch
          %388 = sbr.rel (%p386) target = $region28
        $region27: #{tpu_custom_call.1} parent=11 // pred_region
          _
        $region28: #{tpu_custom_call.1} parent=11 // pred_fallthru
          _
        // Predicated region
        $region29: #{tpu_custom_call.1} parent=11 // pred_check
          %p389 = pneg %p163
        $region30: #{tpu_custom_call.1} parent=11 // pred_check_branch
          %391 = sbr.rel (%p389) target = $region32
        $region31: #{tpu_custom_call.1} parent=11 // pred_region
          %s393 = ssub.s32 16, 16
          %394 = vsyncadd [#allocation6], %s393
          %s396 = sshll.u32 [#allocation5], 4
          %s397 = int_to_ptr.vmem [resolvable:$true] %s396
          %399 = dma.hbm_to_vmem [thread:$0]  %s5, 16, %s397, [#allocation6]
        $region32: #{tpu_custom_call.1} parent=11 // pred_fallthru
          _
        // Predicated region
        $region33: #{tpu_custom_call.1} parent=11 // pred_check
          %p400 = pneg %p184
        $region34: #{tpu_custom_call.1} parent=11 // pred_check_branch
          %402 = sbr.rel (%p400) target = $region36
        $region35: #{tpu_custom_call.1} parent=11 // pred_region
          %s404 = ssub.s32 16, 16
          %405 = vsyncadd [#allocation6], %s404
          %s407 = sshll.u32 [#allocation7], 4
          %s408 = int_to_ptr.vmem [resolvable:$true] %s407
          %410 = dma.hbm_to_vmem [thread:$0]  %s6, 16, %s408, [#allocation6]
        $region36: #{tpu_custom_call.1} parent=11 // pred_fallthru
          _
        // Predicated region
        $region37: #{tpu_custom_call.1} parent=11 // pred_check
          %p411 = pneg %p205
        $region38: #{tpu_custom_call.1} parent=11 // pred_check_branch
          %413 = sbr.rel (%p411) target = $region40
        $region39: #{tpu_custom_call.1} parent=11 // pred_region
          _
        $region40: #{tpu_custom_call.1} parent=11 // pred_fallthru
          _
        // Predicated region
        $region41: #{tpu_custom_call.1} parent=11 // pred_check
          %p414 = pneg %p226
        $region42: #{tpu_custom_call.1} parent=11 // pred_check_branch
          %416 = sbr.rel (%p414) target = $region44
        $region43: #{tpu_custom_call.1} parent=11 // pred_region
          %s418 = ssub.s32 16, 16
          %419 = vsyncadd [#allocation9], %s418
          %s421 = sshll.u32 [#allocation8], 4
          %s422 = int_to_ptr.vmem [resolvable:$true] %s421
          %424 = dma.hbm_to_vmem [thread:$0]  %s8, 16, %s422, [#allocation9]
        $region44: #{tpu_custom_call.1} parent=11 // pred_fallthru
          _
        // Predicated region
        $region45: #{tpu_custom_call.1} parent=11 // pred_check
          %p425 = pneg %p247
        $region46: #{tpu_custom_call.1} parent=11 // pred_check_branch
          %427 = sbr.rel (%p425) target = $region48
        $region47: #{tpu_custom_call.1} parent=11 // pred_region
          _
        $region48: #{tpu_custom_call.1} parent=11 // pred_fallthru
          _
        // Predicated region
        $region49: #{tpu_custom_call.1} parent=11 // pred_check
          %p428 = pneg %p268
        $region50: #{tpu_custom_call.1} parent=11 // pred_check_branch
          %430 = sbr.rel (%p428) target = $region52
        $region51: #{tpu_custom_call.1} parent=11 // pred_region
          _
        $region52: #{tpu_custom_call.1} parent=11 // pred_fallthru
          _
        // Predicated region
        $region53: #{tpu_custom_call.1} parent=11 // pred_check
          %p431 = pneg %p289
        $region54: #{tpu_custom_call.1} parent=11 // pred_check_branch
          %433 = sbr.rel (%p431) target = $region56
        $region55: #{tpu_custom_call.1} parent=11 // pred_region
          _
        $region56: #{tpu_custom_call.1} parent=11 // pred_fallthru
          _
        // Predicated region
        $region57: #{tpu_custom_call.1} parent=11 // pred_check
          %p434 = pneg %p310
        $region58: #{tpu_custom_call.1} parent=11 // pred_check_branch
          %436 = sbr.rel (%p434) target = $region60
        $region59: #{tpu_custom_call.1} parent=11 // pred_region
          _
        $region60: #{tpu_custom_call.1} parent=11 // pred_fallthru
          _
      $region12: #{tpu_custom_call.1} parent=5 // pred_fallthru
        _
      %p437 = scmp.lt.s32.totalorder %s32, 2
      // Predicated region
      $region61: #{tpu_custom_call.1} parent=5 // pred_check
        %p438 = pneg %p437
      $region62: #{tpu_custom_call.1} parent=5 // pred_check_branch
        %440 = sbr.rel (%p438) target = $region64
      $region63: #{tpu_custom_call.1} parent=5 // pred_region
        // Predicated region
        $region65: #{tpu_custom_call.1} parent=63 // pred_check
          %p441 = pneg %p52
        $region66: #{tpu_custom_call.1} parent=63 // pred_check_branch
          %443 = sbr.rel (%p441) target = $region68
        $region67: #{tpu_custom_call.1} parent=63 // pred_region
          %s444 = sand.u32 %s42, 1
          %s445 = scalar_lea.sflag [#allocation3], %s444
          %s446 = sand.u32 %s42, 1
          %s447 = smul.addr %s446, 8
          %s448 = scalar_lea.vmem [#allocation2], %s447
          %s450 = ssub.s32 128, 128
          %451 = vsyncadd %s445, %s450
          %s452 = smul.addr %s32, 128
          %s453 = scalar_lea.hbm %s0, %s452
          %s455 = sshll.u32 %s448, 4
          %s456 = int_to_ptr.vmem [resolvable:$true] %s455
          %458 = dma.hbm_to_vmem [thread:$0]  %s453, 128, %s456, %s445
        $region68: #{tpu_custom_call.1} parent=63 // pred_fallthru
          _
      $region64: #{tpu_custom_call.1} parent=5 // pred_fallthru
        _
      %p459 = scmp.le.s32.totalorder 1, %s32
      %p460 = scmp.lt.s32.totalorder %s32, 3
      %p461 = pnand %p459, %p460
      %p462 = pneg %p461
      // Predicated region
      $region69: #{tpu_custom_call.1} parent=5 // pred_check
        _
      $region70: #{tpu_custom_call.1} parent=5 // pred_check_branch
        %464 = sbr.rel (%p461) target = $region72
      $region71: #{tpu_custom_call.1} parent=5 // pred_region
        %s465 = ssub.s32 %s32, 1
        %s466 = sand.u32 %s45, 1
        %s467 = scalar_lea.sflag [#allocation3], %s466
        %s468 = sand.u32 %s45, 1
        %s469 = smul.addr %s468, 8
        %s470 = scalar_lea.vmem [#allocation2], %s469
        // Predicated region
        $region73: #{tpu_custom_call.1} parent=71 // pred_check
          %p471 = pneg %p58
        $region74: #{tpu_custom_call.1} parent=71 // pred_check_branch
          %473 = sbr.rel (%p471) target = $region76
        $region75: #{tpu_custom_call.1} parent=71 // pred_region
          %474 = dma.done %s467, 128
        $region76: #{tpu_custom_call.1} parent=71 // pred_fallthru
          _
        // Predicated region
        $region77: #{tpu_custom_call.1} parent=71 // pred_check
          %p475 = pneg %p163
        $region78: #{tpu_custom_call.1} parent=71 // pred_check_branch
          %477 = sbr.rel (%p475) target = $region80
        $region79: #{tpu_custom_call.1} parent=71 // pred_region
          %478 = dma.done [#allocation6], 16
        $region80: #{tpu_custom_call.1} parent=71 // pred_fallthru
          _
        // Predicated region
        $region81: #{tpu_custom_call.1} parent=71 // pred_check
          %p479 = pneg %p184
        $region82: #{tpu_custom_call.1} parent=71 // pred_check_branch
          %481 = sbr.rel (%p479) target = $region84
        $region83: #{tpu_custom_call.1} parent=71 // pred_region
          %482 = dma.done [#allocation6], 16
        $region84: #{tpu_custom_call.1} parent=71 // pred_fallthru
          _
        // Predicated region
        $region85: #{tpu_custom_call.1} parent=71 // pred_check
          %p483 = pneg %p226
        $region86: #{tpu_custom_call.1} parent=71 // pred_check_branch
          %485 = sbr.rel (%p483) target = $region88
        $region87: #{tpu_custom_call.1} parent=71 // pred_region
          %486 = dma.done [#allocation9], 16
        $region88: #{tpu_custom_call.1} parent=71 // pred_fallthru
          _
        %s487 = sand.u32 %s45, 1
        %s488 = scalar_lea.sflag [#allocation3], %s487
        %s489 = sand.u32 %s45, 1
        %s490 = smul.addr %s489, 8
        %s491 = scalar_lea.vmem [#allocation2], %s490
        %p492 = pneg %p58
        %p493 = pneg %p55
        %p494 = pneg %p79
        %p495 = pneg %p76
        %p496 = pneg %p100
        %p497 = pneg %p97
        %p498 = pneg %p121
        %p499 = pneg %p118
        %p500 = pneg %p142
        %p501 = pneg %p139
        %p502 = pneg %p163
        %p503 = pneg %p160
        %p504 = pneg %p184
        %p505 = pneg %p181
        %p506 = pneg %p205
        %p507 = pneg %p202
        %p508 = pneg %p226
        %p509 = pneg %p223
        %p510 = pneg %p247
        %p511 = pneg %p244
        %p512 = pneg %p268
        %p513 = pneg %p265
        %p514 = pneg %p289
        %p515 = pneg %p286
        %p516 = pneg %p310
        %p517 = pneg %p307
        %p518 = pneg %p336
        %p519 = pneg %p333
        %s520 = sand.u32 %s323, 1
        %s521 = scalar_lea.sflag [#allocation4], %s520
        %s522 = sand.u32 %s323, 1
        %s523 = smul.addr %s522, 8
        %s524 = scalar_lea.vmem [#allocation10], %s523
        %p525 = pneg %p362
        %p526 = pneg %p359
        %s527 = sand.u32 %s349, 1
        %s528 = scalar_lea.sflag [#allocation12], %s527
        %s529 = sand.u32 %s349, 1
        %s530 = smul.addr %s529, 32
        %s531 = scalar_lea.vmem [#allocation11], %s530
        %v532 = vld [vmem:[%s470] sm:$0xff]
        %v533 = vld [vmem:[%s1] sm:$0xff]
        %v534 = vld [vmem:[%s1 + $0x8] sm:$0xff]
        %v535 = vld [vmem:[%s1 + $0x10] sm:$0xff]
        %v536 = vld [vmem:[%s1 + $0x18] sm:$0xff]
        %v537 = vld [vmem:[%s2] sm:$0x1]
        %v539 = vlaneseq
        %v540 = vshrl.u32 %v539, 7
        %v541 = vsub.s32 0, %v540
        %v542 = vrot.slane %v537, %v541
        %vm544 = vcmask 261120
        %v546 = vsel %vm544, %v532, 0
        %548 = vmatprep.subr.mxu0 0.0
        %549 = vmatpush1.msra.mxu0 %v533
        %550 = vmatprep.subr.mxu0 0.0
        %551 = vmatpush1.msra.mxu0 %v534
        %552 = vmatprep.subr.mxu0 0.0
        %553 = vmatpush1.msra.mxu0 %v535
        %554 = vmatprep.subr.mxu0 0.0
        %555 = vmatpush1.msra.mxu0 %v536
        %556 = vmatprep.subr.mxu0 0.0
        %557 = vmatpush1.msra.mxu0 0.0
        %558 = vmatprep.subr.mxu0 0.0
        %559 = vmatpush1.msra.mxu0 0.0
        %560 = vmatprep.subr.mxu0 0.0
        %561 = vmatpush1.msra.mxu0 0.0
        %562 = vmatprep.subr.mxu0 0.0
        %563 = vmatpush1.msra.mxu0 0.0
        %564 = vmatprep.subr.mxu0 0.0
        %565 = vmatpush1.msra.mxu0 0.0
        %566 = vmatprep.subr.mxu0 0.0
        %567 = vmatpush1.msra.mxu0 0.0
        %568 = vmatprep.subr.mxu0 0.0
        %569 = vmatpush1.msra.mxu0 0.0
        %570 = vmatprep.subr.mxu0 0.0
        %571 = vmatpush1.msra.mxu0 0.0
        %572 = vmatprep.subr.mxu0 0.0
        %573 = vmatpush1.msra.mxu0 0.0
        %574 = vmatprep.subr.mxu0 0.0
        %575 = vmatpush1.msra.mxu0 0.0
        %576 = vmatprep.subr.mxu0 0.0
        %577 = vmatpush1.msra.mxu0 0.0
        %578 = vmatprep.subr.mxu0 0.0
        %579 = vmatpush1.msra.mxu0 0.0
        %580 = vmatprep.subr.mxu0 0.0
        %581 = vmatpush1.msra.mxu0 0.0
        %582 = vmatprep.subr.mxu0 0.0
        %583 = vmatpush1.msra.mxu0 0.0
        %584 = vmatprep.subr.mxu0 0.0
        %585 = vmatpush1.msra.mxu0 0.0
        %586 = vmatprep.subr.mxu0 0.0
        %587 = vmatpush1.msra.mxu0 0.0
        %588 = vmatprep.subr.mxu0 0.0
        %589 = vmatpush1.msra.mxu0 0.0
        %590 = vmatprep.subr.mxu0 0.0
        %591 = vmatpush1.msra.mxu0 0.0
        %592 = vmatprep.subr.mxu0 0.0
        %593 = vmatpush1.msra.mxu0 0.0
        %594 = vmatprep.subr.mxu0 0.0
        %595 = vmatpush1.msra.mxu0 0.0
        %596 = vmatprep.subr.mxu0 0.0
        %597 = vmatpush1.msra.mxu0 0.0
        %598 = vmatprep.subr.mxu0 0.0
        %599 = vmatpush1.msra.mxu0 0.0
        %600 = vmatprep.subr.mxu0 0.0
        %601 = vmatpush1.msra.mxu0 0.0
        %602 = vmatprep.subr.mxu0 0.0
        %603 = vmatpush1.msra.mxu0 0.0
        %604 = vmatprep.subr.mxu0 0.0
        %605 = vmatpush1.msra.mxu0 0.0
        %606 = vmatprep.subr.mxu0 0.0
        %607 = vmatpush1.msra.mxu0 0.0
        %608 = vmatprep.subr.mxu0 0.0
        %609 = vmatpush1.msra.mxu0 0.0
        %610 = vmatprep.subr.mxu0 0.0
        %611 = vmatpush1.msra.mxu0 0.0
        %612 = vmatprep.mubr.f32.mxu0 0.0
        %613 = vmatmul.mubr.f32.gmra.mrb[0].mxu0 %v546
        %v614 = vpop.f32.mrb[0].mxu0
        %v615 = vadd.f32 %v542, %v614
        %v616 = vpop.f32.mrb[0].mxu0
        %617 = vdwg.mxu0
        %619 = vrot.lane.b32.xlu0 %v615, 120
        %v620 = vpop.permute.xlu0 %619
        %622 = vrot.lane.b32.xlu0 %v615, 112
        %v623 = vpop.permute.xlu0 %622
        %625 = vrot.lane.b32.xlu0 %v615, 104
        %v626 = vpop.permute.xlu0 %625
        %v628 = vcombine.low %v615, %v623
        %v629 = vcombine.high %v615, %v623
        %v631 = vunpack.c.l.s4 1983009808
        %v632 = vunpack.c.0.s8 %v631
        %v633 = vlaneseq
        %v634 = vshrl.u32 %v633, 7
        %v635 = vsub.s32 %v632, %v634
        %v636 = vrot.slane %v628, %v635
        %v638 = vunpack.c.l.s4 1983009808
        %v639 = vunpack.c.0.s8 %v638
        %v640 = vlaneseq
        %v641 = vshrl.u32 %v640, 7
        %v642 = vsub.s32 %v639, %v641
        %v643 = vrot.slane %v629, %v642
        %v644 = vcombine.low %v620, %v626
        %v645 = vcombine.high %v620, %v626
        %v647 = vunpack.c.l.s4 1983009808
        %v648 = vunpack.c.0.s8 %v647
        %v649 = vlaneseq
        %v650 = vshrl.u32 %v649, 7
        %v651 = vsub.s32 %v648, %v650
        %v652 = vrot.slane %v644, %v651
        %v654 = vunpack.c.l.s4 1983009808
        %v655 = vunpack.c.0.s8 %v654
        %v656 = vlaneseq
        %v657 = vshrl.u32 %v656, 7
        %v658 = vsub.s32 %v655, %v657
        %v659 = vrot.slane %v645, %v658
        %v660 = vcombine.low %v636, %v652
        %v661 = vcombine.high %v636, %v652
        %v663 = vunpack.c.l.s4 1934713408
        %v664 = vunpack.c.0.s8 %v663
        %v665 = vlaneseq
        %v666 = vshrl.u32 %v665, 7
        %v667 = vsub.s32 %v664, %v666
        %v668 = vrot.slane %v660, %v667
        %v670 = vunpack.c.l.s4 1934713408
        %v671 = vunpack.c.0.s8 %v670
        %v672 = vlaneseq
        %v673 = vshrl.u32 %v672, 7
        %v674 = vsub.s32 %v671, %v673
        %v675 = vrot.slane %v661, %v674
        %v676 = vcombine.low %v643, %v659
        %v677 = vcombine.high %v643, %v659
        %v679 = vunpack.c.l.s4 1934713408
        %v680 = vunpack.c.0.s8 %v679
        %v681 = vlaneseq
        %v682 = vshrl.u32 %v681, 7
        %v683 = vsub.s32 %v680, %v682
        %v684 = vrot.slane %v676, %v683
        %v686 = vunpack.c.l.s4 1934713408
        %v687 = vunpack.c.0.s8 %v686
        %v688 = vlaneseq
        %v689 = vshrl.u32 %v688, 7
        %v690 = vsub.s32 %v687, %v689
        %v691 = vrot.slane %v677, %v690
        %v692 = vcombine.high %v668, 0.0
        %v693 = vcombine.high %v675, 0.0
        %v694 = vcombine.high %v684, 0.0
        %v695 = vcombine.high %v691, 0.0
        %v696 = vcombine.low %v668, %v675
        %v698 = vunpack.c.l.s4 1983009808
        %v699 = vunpack.c.0.s8 %v698
        %v700 = vlaneseq
        %v701 = vshrl.u32 %v700, 7
        %v702 = vsub.s32 %v699, %v701
        %v703 = vrot.slane %v696, %v702
        %v704 = vcombine.low %v692, %v693
        %v706 = vunpack.c.l.s4 1983009808
        %v707 = vunpack.c.0.s8 %v706
        %v708 = vlaneseq
        %v709 = vshrl.u32 %v708, 7
        %v710 = vsub.s32 %v707, %v709
        %v711 = vrot.slane %v704, %v710
        %v712 = vcombine.low %v684, %v691
        %v714 = vunpack.c.l.s4 1983009808
        %v715 = vunpack.c.0.s8 %v714
        %v716 = vlaneseq
        %v717 = vshrl.u32 %v716, 7
        %v718 = vsub.s32 %v715, %v717
        %v719 = vrot.slane %v712, %v718
        %v720 = vcombine.low %v694, %v695
        %v722 = vunpack.c.l.s4 1983009808
        %v723 = vunpack.c.0.s8 %v722
        %v724 = vlaneseq
        %v725 = vshrl.u32 %v724, 7
        %v726 = vsub.s32 %v723, %v725
        %v727 = vrot.slane %v720, %v726
        %v728 = vcombine.low %v703, %v711
        %v729 = vcombine.high %v703, %v711
        %v731 = vunpack.c.l.s4 1934713408
        %v732 = vunpack.c.0.s8 %v731
        %v733 = vlaneseq
        %v734 = vshrl.u32 %v733, 7
        %v735 = vsub.s32 %v732, %v734
        %v736 = vrot.slane %v728, %v735
        %v738 = vunpack.c.l.s4 1934713408
        %v739 = vunpack.c.0.s8 %v738
        %v740 = vlaneseq
        %v741 = vshrl.u32 %v740, 7
        %v742 = vsub.s32 %v739, %v741
        %v743 = vrot.slane %v729, %v742
        %v744 = vcombine.low %v719, %v727
        %v745 = vcombine.high %v719, %v727
        %v747 = vunpack.c.l.s4 1934713408
        %v748 = vunpack.c.0.s8 %v747
        %v749 = vlaneseq
        %v750 = vshrl.u32 %v749, 7
        %v751 = vsub.s32 %v748, %v750
        %v752 = vrot.slane %v744, %v751
        %v754 = vunpack.c.l.s4 1934713408
        %v755 = vunpack.c.0.s8 %v754
        %v756 = vlaneseq
        %v757 = vshrl.u32 %v756, 7
        %v758 = vsub.s32 %v755, %v757
        %v759 = vrot.slane %v745, %v758
        %v760 = vcombine.low %v736, %v752
        %v761 = vcombine.high %v736, %v752
        %v762 = vcombine.low %v743, %v759
        %v763 = vcombine.high %v743, %v759
        %764 = vrot.lane.b32.xlu0 %v615, 96
        %v765 = vpop.permute.xlu0 %764
        %766 = vrot.lane.b32.xlu0 %v620, 96
        %v767 = vpop.permute.xlu0 %766
        %768 = vrot.lane.b32.xlu0 %v623, 96
        %v769 = vpop.permute.xlu0 %768
        %770 = vrot.lane.b32.xlu0 %v626, 96
        %v771 = vpop.permute.xlu0 %770
        %v776 = vcombine.low %v765, %v769
        %v777 = vcombine.high %v765, %v769
        %v779 = vunpack.c.l.s4 1983009808
        %v780 = vunpack.c.0.s8 %v779
        %v781 = vlaneseq
        %v782 = vshrl.u32 %v781, 7
        %v783 = vsub.s32 %v780, %v782
        %v784 = vrot.slane %v776, %v783
        %v786 = vunpack.c.l.s4 1983009808
        %v787 = vunpack.c.0.s8 %v786
        %v788 = vlaneseq
        %v789 = vshrl.u32 %v788, 7
        %v790 = vsub.s32 %v787, %v789
        %v791 = vrot.slane %v777, %v790
        %v792 = vcombine.low %v767, %v771
        %v793 = vcombine.high %v767, %v771
        %v795 = vunpack.c.l.s4 1983009808
        %v796 = vunpack.c.0.s8 %v795
        %v797 = vlaneseq
        %v798 = vshrl.u32 %v797, 7
        %v799 = vsub.s32 %v796, %v798
        %v800 = vrot.slane %v792, %v799
        %v802 = vunpack.c.l.s4 1983009808
        %v803 = vunpack.c.0.s8 %v802
        %v804 = vlaneseq
        %v805 = vshrl.u32 %v804, 7
        %v806 = vsub.s32 %v803, %v805
        %v807 = vrot.slane %v793, %v806
        %v808 = vcombine.low %v784, %v800
        %v809 = vcombine.high %v784, %v800
        %v811 = vunpack.c.l.s4 1934713408
        %v812 = vunpack.c.0.s8 %v811
        %v813 = vlaneseq
        %v814 = vshrl.u32 %v813, 7
        %v815 = vsub.s32 %v812, %v814
        %v816 = vrot.slane %v808, %v815
        %v818 = vunpack.c.l.s4 1934713408
        %v819 = vunpack.c.0.s8 %v818
        %v820 = vlaneseq
        %v821 = vshrl.u32 %v820, 7
        %v822 = vsub.s32 %v819, %v821
        %v823 = vrot.slane %v809, %v822
        %v824 = vcombine.low %v791, %v807
        %v825 = vcombine.high %v791, %v807
        %v827 = vunpack.c.l.s4 1934713408
        %v828 = vunpack.c.0.s8 %v827
        %v829 = vlaneseq
        %v830 = vshrl.u32 %v829, 7
        %v831 = vsub.s32 %v828, %v830
        %v832 = vrot.slane %v824, %v831
        %v834 = vunpack.c.l.s4 1934713408
        %v835 = vunpack.c.0.s8 %v834
        %v836 = vlaneseq
        %v837 = vshrl.u32 %v836, 7
        %v838 = vsub.s32 %v835, %v837
        %v839 = vrot.slane %v825, %v838
        %v840 = vcombine.high %v816, 0.0
        %v841 = vcombine.high %v823, 0.0
        %v842 = vcombine.high %v832, 0.0
        %v843 = vcombine.high %v839, 0.0
        %844 = vxpose.xlu0.b32.start [1/16] %v816, 128
        %845 = vxpose.xlu0.b32.cont [2/16] 0.0, 128
        %846 = vxpose.xlu0.b32.cont [3/16] 0.0, 128
        %847 = vxpose.xlu0.b32.cont [4/16] 0.0, 128
        %848 = vxpose.xlu0.b32.cont [5/16] 0.0, 128
        %849 = vxpose.xlu0.b32.cont [6/16] 0.0, 128
        %850 = vxpose.xlu0.b32.cont [7/16] 0.0, 128
        %851 = vxpose.xlu0.b32.cont [8/16] 0.0, 128
        %852 = vxpose.xlu0.b32.cont [9/16] 0.0, 128
        %853 = vxpose.xlu0.b32.cont [10/16] 0.0, 128
        %854 = vxpose.xlu0.b32.cont [11/16] 0.0, 128
        %855 = vxpose.xlu0.b32.cont [12/16] 0.0, 128
        %856 = vxpose.xlu0.b32.cont [13/16] 0.0, 128
        %857 = vxpose.xlu0.b32.cont [14/16] 0.0, 128
        %858 = vxpose.xlu0.b32.cont [15/16] 0.0, 128
        %859 = vxpose.xlu0.b32.end [16/16] 0.0, 128
        %v860 = vpop.trf.xlu0
        %v861 = vpop.trf.xlu0
        %v862 = vpop.trf.xlu0
        %v863 = vpop.trf.xlu0
        %v864 = vpop.trf.xlu0
        %v865 = vpop.trf.xlu0
        %v866 = vpop.trf.xlu0
        %v867 = vpop.trf.xlu0
        %v868 = vpop.trf.xlu0
        %v869 = vpop.trf.xlu0
        %v870 = vpop.trf.xlu0
        %v871 = vpop.trf.xlu0
        %v872 = vpop.trf.xlu0
        %v873 = vpop.trf.xlu0
        %v874 = vpop.trf.xlu0
        %v875 = vpop.trf.xlu0
        %876 = vxpose.xlu0.b32.start [1/16] %v840, 128
        %877 = vxpose.xlu0.b32.cont [2/16] 0.0, 128
        %878 = vxpose.xlu0.b32.cont [3/16] 0.0, 128
        %879 = vxpose.xlu0.b32.cont [4/16] 0.0, 128
        %880 = vxpose.xlu0.b32.cont [5/16] 0.0, 128
        %881 = vxpose.xlu0.b32.cont [6/16] 0.0, 128
        %882 = vxpose.xlu0.b32.cont [7/16] 0.0, 128
        %883 = vxpose.xlu0.b32.cont [8/16] 0.0, 128
        %884 = vxpose.xlu0.b32.cont [9/16] 0.0, 128
        %885 = vxpose.xlu0.b32.cont [10/16] 0.0, 128
        %886 = vxpose.xlu0.b32.cont [11/16] 0.0, 128
        %887 = vxpose.xlu0.b32.cont [12/16] 0.0, 128
        %888 = vxpose.xlu0.b32.cont [13/16] 0.0, 128
        %889 = vxpose.xlu0.b32.cont [14/16] 0.0, 128
        %890 = vxpose.xlu0.b32.cont [15/16] 0.0, 128
        %891 = vxpose.xlu0.b32.end [16/16] 0.0, 128
        %v892 = vpop.trf.xlu0
        %v893 = vpop.trf.xlu0
        %v894 = vpop.trf.xlu0
        %v895 = vpop.trf.xlu0
        %v896 = vpop.trf.xlu0
        %v897 = vpop.trf.xlu0
        %v898 = vpop.trf.xlu0
        %v899 = vpop.trf.xlu0
        %v900 = vpop.trf.xlu0
        %v901 = vpop.trf.xlu0
        %v902 = vpop.trf.xlu0
        %v903 = vpop.trf.xlu0
        %v904 = vpop.trf.xlu0
        %v905 = vpop.trf.xlu0
        %v906 = vpop.trf.xlu0
        %v907 = vpop.trf.xlu0
        %908 = vxpose.xlu0.b32.start [1/16] %v823, 128
        %909 = vxpose.xlu0.b32.cont [2/16] 0.0, 128
        %910 = vxpose.xlu0.b32.cont [3/16] 0.0, 128
        %911 = vxpose.xlu0.b32.cont [4/16] 0.0, 128
        %912 = vxpose.xlu0.b32.cont [5/16] 0.0, 128
        %913 = vxpose.xlu0.b32.cont [6/16] 0.0, 128
        %914 = vxpose.xlu0.b32.cont [7/16] 0.0, 128
        %915 = vxpose.xlu0.b32.cont [8/16] 0.0, 128
        %916 = vxpose.xlu0.b32.cont [9/16] 0.0, 128
        %917 = vxpose.xlu0.b32.cont [10/16] 0.0, 128
        %918 = vxpose.xlu0.b32.cont [11/16] 0.0, 128
        %919 = vxpose.xlu0.b32.cont [12/16] 0.0, 128
        %920 = vxpose.xlu0.b32.cont [13/16] 0.0, 128
        %921 = vxpose.xlu0.b32.cont [14/16] 0.0, 128
        %922 = vxpose.xlu0.b32.cont [15/16] 0.0, 128
        %923 = vxpose.xlu0.b32.end [16/16] 0.0, 128
        %v924 = vpop.trf.xlu0
        %v925 = vpop.trf.xlu0
        %v926 = vpop.trf.xlu0
        %v927 = vpop.trf.xlu0
        %v928 = vpop.trf.xlu0
        %v929 = vpop.trf.xlu0
        %v930 = vpop.trf.xlu0
        %v931 = vpop.trf.xlu0
        %v932 = vpop.trf.xlu0
        %v933 = vpop.trf.xlu0
        %v934 = vpop.trf.xlu0
        %v935 = vpop.trf.xlu0
        %v936 = vpop.trf.xlu0
        %v937 = vpop.trf.xlu0
        %v938 = vpop.trf.xlu0
        %v939 = vpop.trf.xlu0
        %940 = vxpose.xlu0.b32.start [1/16] %v841, 128
        %941 = vxpose.xlu0.b32.cont [2/16] 0.0, 128
        %942 = vxpose.xlu0.b32.cont [3/16] 0.0, 128
        %943 = vxpose.xlu0.b32.cont [4/16] 0.0, 128
        %944 = vxpose.xlu0.b32.cont [5/16] 0.0, 128
        %945 = vxpose.xlu0.b32.cont [6/16] 0.0, 128
        %946 = vxpose.xlu0.b32.cont [7/16] 0.0, 128
        %947 = vxpose.xlu0.b32.cont [8/16] 0.0, 128
        %948 = vxpose.xlu0.b32.cont [9/16] 0.0, 128
        %949 = vxpose.xlu0.b32.cont [10/16] 0.0, 128
        %950 = vxpose.xlu0.b32.cont [11/16] 0.0, 128
        %951 = vxpose.xlu0.b32.cont [12/16] 0.0, 128
        %952 = vxpose.xlu0.b32.cont [13/16] 0.0, 128
        %953 = vxpose.xlu0.b32.cont [14/16] 0.0, 128
        %954 = vxpose.xlu0.b32.cont [15/16] 0.0, 128
        %955 = vxpose.xlu0.b32.end [16/16] 0.0, 128
        %v956 = vpop.trf.xlu0
        %v957 = vpop.trf.xlu0
        %v958 = vpop.trf.xlu0
        %v959 = vpop.trf.xlu0
        %v960 = vpop.trf.xlu0
        %v961 = vpop.trf.xlu0
        %v962 = vpop.trf.xlu0
        %v963 = vpop.trf.xlu0
        %v964 = vpop.trf.xlu0
        %v965 = vpop.trf.xlu0
        %v966 = vpop.trf.xlu0
        %v967 = vpop.trf.xlu0
        %v968 = vpop.trf.xlu0
        %v969 = vpop.trf.xlu0
        %v970 = vpop.trf.xlu0
        %v971 = vpop.trf.xlu0
        %972 = vxpose.xlu0.b32.start [1/16] %v832, 128
        %973 = vxpose.xlu0.b32.cont [2/16] 0.0, 128
        %974 = vxpose.xlu0.b32.cont [3/16] 0.0, 128
        %975 = vxpose.xlu0.b32.cont [4/16] 0.0, 128
        %976 = vxpose.xlu0.b32.cont [5/16] 0.0, 128
        %977 = vxpose.xlu0.b32.cont [6/16] 0.0, 128
        %978 = vxpose.xlu0.b32.cont [7/16] 0.0, 128
        %979 = vxpose.xlu0.b32.cont [8/16] 0.0, 128
        %980 = vxpose.xlu0.b32.cont [9/16] 0.0, 128
        %981 = vxpose.xlu0.b32.cont [10/16] 0.0, 128
        %982 = vxpose.xlu0.b32.cont [11/16] 0.0, 128
        %983 = vxpose.xlu0.b32.cont [12/16] 0.0, 128
        %984 = vxpose.xlu0.b32.cont [13/16] 0.0, 128
        %985 = vxpose.xlu0.b32.cont [14/16] 0.0, 128
        %986 = vxpose.xlu0.b32.cont [15/16] 0.0, 128
        %987 = vxpose.xlu0.b32.end [16/16] 0.0, 128
        %v988 = vpop.trf.xlu0
        %v989 = vpop.trf.xlu0
        %v990 = vpop.trf.xlu0
        %v991 = vpop.trf.xlu0
        %v992 = vpop.trf.xlu0
        %v993 = vpop.trf.xlu0
        %v994 = vpop.trf.xlu0
        %v995 = vpop.trf.xlu0
        %v996 = vpop.trf.xlu0
        %v997 = vpop.trf.xlu0
        %v998 = vpop.trf.xlu0
        %v999 = vpop.trf.xlu0
        %v1000 = vpop.trf.xlu0
        %v1001 = vpop.trf.xlu0
        %v1002 = vpop.trf.xlu0
        %v1003 = vpop.trf.xlu0
        %1004 = vxpose.xlu0.b32.start [1/16] %v842, 128
        %1005 = vxpose.xlu0.b32.cont [2/16] 0.0, 128
        %1006 = vxpose.xlu0.b32.cont [3/16] 0.0, 128
        %1007 = vxpose.xlu0.b32.cont [4/16] 0.0, 128
        %1008 = vxpose.xlu0.b32.cont [5/16] 0.0, 128
        %1009 = vxpose.xlu0.b32.cont [6/16] 0.0, 128
        %1010 = vxpose.xlu0.b32.cont [7/16] 0.0, 128
        %1011 = vxpose.xlu0.b32.cont [8/16] 0.0, 128
        %1012 = vxpose.xlu0.b32.cont [9/16] 0.0, 128
        %1013 = vxpose.xlu0.b32.cont [10/16] 0.0, 128
        %1014 = vxpose.xlu0.b32.cont [11/16] 0.0, 128
        %1015 = vxpose.xlu0.b32.cont [12/16] 0.0, 128
        %1016 = vxpose.xlu0.b32.cont [13/16] 0.0, 128
        %1017 = vxpose.xlu0.b32.cont [14/16] 0.0, 128
        %1018 = vxpose.xlu0.b32.cont [15/16] 0.0, 128
        %1019 = vxpose.xlu0.b32.end [16/16] 0.0, 128
        %v1020 = vpop.trf.xlu0
        %v1021 = vpop.trf.xlu0
        %v1022 = vpop.trf.xlu0
        %v1023 = vpop.trf.xlu0
        %v1024 = vpop.trf.xlu0
        %v1025 = vpop.trf.xlu0
        %v1026 = vpop.trf.xlu0
        %v1027 = vpop.trf.xlu0
        %v1028 = vpop.trf.xlu0
        %v1029 = vpop.trf.xlu0
        %v1030 = vpop.trf.xlu0
        %v1031 = vpop.trf.xlu0
        %v1032 = vpop.trf.xlu0
        %v1033 = vpop.trf.xlu0
        %v1034 = vpop.trf.xlu0
        %v1035 = vpop.trf.xlu0
        %1036 = vxpose.xlu0.b32.start [1/16] %v839, 128
        %1037 = vxpose.xlu0.b32.cont [2/16] 0.0, 128
        %1038 = vxpose.xlu0.b32.cont [3/16] 0.0, 128
        %1039 = vxpose.xlu0.b32.cont [4/16] 0.0, 128
        %1040 = vxpose.xlu0.b32.cont [5/16] 0.0, 128
        %1041 = vxpose.xlu0.b32.cont [6/16] 0.0, 128
        %1042 = vxpose.xlu0.b32.cont [7/16] 0.0, 128
        %1043 = vxpose.xlu0.b32.cont [8/16] 0.0, 128
        %1044 = vxpose.xlu0.b32.cont [9/16] 0.0, 128
        %1045 = vxpose.xlu0.b32.cont [10/16] 0.0, 128
        %1046 = vxpose.xlu0.b32.cont [11/16] 0.0, 128
        %1047 = vxpose.xlu0.b32.cont [12/16] 0.0, 128
        %1048 = vxpose.xlu0.b32.cont [13/16] 0.0, 128
        %1049 = vxpose.xlu0.b32.cont [14/16] 0.0, 128
        %1050 = vxpose.xlu0.b32.cont [15/16] 0.0, 128
        %1051 = vxpose.xlu0.b32.end [16/16] 0.0, 128
        %v1052 = vpop.trf.xlu0
        %v1053 = vpop.trf.xlu0
        %v1054 = vpop.trf.xlu0
        %v1055 = vpop.trf.xlu0
        %v1056 = vpop.trf.xlu0
        %v1057 = vpop.trf.xlu0
        %v1058 = vpop.trf.xlu0
        %v1059 = vpop.trf.xlu0
        %v1060 = vpop.trf.xlu0
        %v1061 = vpop.trf.xlu0
        %v1062 = vpop.trf.xlu0
        %v1063 = vpop.trf.xlu0
        %v1064 = vpop.trf.xlu0
        %v1065 = vpop.trf.xlu0
        %v1066 = vpop.trf.xlu0
        %v1067 = vpop.trf.xlu0
        %1068 = vxpose.xlu0.b32.start [1/16] %v843, 128
        %1069 = vxpose.xlu0.b32.cont [2/16] 0.0, 128
        %1070 = vxpose.xlu0.b32.cont [3/16] 0.0, 128
        %1071 = vxpose.xlu0.b32.cont [4/16] 0.0, 128
        %1072 = vxpose.xlu0.b32.cont [5/16] 0.0, 128
        %1073 = vxpose.xlu0.b32.cont [6/16] 0.0, 128
        %1074 = vxpose.xlu0.b32.cont [7/16] 0.0, 128
        %1075 = vxpose.xlu0.b32.cont [8/16] 0.0, 128
        %1076 = vxpose.xlu0.b32.cont [9/16] 0.0, 128
        %1077 = vxpose.xlu0.b32.cont [10/16] 0.0, 128
        %1078 = vxpose.xlu0.b32.cont [11/16] 0.0, 128
        %1079 = vxpose.xlu0.b32.cont [12/16] 0.0, 128
        %1080 = vxpose.xlu0.b32.cont [13/16] 0.0, 128
        %1081 = vxpose.xlu0.b32.cont [14/16] 0.0, 128
        %1082 = vxpose.xlu0.b32.cont [15/16] 0.0, 128
        %1083 = vxpose.xlu0.b32.end [16/16] 0.0, 128
        %v1084 = vpop.trf.xlu0
        %v1085 = vpop.trf.xlu0
        %v1086 = vpop.trf.xlu0
        %v1087 = vpop.trf.xlu0
        %v1088 = vpop.trf.xlu0
        %v1089 = vpop.trf.xlu0
        %v1090 = vpop.trf.xlu0
        %v1091 = vpop.trf.xlu0
        %v1092 = vpop.trf.xlu0
        %v1093 = vpop.trf.xlu0
        %v1094 = vpop.trf.xlu0
        %v1095 = vpop.trf.xlu0
        %v1096 = vpop.trf.xlu0
        %v1097 = vpop.trf.xlu0
        %v1098 = vpop.trf.xlu0
        %v1099 = vpop.trf.xlu0
        %v1100 = vcombine.low %v860, %v924
        %v1101 = vcombine.high %v860, %v924
        %v1103 = vunpack.c.l.s4 1983009808
        %v1104 = vunpack.c.0.s8 %v1103
        %v1105 = vlaneseq
        %v1106 = vshrl.u32 %v1105, 7
        %v1107 = vsub.s32 %v1104, %v1106
        %v1108 = vrot.slane %v1100, %v1107
        %v1110 = vunpack.c.l.s4 1983009808
        %v1111 = vunpack.c.0.s8 %v1110
        %v1112 = vlaneseq
        %v1113 = vshrl.u32 %v1112, 7
        %v1114 = vsub.s32 %v1111, %v1113
        %v1115 = vrot.slane %v1101, %v1114
        %v1116 = vcombine.low %v892, %v956
        %v1117 = vcombine.high %v892, %v956
        %v1119 = vunpack.c.l.s4 1983009808
        %v1120 = vunpack.c.0.s8 %v1119
        %v1121 = vlaneseq
        %v1122 = vshrl.u32 %v1121, 7
        %v1123 = vsub.s32 %v1120, %v1122
        %v1124 = vrot.slane %v1116, %v1123
        %v1126 = vunpack.c.l.s4 1983009808
        %v1127 = vunpack.c.0.s8 %v1126
        %v1128 = vlaneseq
        %v1129 = vshrl.u32 %v1128, 7
        %v1130 = vsub.s32 %v1127, %v1129
        %v1131 = vrot.slane %v1117, %v1130
        %v1132 = vcombine.low %v988, %v1052
        %v1133 = vcombine.high %v988, %v1052
        %v1135 = vunpack.c.l.s4 1983009808
        %v1136 = vunpack.c.0.s8 %v1135
        %v1137 = vlaneseq
        %v1138 = vshrl.u32 %v1137, 7
        %v1139 = vsub.s32 %v1136, %v1138
        %v1140 = vrot.slane %v1132, %v1139
        %v1142 = vunpack.c.l.s4 1983009808
        %v1143 = vunpack.c.0.s8 %v1142
        %v1144 = vlaneseq
        %v1145 = vshrl.u32 %v1144, 7
        %v1146 = vsub.s32 %v1143, %v1145
        %v1147 = vrot.slane %v1133, %v1146
        %v1148 = vcombine.low %v1020, %v1084
        %v1149 = vcombine.high %v1020, %v1084
        %v1151 = vunpack.c.l.s4 1983009808
        %v1152 = vunpack.c.0.s8 %v1151
        %v1153 = vlaneseq
        %v1154 = vshrl.u32 %v1153, 7
        %v1155 = vsub.s32 %v1152, %v1154
        %v1156 = vrot.slane %v1148, %v1155
        %v1158 = vunpack.c.l.s4 1983009808
        %v1159 = vunpack.c.0.s8 %v1158
        %v1160 = vlaneseq
        %v1161 = vshrl.u32 %v1160, 7
        %v1162 = vsub.s32 %v1159, %v1161
        %v1163 = vrot.slane %v1149, %v1162
        %v1164 = vcombine.low %v1108, %v1124
        %v1165 = vcombine.high %v1108, %v1124
        %v1167 = vunpack.c.l.s4 1934713408
        %v1168 = vunpack.c.0.s8 %v1167
        %v1169 = vlaneseq
        %v1170 = vshrl.u32 %v1169, 7
        %v1171 = vsub.s32 %v1168, %v1170
        %v1172 = vrot.slane %v1164, %v1171
        %v1174 = vunpack.c.l.s4 1934713408
        %v1175 = vunpack.c.0.s8 %v1174
        %v1176 = vlaneseq
        %v1177 = vshrl.u32 %v1176, 7
        %v1178 = vsub.s32 %v1175, %v1177
        %v1179 = vrot.slane %v1165, %v1178
        %v1180 = vcombine.low %v1115, %v1131
        %v1181 = vcombine.high %v1115, %v1131
        %v1183 = vunpack.c.l.s4 1934713408
        %v1184 = vunpack.c.0.s8 %v1183
        %v1185 = vlaneseq
        %v1186 = vshrl.u32 %v1185, 7
        %v1187 = vsub.s32 %v1184, %v1186
        %v1188 = vrot.slane %v1180, %v1187
        %v1190 = vunpack.c.l.s4 1934713408
        %v1191 = vunpack.c.0.s8 %v1190
        %v1192 = vlaneseq
        %v1193 = vshrl.u32 %v1192, 7
        %v1194 = vsub.s32 %v1191, %v1193
        %v1195 = vrot.slane %v1181, %v1194
        %v1196 = vcombine.low %v1140, %v1156
        %v1197 = vcombine.high %v1140, %v1156
        %v1199 = vunpack.c.l.s4 1934713408
        %v1200 = vunpack.c.0.s8 %v1199
        %v1201 = vlaneseq
        %v1202 = vshrl.u32 %v1201, 7
        %v1203 = vsub.s32 %v1200, %v1202
        %v1204 = vrot.slane %v1196, %v1203
        %v1206 = vunpack.c.l.s4 1934713408
        %v1207 = vunpack.c.0.s8 %v1206
        %v1208 = vlaneseq
        %v1209 = vshrl.u32 %v1208, 7
        %v1210 = vsub.s32 %v1207, %v1209
        %v1211 = vrot.slane %v1197, %v1210
        %v1212 = vcombine.low %v1147, %v1163
        %v1213 = vcombine.high %v1147, %v1163
        %v1215 = vunpack.c.l.s4 1934713408
        %v1216 = vunpack.c.0.s8 %v1215
        %v1217 = vlaneseq
        %v1218 = vshrl.u32 %v1217, 7
        %v1219 = vsub.s32 %v1216, %v1218
        %v1220 = vrot.slane %v1212, %v1219
        %v1222 = vunpack.c.l.s4 1934713408
        %v1223 = vunpack.c.0.s8 %v1222
        %v1224 = vlaneseq
        %v1225 = vshrl.u32 %v1224, 7
        %v1226 = vsub.s32 %v1223, %v1225
        %v1227 = vrot.slane %v1213, %v1226
        %v1228 = vcombine.low %v1172, %v1204
        %v1229 = vcombine.high %v1172, %v1204
        %v1230 = vcombine.low %v1179, %v1211
        %v1231 = vcombine.high %v1179, %v1211
        %v1232 = vcombine.low %v1188, %v1220
        %v1233 = vcombine.high %v1188, %v1220
        %v1234 = vcombine.low %v1195, %v1227
        %v1235 = vcombine.high %v1195, %v1227
        %1236 = vxpose.xlu0.b32.start [1/16] %v1228, 128
        %1237 = vxpose.xlu0.b32.cont [2/16] 0.0, 128
        %1238 = vxpose.xlu0.b32.cont [3/16] 0.0, 128
        %1239 = vxpose.xlu0.b32.cont [4/16] 0.0, 128
        %1240 = vxpose.xlu0.b32.cont [5/16] 0.0, 128
        %1241 = vxpose.xlu0.b32.cont [6/16] 0.0, 128
        %1242 = vxpose.xlu0.b32.cont [7/16] 0.0, 128
        %1243 = vxpose.xlu0.b32.cont [8/16] 0.0, 128
        %1244 = vxpose.xlu0.b32.cont [9/16] 0.0, 128
        %1245 = vxpose.xlu0.b32.cont [10/16] 0.0, 128
        %1246 = vxpose.xlu0.b32.cont [11/16] 0.0, 128
        %1247 = vxpose.xlu0.b32.cont [12/16] 0.0, 128
        %1248 = vxpose.xlu0.b32.cont [13/16] 0.0, 128
        %1249 = vxpose.xlu0.b32.cont [14/16] 0.0, 128
        %1250 = vxpose.xlu0.b32.cont [15/16] 0.0, 128
        %1251 = vxpose.xlu0.b32.end [16/16] 0.0, 128
        %v1252 = vpop.trf.xlu0
        %v1253 = vpop.trf.xlu0
        %v1254 = vpop.trf.xlu0
        %v1255 = vpop.trf.xlu0
        %v1256 = vpop.trf.xlu0
        %v1257 = vpop.trf.xlu0
        %v1258 = vpop.trf.xlu0
        %v1259 = vpop.trf.xlu0
        %v1260 = vpop.trf.xlu0
        %v1261 = vpop.trf.xlu0
        %v1262 = vpop.trf.xlu0
        %v1263 = vpop.trf.xlu0
        %v1264 = vpop.trf.xlu0
        %v1265 = vpop.trf.xlu0
        %v1266 = vpop.trf.xlu0
        %v1267 = vpop.trf.xlu0
        %1268 = vxpose.xlu0.b32.start [1/16] %v1229, 128
        %1269 = vxpose.xlu0.b32.cont [2/16] 0.0, 128
        %1270 = vxpose.xlu0.b32.cont [3/16] 0.0, 128
        %1271 = vxpose.xlu0.b32.cont [4/16] 0.0, 128
        %1272 = vxpose.xlu0.b32.cont [5/16] 0.0, 128
        %1273 = vxpose.xlu0.b32.cont [6/16] 0.0, 128
        %1274 = vxpose.xlu0.b32.cont [7/16] 0.0, 128
        %1275 = vxpose.xlu0.b32.cont [8/16] 0.0, 128
        %1276 = vxpose.xlu0.b32.cont [9/16] 0.0, 128
        %1277 = vxpose.xlu0.b32.cont [10/16] 0.0, 128
        %1278 = vxpose.xlu0.b32.cont [11/16] 0.0, 128
        %1279 = vxpose.xlu0.b32.cont [12/16] 0.0, 128
        %1280 = vxpose.xlu0.b32.cont [13/16] 0.0, 128
        %1281 = vxpose.xlu0.b32.cont [14/16] 0.0, 128
        %1282 = vxpose.xlu0.b32.cont [15/16] 0.0, 128
        %1283 = vxpose.xlu0.b32.end [16/16] 0.0, 128
        %v1284 = vpop.trf.xlu0
        %v1285 = vpop.trf.xlu0
        %v1286 = vpop.trf.xlu0
        %v1287 = vpop.trf.xlu0
        %v1288 = vpop.trf.xlu0
        %v1289 = vpop.trf.xlu0
        %v1290 = vpop.trf.xlu0
        %v1291 = vpop.trf.xlu0
        %v1292 = vpop.trf.xlu0
        %v1293 = vpop.trf.xlu0
        %v1294 = vpop.trf.xlu0
        %v1295 = vpop.trf.xlu0
        %v1296 = vpop.trf.xlu0
        %v1297 = vpop.trf.xlu0
        %v1298 = vpop.trf.xlu0
        %v1299 = vpop.trf.xlu0
        %1300 = vxpose.xlu0.b32.start [1/16] %v1230, 128
        %1301 = vxpose.xlu0.b32.cont [2/16] 0.0, 128
        %1302 = vxpose.xlu0.b32.cont [3/16] 0.0, 128
        %1303 = vxpose.xlu0.b32.cont [4/16] 0.0, 128
        %1304 = vxpose.xlu0.b32.cont [5/16] 0.0, 128
        %1305 = vxpose.xlu0.b32.cont [6/16] 0.0, 128
        %1306 = vxpose.xlu0.b32.cont [7/16] 0.0, 128
        %1307 = vxpose.xlu0.b32.cont [8/16] 0.0, 128
        %1308 = vxpose.xlu0.b32.cont [9/16] 0.0, 128
        %1309 = vxpose.xlu0.b32.cont [10/16] 0.0, 128
        %1310 = vxpose.xlu0.b32.cont [11/16] 0.0, 128
        %1311 = vxpose.xlu0.b32.cont [12/16] 0.0, 128
        %1312 = vxpose.xlu0.b32.cont [13/16] 0.0, 128
        %1313 = vxpose.xlu0.b32.cont [14/16] 0.0, 128
        %1314 = vxpose.xlu0.b32.cont [15/16] 0.0, 128
        %1315 = vxpose.xlu0.b32.end [16/16] 0.0, 128
        %v1316 = vpop.trf.xlu0
        %v1317 = vpop.trf.xlu0
        %v1318 = vpop.trf.xlu0
        %v1319 = vpop.trf.xlu0
        %v1320 = vpop.trf.xlu0
        %v1321 = vpop.trf.xlu0
        %v1322 = vpop.trf.xlu0
        %v1323 = vpop.trf.xlu0
        %v1324 = vpop.trf.xlu0
        %v1325 = vpop.trf.xlu0
        %v1326 = vpop.trf.xlu0
        %v1327 = vpop.trf.xlu0
        %v1328 = vpop.trf.xlu0
        %v1329 = vpop.trf.xlu0
        %v1330 = vpop.trf.xlu0
        %v1331 = vpop.trf.xlu0
        %1332 = vxpose.xlu0.b32.start [1/16] %v1231, 128
        %1333 = vxpose.xlu0.b32.cont [2/16] 0.0, 128
        %1334 = vxpose.xlu0.b32.cont [3/16] 0.0, 128
        %1335 = vxpose.xlu0.b32.cont [4/16] 0.0, 128
        %1336 = vxpose.xlu0.b32.cont [5/16] 0.0, 128
        %1337 = vxpose.xlu0.b32.cont [6/16] 0.0, 128
        %1338 = vxpose.xlu0.b32.cont [7/16] 0.0, 128
        %1339 = vxpose.xlu0.b32.cont [8/16] 0.0, 128
        %1340 = vxpose.xlu0.b32.cont [9/16] 0.0, 128
        %1341 = vxpose.xlu0.b32.cont [10/16] 0.0, 128
        %1342 = vxpose.xlu0.b32.cont [11/16] 0.0, 128
        %1343 = vxpose.xlu0.b32.cont [12/16] 0.0, 128
        %1344 = vxpose.xlu0.b32.cont [13/16] 0.0, 128
        %1345 = vxpose.xlu0.b32.cont [14/16] 0.0, 128
        %1346 = vxpose.xlu0.b32.cont [15/16] 0.0, 128
        %1347 = vxpose.xlu0.b32.end [16/16] 0.0, 128
        %v1348 = vpop.trf.xlu0
        %v1349 = vpop.trf.xlu0
        %v1350 = vpop.trf.xlu0
        %v1351 = vpop.trf.xlu0
        %v1352 = vpop.trf.xlu0
        %v1353 = vpop.trf.xlu0
        %v1354 = vpop.trf.xlu0
        %v1355 = vpop.trf.xlu0
        %v1356 = vpop.trf.xlu0
        %v1357 = vpop.trf.xlu0
        %v1358 = vpop.trf.xlu0
        %v1359 = vpop.trf.xlu0
        %v1360 = vpop.trf.xlu0
        %v1361 = vpop.trf.xlu0
        %v1362 = vpop.trf.xlu0
        %v1363 = vpop.trf.xlu0
        %1364 = vxpose.xlu0.b32.start [1/16] %v1232, 128
        %1365 = vxpose.xlu0.b32.cont [2/16] 0.0, 128
        %1366 = vxpose.xlu0.b32.cont [3/16] 0.0, 128
        %1367 = vxpose.xlu0.b32.cont [4/16] 0.0, 128
        %1368 = vxpose.xlu0.b32.cont [5/16] 0.0, 128
        %1369 = vxpose.xlu0.b32.cont [6/16] 0.0, 128
        %1370 = vxpose.xlu0.b32.cont [7/16] 0.0, 128
        %1371 = vxpose.xlu0.b32.cont [8/16] 0.0, 128
        %1372 = vxpose.xlu0.b32.cont [9/16] 0.0, 128
        %1373 = vxpose.xlu0.b32.cont [10/16] 0.0, 128
        %1374 = vxpose.xlu0.b32.cont [11/16] 0.0, 128
        %1375 = vxpose.xlu0.b32.cont [12/16] 0.0, 128
        %1376 = vxpose.xlu0.b32.cont [13/16] 0.0, 128
        %1377 = vxpose.xlu0.b32.cont [14/16] 0.0, 128
        %1378 = vxpose.xlu0.b32.cont [15/16] 0.0, 128
        %1379 = vxpose.xlu0.b32.end [16/16] 0.0, 128
        %v1380 = vpop.trf.xlu0
        %v1381 = vpop.trf.xlu0
        %v1382 = vpop.trf.xlu0
        %v1383 = vpop.trf.xlu0
        %v1384 = vpop.trf.xlu0
        %v1385 = vpop.trf.xlu0
        %v1386 = vpop.trf.xlu0
        %v1387 = vpop.trf.xlu0
        %v1388 = vpop.trf.xlu0
        %v1389 = vpop.trf.xlu0
        %v1390 = vpop.trf.xlu0
        %v1391 = vpop.trf.xlu0
        %v1392 = vpop.trf.xlu0
        %v1393 = vpop.trf.xlu0
        %v1394 = vpop.trf.xlu0
        %v1395 = vpop.trf.xlu0
        %1396 = vxpose.xlu0.b32.start [1/16] %v1233, 128
        %1397 = vxpose.xlu0.b32.cont [2/16] 0.0, 128
        %1398 = vxpose.xlu0.b32.cont [3/16] 0.0, 128
        %1399 = vxpose.xlu0.b32.cont [4/16] 0.0, 128
        %1400 = vxpose.xlu0.b32.cont [5/16] 0.0, 128
        %1401 = vxpose.xlu0.b32.cont [6/16] 0.0, 128
        %1402 = vxpose.xlu0.b32.cont [7/16] 0.0, 128
        %1403 = vxpose.xlu0.b32.cont [8/16] 0.0, 128
        %1404 = vxpose.xlu0.b32.cont [9/16] 0.0, 128
        %1405 = vxpose.xlu0.b32.cont [10/16] 0.0, 128
        %1406 = vxpose.xlu0.b32.cont [11/16] 0.0, 128
        %1407 = vxpose.xlu0.b32.cont [12/16] 0.0, 128
        %1408 = vxpose.xlu0.b32.cont [13/16] 0.0, 128
        %1409 = vxpose.xlu0.b32.cont [14/16] 0.0, 128
        %1410 = vxpose.xlu0.b32.cont [15/16] 0.0, 128
        %1411 = vxpose.xlu0.b32.end [16/16] 0.0, 128
        %v1412 = vpop.trf.xlu0
        %v1413 = vpop.trf.xlu0
        %v1414 = vpop.trf.xlu0
        %v1415 = vpop.trf.xlu0
        %v1416 = vpop.trf.xlu0
        %v1417 = vpop.trf.xlu0
        %v1418 = vpop.trf.xlu0
        %v1419 = vpop.trf.xlu0
        %v1420 = vpop.trf.xlu0
        %v1421 = vpop.trf.xlu0
        %v1422 = vpop.trf.xlu0
        %v1423 = vpop.trf.xlu0
        %v1424 = vpop.trf.xlu0
        %v1425 = vpop.trf.xlu0
        %v1426 = vpop.trf.xlu0
        %v1427 = vpop.trf.xlu0
        %1428 = vxpose.xlu0.b32.start [1/16] %v1234, 128
        %1429 = vxpose.xlu0.b32.cont [2/16] 0.0, 128
        %1430 = vxpose.xlu0.b32.cont [3/16] 0.0, 128
        %1431 = vxpose.xlu0.b32.cont [4/16] 0.0, 128
        %1432 = vxpose.xlu0.b32.cont [5/16] 0.0, 128
        %1433 = vxpose.xlu0.b32.cont [6/16] 0.0, 128
        %1434 = vxpose.xlu0.b32.cont [7/16] 0.0, 128
        %1435 = vxpose.xlu0.b32.cont [8/16] 0.0, 128
        %1436 = vxpose.xlu0.b32.cont [9/16] 0.0, 128
        %1437 = vxpose.xlu0.b32.cont [10/16] 0.0, 128
        %1438 = vxpose.xlu0.b32.cont [11/16] 0.0, 128
        %1439 = vxpose.xlu0.b32.cont [12/16] 0.0, 128
        %1440 = vxpose.xlu0.b32.cont [13/16] 0.0, 128
        %1441 = vxpose.xlu0.b32.cont [14/16] 0.0, 128
        %1442 = vxpose.xlu0.b32.cont [15/16] 0.0, 128
        %1443 = vxpose.xlu0.b32.end [16/16] 0.0, 128
        %v1444 = vpop.trf.xlu0
        %v1445 = vpop.trf.xlu0
        %v1446 = vpop.trf.xlu0
        %v1447 = vpop.trf.xlu0
        %v1448 = vpop.trf.xlu0
        %v1449 = vpop.trf.xlu0
        %v1450 = vpop.trf.xlu0
        %v1451 = vpop.trf.xlu0
        %v1452 = vpop.trf.xlu0
        %v1453 = vpop.trf.xlu0
        %v1454 = vpop.trf.xlu0
        %v1455 = vpop.trf.xlu0
        %v1456 = vpop.trf.xlu0
        %v1457 = vpop.trf.xlu0
        %v1458 = vpop.trf.xlu0
        %v1459 = vpop.trf.xlu0
        %1460 = vxpose.xlu0.b32.start [1/16] %v1235, 128
        %1461 = vxpose.xlu0.b32.cont [2/16] 0.0, 128
        %1462 = vxpose.xlu0.b32.cont [3/16] 0.0, 128
        %1463 = vxpose.xlu0.b32.cont [4/16] 0.0, 128
        %1464 = vxpose.xlu0.b32.cont [5/16] 0.0, 128
        %1465 = vxpose.xlu0.b32.cont [6/16] 0.0, 128
        %1466 = vxpose.xlu0.b32.cont [7/16] 0.0, 128
        %1467 = vxpose.xlu0.b32.cont [8/16] 0.0, 128
        %1468 = vxpose.xlu0.b32.cont [9/16] 0.0, 128
        %1469 = vxpose.xlu0.b32.cont [10/16] 0.0, 128
        %1470 = vxpose.xlu0.b32.cont [11/16] 0.0, 128
        %1471 = vxpose.xlu0.b32.cont [12/16] 0.0, 128
        %1472 = vxpose.xlu0.b32.cont [13/16] 0.0, 128
        %1473 = vxpose.xlu0.b32.cont [14/16] 0.0, 128
        %1474 = vxpose.xlu0.b32.cont [15/16] 0.0, 128
        %1475 = vxpose.xlu0.b32.end [16/16] 0.0, 128
        %v1476 = vpop.trf.xlu0
        %v1477 = vpop.trf.xlu0
        %v1478 = vpop.trf.xlu0
        %v1479 = vpop.trf.xlu0
        %v1480 = vpop.trf.xlu0
        %v1481 = vpop.trf.xlu0
        %v1482 = vpop.trf.xlu0
        %v1483 = vpop.trf.xlu0
        %v1484 = vpop.trf.xlu0
        %v1485 = vpop.trf.xlu0
        %v1486 = vpop.trf.xlu0
        %v1487 = vpop.trf.xlu0
        %v1488 = vpop.trf.xlu0
        %v1489 = vpop.trf.xlu0
        %v1490 = vpop.trf.xlu0
        %v1491 = vpop.trf.xlu0
        %v1492 = vcombine.low %v1252, %v1316
        %v1494 = vunpack.c.l.s4 1983009808
        %v1495 = vunpack.c.0.s8 %v1494
        %v1496 = vlaneseq
        %v1497 = vshrl.u32 %v1496, 7
        %v1498 = vsub.s32 %v1495, %v1497
        %v1499 = vrot.slane %v1492, %v1498
        %v1500 = vcombine.low %v1284, %v1348
        %v1502 = vunpack.c.l.s4 1983009808
        %v1503 = vunpack.c.0.s8 %v1502
        %v1504 = vlaneseq
        %v1505 = vshrl.u32 %v1504, 7
        %v1506 = vsub.s32 %v1503, %v1505
        %v1507 = vrot.slane %v1500, %v1506
        %v1508 = vcombine.low %v1380, %v1444
        %v1510 = vunpack.c.l.s4 1983009808
        %v1511 = vunpack.c.0.s8 %v1510
        %v1512 = vlaneseq
        %v1513 = vshrl.u32 %v1512, 7
        %v1514 = vsub.s32 %v1511, %v1513
        %v1515 = vrot.slane %v1508, %v1514
        %v1516 = vcombine.low %v1412, %v1476
        %v1518 = vunpack.c.l.s4 1983009808
        %v1519 = vunpack.c.0.s8 %v1518
        %v1520 = vlaneseq
        %v1521 = vshrl.u32 %v1520, 7
        %v1522 = vsub.s32 %v1519, %v1521
        %v1523 = vrot.slane %v1516, %v1522
        %v1524 = vcombine.low %v1499, %v1507
        %v1525 = vcombine.high %v1499, %v1507
        %v1527 = vunpack.c.l.s4 1934713408
        %v1528 = vunpack.c.0.s8 %v1527
        %v1529 = vlaneseq
        %v1530 = vshrl.u32 %v1529, 7
        %v1531 = vsub.s32 %v1528, %v1530
        %v1532 = vrot.slane %v1524, %v1531
        %v1534 = vunpack.c.l.s4 1934713408
        %v1535 = vunpack.c.0.s8 %v1534
        %v1536 = vlaneseq
        %v1537 = vshrl.u32 %v1536, 7
        %v1538 = vsub.s32 %v1535, %v1537
        %v1539 = vrot.slane %v1525, %v1538
        %v1540 = vcombine.low %v1515, %v1523
        %v1541 = vcombine.high %v1515, %v1523
        %v1543 = vunpack.c.l.s4 1934713408
        %v1544 = vunpack.c.0.s8 %v1543
        %v1545 = vlaneseq
        %v1546 = vshrl.u32 %v1545, 7
        %v1547 = vsub.s32 %v1544, %v1546
        %v1548 = vrot.slane %v1540, %v1547
        %v1550 = vunpack.c.l.s4 1934713408
        %v1551 = vunpack.c.0.s8 %v1550
        %v1552 = vlaneseq
        %v1553 = vshrl.u32 %v1552, 7
        %v1554 = vsub.s32 %v1551, %v1553
        %v1555 = vrot.slane %v1541, %v1554
        %v1556 = vcombine.low %v1532, %v1548
        %v1557 = vcombine.high %v1532, %v1548
        %v1558 = vcombine.low %v1539, %v1555
        %v1559 = vcombine.high %v1539, %v1555
        %1560 = vrot.lane.b32.xlu0 %v615, 64
        %v1561 = vpop.permute.xlu0 %1560
        %1562 = vrot.lane.b32.xlu0 %v620, 64
        %v1563 = vpop.permute.xlu0 %1562
        %1564 = vrot.lane.b32.xlu0 %v623, 64
        %v1565 = vpop.permute.xlu0 %1564
        %1566 = vrot.lane.b32.xlu0 %v626, 64
        %v1567 = vpop.permute.xlu0 %1566
        %v1572 = vcombine.low %v1561, %v1565
        %v1573 = vcombine.high %v1561, %v1565
        %v1575 = vunpack.c.l.s4 1983009808
        %v1576 = vunpack.c.0.s8 %v1575
        %v1577 = vlaneseq
        %v1578 = vshrl.u32 %v1577, 7
        %v1579 = vsub.s32 %v1576, %v1578
        %v1580 = vrot.slane %v1572, %v1579
        %v1582 = vunpack.c.l.s4 1983009808
        %v1583 = vunpack.c.0.s8 %v1582
        %v1584 = vlaneseq
        %v1585 = vshrl.u32 %v1584, 7
        %v1586 = vsub.s32 %v1583, %v1585
        %v1587 = vrot.slane %v1573, %v1586
        %v1588 = vcombine.low %v1563, %v1567
        %v1589 = vcombine.high %v1563, %v1567
        %v1591 = vunpack.c.l.s4 1983009808
        %v1592 = vunpack.c.0.s8 %v1591
        %v1593 = vlaneseq
        %v1594 = vshrl.u32 %v1593, 7
        %v1595 = vsub.s32 %v1592, %v1594
        %v1596 = vrot.slane %v1588, %v1595
        %v1598 = vunpack.c.l.s4 1983009808
        %v1599 = vunpack.c.0.s8 %v1598
        %v1600 = vlaneseq
        %v1601 = vshrl.u32 %v1600, 7
        %v1602 = vsub.s32 %v1599, %v1601
        %v1603 = vrot.slane %v1589, %v1602
        %v1604 = vcombine.low %v1580, %v1596
        %v1605 = vcombine.high %v1580, %v1596
        %v1607 = vunpack.c.l.s4 1934713408
        %v1608 = vunpack.c.0.s8 %v1607
        %v1609 = vlaneseq
        %v1610 = vshrl.u32 %v1609, 7
        %v1611 = vsub.s32 %v1608, %v1610
        %v1612 = vrot.slane %v1604, %v1611
        %v1614 = vunpack.c.l.s4 1934713408
        %v1615 = vunpack.c.0.s8 %v1614
        %v1616 = vlaneseq
        %v1617 = vshrl.u32 %v1616, 7
        %v1618 = vsub.s32 %v1615, %v1617
        %v1619 = vrot.slane %v1605, %v1618
        %v1620 = vcombine.low %v1587, %v1603
        %v1621 = vcombine.high %v1587, %v1603
        %v1623 = vunpack.c.l.s4 1934713408
        %v1624 = vunpack.c.0.s8 %v1623
        %v1625 = vlaneseq
        %v1626 = vshrl.u32 %v1625, 7
        %v1627 = vsub.s32 %v1624, %v1626
        %v1628 = vrot.slane %v1620, %v1627
        %v1630 = vunpack.c.l.s4 1934713408
        %v1631 = vunpack.c.0.s8 %v1630
        %v1632 = vlaneseq
        %v1633 = vshrl.u32 %v1632, 7
        %v1634 = vsub.s32 %v1631, %v1633
        %v1635 = vrot.slane %v1621, %v1634
        %v1636 = vcombine.high %v1612, 0.0
        %v1637 = vcombine.high %v1619, 0.0
        %v1638 = vcombine.high %v1628, 0.0
        %v1639 = vcombine.high %v1635, 0.0
        %v1640 = vcombine.low %v1612, %v1619
        %v1642 = vunpack.c.l.s4 1983009808
        %v1643 = vunpack.c.0.s8 %v1642
        %v1644 = vlaneseq
        %v1645 = vshrl.u32 %v1644, 7
        %v1646 = vsub.s32 %v1643, %v1645
        %v1647 = vrot.slane %v1640, %v1646
        %v1648 = vcombine.low %v1636, %v1637
        %v1650 = vunpack.c.l.s4 1983009808
        %v1651 = vunpack.c.0.s8 %v1650
        %v1652 = vlaneseq
        %v1653 = vshrl.u32 %v1652, 7
        %v1654 = vsub.s32 %v1651, %v1653
        %v1655 = vrot.slane %v1648, %v1654
        %v1656 = vcombine.low %v1628, %v1635
        %v1658 = vunpack.c.l.s4 1983009808
        %v1659 = vunpack.c.0.s8 %v1658
        %v1660 = vlaneseq
        %v1661 = vshrl.u32 %v1660, 7
        %v1662 = vsub.s32 %v1659, %v1661
        %v1663 = vrot.slane %v1656, %v1662
        %v1664 = vcombine.low %v1638, %v1639
        %v1666 = vunpack.c.l.s4 1983009808
        %v1667 = vunpack.c.0.s8 %v1666
        %v1668 = vlaneseq
        %v1669 = vshrl.u32 %v1668, 7
        %v1670 = vsub.s32 %v1667, %v1669
        %v1671 = vrot.slane %v1664, %v1670
        %v1672 = vcombine.low %v1647, %v1655
        %v1673 = vcombine.high %v1647, %v1655
        %v1675 = vunpack.c.l.s4 1934713408
        %v1676 = vunpack.c.0.s8 %v1675
        %v1677 = vlaneseq
        %v1678 = vshrl.u32 %v1677, 7
        %v1679 = vsub.s32 %v1676, %v1678
        %v1680 = vrot.slane %v1672, %v1679
        %v1682 = vunpack.c.l.s4 1934713408
        %v1683 = vunpack.c.0.s8 %v1682
        %v1684 = vlaneseq
        %v1685 = vshrl.u32 %v1684, 7
        %v1686 = vsub.s32 %v1683, %v1685
        %v1687 = vrot.slane %v1673, %v1686
        %v1688 = vcombine.low %v1663, %v1671
        %v1689 = vcombine.high %v1663, %v1671
        %v1691 = vunpack.c.l.s4 1934713408
        %v1692 = vunpack.c.0.s8 %v1691
        %v1693 = vlaneseq
        %v1694 = vshrl.u32 %v1693, 7
        %v1695 = vsub.s32 %v1692, %v1694
        %v1696 = vrot.slane %v1688, %v1695
        %v1698 = vunpack.c.l.s4 1934713408
        %v1699 = vunpack.c.0.s8 %v1698
        %v1700 = vlaneseq
        %v1701 = vshrl.u32 %v1700, 7
        %v1702 = vsub.s32 %v1699, %v1701
        %v1703 = vrot.slane %v1689, %v1702
        %v1704 = vcombine.low %v1680, %v1696
        %v1705 = vcombine.high %v1680, %v1696
        %v1706 = vcombine.low %v1687, %v1703
        %v1707 = vcombine.high %v1687, %v1703
        %vm1708 = vcmask 64512
        %v1710 = vsel %vm1708, %v760, 0
        %1712 = vmatprep.subr.mxu0 0.0
        %1713 = vmatpush1.msra.mxu0 %v1556
        %1714 = vmatprep.subr.mxu0 0.0
        %1715 = vmatpush1.msra.mxu0 0.0
        %1716 = vmatprep.subr.mxu0 0.0
        %1717 = vmatpush1.msra.mxu0 0.0
        %1718 = vmatprep.subr.mxu0 0.0
        %1719 = vmatpush1.msra.mxu0 0.0
        %1720 = vmatprep.subr.mxu0 0.0
        %1721 = vmatpush1.msra.mxu0 0.0
        %1722 = vmatprep.subr.mxu0 0.0
        %1723 = vmatpush1.msra.mxu0 0.0
        %1724 = vmatprep.subr.mxu0 0.0
        %1725 = vmatpush1.msra.mxu0 0.0
        %1726 = vmatprep.subr.mxu0 0.0
        %1727 = vmatpush1.msra.mxu0 0.0
        %1728 = vmatprep.subr.mxu0 0.0
        %1729 = vmatpush1.msra.mxu0 0.0
        %1730 = vmatprep.subr.mxu0 0.0
        %1731 = vmatpush1.msra.mxu0 0.0
        %1732 = vmatprep.subr.mxu0 0.0
        %1733 = vmatpush1.msra.mxu0 0.0
        %1734 = vmatprep.subr.mxu0 0.0
        %1735 = vmatpush1.msra.mxu0 0.0
        %1736 = vmatprep.subr.mxu0 0.0
        %1737 = vmatpush1.msra.mxu0 0.0
        %1738 = vmatprep.subr.mxu0 0.0
        %1739 = vmatpush1.msra.mxu0 0.0
        %1740 = vmatprep.subr.mxu0 0.0
        %1741 = vmatpush1.msra.mxu0 0.0
        %1742 = vmatprep.subr.mxu0 0.0
        %1743 = vmatpush1.msra.mxu0 0.0
        %1744 = vmatprep.subr.mxu0 0.0
        %1745 = vmatpush1.msra.mxu0 0.0
        %1746 = vmatprep.subr.mxu0 0.0
        %1747 = vmatpush1.msra.mxu0 0.0
        %1748 = vmatprep.subr.mxu0 0.0
        %1749 = vmatpush1.msra.mxu0 0.0
        %1750 = vmatprep.subr.mxu0 0.0
        %1751 = vmatpush1.msra.mxu0 0.0
        %1752 = vmatprep.subr.mxu0 0.0
        %1753 = vmatpush1.msra.mxu0 0.0
        %1754 = vmatprep.subr.mxu0 0.0
        %1755 = vmatpush1.msra.mxu0 0.0
        %1756 = vmatprep.subr.mxu0 0.0
        %1757 = vmatpush1.msra.mxu0 0.0
        %1758 = vmatprep.subr.mxu0 0.0
        %1759 = vmatpush1.msra.mxu0 0.0
        %1760 = vmatprep.subr.mxu0 0.0
        %1761 = vmatpush1.msra.mxu0 0.0
        %1762 = vmatprep.subr.mxu0 0.0
        %1763 = vmatpush1.msra.mxu0 0.0
        %1764 = vmatprep.subr.mxu0 0.0
        %1765 = vmatpush1.msra.mxu0 0.0
        %1766 = vmatprep.subr.mxu0 0.0
        %1767 = vmatpush1.msra.mxu0 0.0
        %1768 = vmatprep.subr.mxu0 0.0
        %1769 = vmatpush1.msra.mxu0 0.0
        %1770 = vmatprep.subr.mxu0 0.0
        %1771 = vmatpush1.msra.mxu0 0.0
        %1772 = vmatprep.subr.mxu0 0.0
        %1773 = vmatpush1.msra.mxu0 0.0
        %1774 = vmatprep.subr.mxu0 0.0
        %1775 = vmatpush1.msra.mxu0 0.0
        %1776 = vmatprep.mubr.f32.mxu0 0.0
        %1777 = vmatmul.mubr.f32.gmra.mrb[0].mxu0 %v1710
        %v1778 = vpop.f32.mrb[0].mxu0
        %v1779 = vadd.f32 0.0, %v1778
        %v1780 = vpop.f32.mrb[0].mxu0
        %1781 = vdwg.mxu0
        %v1783 = vsel %vm1708, %v761, 0
        %1785 = vmatprep.subr.mxu0 0.0
        %1786 = vmatpush1.msra.mxu0 %v1557
        %1787 = vmatprep.subr.mxu0 0.0
        %1788 = vmatpush1.msra.mxu0 0.0
        %1789 = vmatprep.subr.mxu0 0.0
        %1790 = vmatpush1.msra.mxu0 0.0
        %1791 = vmatprep.subr.mxu0 0.0
        %1792 = vmatpush1.msra.mxu0 0.0
        %1793 = vmatprep.subr.mxu0 0.0
        %1794 = vmatpush1.msra.mxu0 0.0
        %1795 = vmatprep.subr.mxu0 0.0
        %1796 = vmatpush1.msra.mxu0 0.0
        %1797 = vmatprep.subr.mxu0 0.0
        %1798 = vmatpush1.msra.mxu0 0.0
        %1799 = vmatprep.subr.mxu0 0.0
        %1800 = vmatpush1.msra.mxu0 0.0
        %1801 = vmatprep.subr.mxu0 0.0
        %1802 = vmatpush1.msra.mxu0 0.0
        %1803 = vmatprep.subr.mxu0 0.0
        %1804 = vmatpush1.msra.mxu0 0.0
        %1805 = vmatprep.subr.mxu0 0.0
        %1806 = vmatpush1.msra.mxu0 0.0
        %1807 = vmatprep.subr.mxu0 0.0
        %1808 = vmatpush1.msra.mxu0 0.0
        %1809 = vmatprep.subr.mxu0 0.0
        %1810 = vmatpush1.msra.mxu0 0.0
        %1811 = vmatprep.subr.mxu0 0.0
        %1812 = vmatpush1.msra.mxu0 0.0
        %1813 = vmatprep.subr.mxu0 0.0
        %1814 = vmatpush1.msra.mxu0 0.0
        %1815 = vmatprep.subr.mxu0 0.0
        %1816 = vmatpush1.msra.mxu0 0.0
        %1817 = vmatprep.subr.mxu0 0.0
        %1818 = vmatpush1.msra.mxu0 0.0
        %1819 = vmatprep.subr.mxu0 0.0
        %1820 = vmatpush1.msra.mxu0 0.0
        %1821 = vmatprep.subr.mxu0 0.0
        %1822 = vmatpush1.msra.mxu0 0.0
        %1823 = vmatprep.subr.mxu0 0.0
        %1824 = vmatpush1.msra.mxu0 0.0
        %1825 = vmatprep.subr.mxu0 0.0
        %1826 = vmatpush1.msra.mxu0 0.0
        %1827 = vmatprep.subr.mxu0 0.0
        %1828 = vmatpush1.msra.mxu0 0.0
        %1829 = vmatprep.subr.mxu0 0.0
        %1830 = vmatpush1.msra.mxu0 0.0
        %1831 = vmatprep.subr.mxu0 0.0
        %1832 = vmatpush1.msra.mxu0 0.0
        %1833 = vmatprep.subr.mxu0 0.0
        %1834 = vmatpush1.msra.mxu0 0.0
        %1835 = vmatprep.subr.mxu0 0.0
        %1836 = vmatpush1.msra.mxu0 0.0
        %1837 = vmatprep.subr.mxu0 0.0
        %1838 = vmatpush1.msra.mxu0 0.0
        %1839 = vmatprep.subr.mxu0 0.0
        %1840 = vmatpush1.msra.mxu0 0.0
        %1841 = vmatprep.subr.mxu0 0.0
        %1842 = vmatpush1.msra.mxu0 0.0
        %1843 = vmatprep.subr.mxu0 0.0
        %1844 = vmatpush1.msra.mxu0 0.0
        %1845 = vmatprep.subr.mxu0 0.0
        %1846 = vmatpush1.msra.mxu0 0.0
        %1847 = vmatprep.subr.mxu0 0.0
        %1848 = vmatpush1.msra.mxu0 0.0
        %1849 = vmatprep.mubr.f32.mxu0 0.0
        %1850 = vmatmul.mubr.f32.gmra.mrb[0].mxu0 %v1783
        %v1851 = vpop.f32.mrb[0].mxu0
        %v1852 = vadd.f32 0.0, %v1851
        %v1853 = vpop.f32.mrb[0].mxu0
        %1854 = vdwg.mxu0
        %v1856 = vsel %vm1708, %v762, 0
        %1858 = vmatprep.subr.mxu0 0.0
        %1859 = vmatpush1.msra.mxu0 %v1558
        %1860 = vmatprep.subr.mxu0 0.0
        %1861 = vmatpush1.msra.mxu0 0.0
        %1862 = vmatprep.subr.mxu0 0.0
        %1863 = vmatpush1.msra.mxu0 0.0
        %1864 = vmatprep.subr.mxu0 0.0
        %1865 = vmatpush1.msra.mxu0 0.0
        %1866 = vmatprep.subr.mxu0 0.0
        %1867 = vmatpush1.msra.mxu0 0.0
        %1868 = vmatprep.subr.mxu0 0.0
        %1869 = vmatpush1.msra.mxu0 0.0
        %1870 = vmatprep.subr.mxu0 0.0
        %1871 = vmatpush1.msra.mxu0 0.0
        %1872 = vmatprep.subr.mxu0 0.0
        %1873 = vmatpush1.msra.mxu0 0.0
        %1874 = vmatprep.subr.mxu0 0.0
        %1875 = vmatpush1.msra.mxu0 0.0
        %1876 = vmatprep.subr.mxu0 0.0
        %1877 = vmatpush1.msra.mxu0 0.0
        %1878 = vmatprep.subr.mxu0 0.0
        %1879 = vmatpush1.msra.mxu0 0.0
        %1880 = vmatprep.subr.mxu0 0.0
        %1881 = vmatpush1.msra.mxu0 0.0
        %1882 = vmatprep.subr.mxu0 0.0
        %1883 = vmatpush1.msra.mxu0 0.0
        %1884 = vmatprep.subr.mxu0 0.0
        %1885 = vmatpush1.msra.mxu0 0.0
        %1886 = vmatprep.subr.mxu0 0.0
        %1887 = vmatpush1.msra.mxu0 0.0
        %1888 = vmatprep.subr.mxu0 0.0
        %1889 = vmatpush1.msra.mxu0 0.0
        %1890 = vmatprep.subr.mxu0 0.0
        %1891 = vmatpush1.msra.mxu0 0.0
        %1892 = vmatprep.subr.mxu0 0.0
        %1893 = vmatpush1.msra.mxu0 0.0
        %1894 = vmatprep.subr.mxu0 0.0
        %1895 = vmatpush1.msra.mxu0 0.0
        %1896 = vmatprep.subr.mxu0 0.0
        %1897 = vmatpush1.msra.mxu0 0.0
        %1898 = vmatprep.subr.mxu0 0.0
        %1899 = vmatpush1.msra.mxu0 0.0
        %1900 = vmatprep.subr.mxu0 0.0
        %1901 = vmatpush1.msra.mxu0 0.0
        %1902 = vmatprep.subr.mxu0 0.0
        %1903 = vmatpush1.msra.mxu0 0.0
        %1904 = vmatprep.subr.mxu0 0.0
        %1905 = vmatpush1.msra.mxu0 0.0
        %1906 = vmatprep.subr.mxu0 0.0
        %1907 = vmatpush1.msra.mxu0 0.0
        %1908 = vmatprep.subr.mxu0 0.0
        %1909 = vmatpush1.msra.mxu0 0.0
        %1910 = vmatprep.subr.mxu0 0.0
        %1911 = vmatpush1.msra.mxu0 0.0
        %1912 = vmatprep.subr.mxu0 0.0
        %1913 = vmatpush1.msra.mxu0 0.0
        %1914 = vmatprep.subr.mxu0 0.0
        %1915 = vmatpush1.msra.mxu0 0.0
        %1916 = vmatprep.subr.mxu0 0.0
        %1917 = vmatpush1.msra.mxu0 0.0
        %1918 = vmatprep.subr.mxu0 0.0
        %1919 = vmatpush1.msra.mxu0 0.0
        %1920 = vmatprep.subr.mxu0 0.0
        %1921 = vmatpush1.msra.mxu0 0.0
        %1922 = vmatprep.mubr.f32.mxu0 0.0
        %1923 = vmatmul.mubr.f32.gmra.mrb[0].mxu0 %v1856
        %v1924 = vpop.f32.mrb[0].mxu0
        %v1925 = vadd.f32 0.0, %v1924
        %v1926 = vpop.f32.mrb[0].mxu0
        %1927 = vdwg.mxu0
        %v1929 = vsel %vm1708, %v763, 0
        %1931 = vmatprep.subr.mxu0 0.0
        %1932 = vmatpush1.msra.mxu0 %v1559
        %1933 = vmatprep.subr.mxu0 0.0
        %1934 = vmatpush1.msra.mxu0 0.0
        %1935 = vmatprep.subr.mxu0 0.0
        %1936 = vmatpush1.msra.mxu0 0.0
        %1937 = vmatprep.subr.mxu0 0.0
        %1938 = vmatpush1.msra.mxu0 0.0
        %1939 = vmatprep.subr.mxu0 0.0
        %1940 = vmatpush1.msra.mxu0 0.0
        %1941 = vmatprep.subr.mxu0 0.0
        %1942 = vmatpush1.msra.mxu0 0.0
        %1943 = vmatprep.subr.mxu0 0.0
        %1944 = vmatpush1.msra.mxu0 0.0
        %1945 = vmatprep.subr.mxu0 0.0
        %1946 = vmatpush1.msra.mxu0 0.0
        %1947 = vmatprep.subr.mxu0 0.0
        %1948 = vmatpush1.msra.mxu0 0.0
        %1949 = vmatprep.subr.mxu0 0.0
        %1950 = vmatpush1.msra.mxu0 0.0
        %1951 = vmatprep.subr.mxu0 0.0
        %1952 = vmatpush1.msra.mxu0 0.0
        %1953 = vmatprep.subr.mxu0 0.0
        %1954 = vmatpush1.msra.mxu0 0.0
        %1955 = vmatprep.subr.mxu0 0.0
        %1956 = vmatpush1.msra.mxu0 0.0
        %1957 = vmatprep.subr.mxu0 0.0
        %1958 = vmatpush1.msra.mxu0 0.0
        %1959 = vmatprep.subr.mxu0 0.0
        %1960 = vmatpush1.msra.mxu0 0.0
        %1961 = vmatprep.subr.mxu0 0.0
        %1962 = vmatpush1.msra.mxu0 0.0
        %1963 = vmatprep.subr.mxu0 0.0
        %1964 = vmatpush1.msra.mxu0 0.0
        %1965 = vmatprep.subr.mxu0 0.0
        %1966 = vmatpush1.msra.mxu0 0.0
        %1967 = vmatprep.subr.mxu0 0.0
        %1968 = vmatpush1.msra.mxu0 0.0
        %1969 = vmatprep.subr.mxu0 0.0
        %1970 = vmatpush1.msra.mxu0 0.0
        %1971 = vmatprep.subr.mxu0 0.0
        %1972 = vmatpush1.msra.mxu0 0.0
        %1973 = vmatprep.subr.mxu0 0.0
        %1974 = vmatpush1.msra.mxu0 0.0
        %1975 = vmatprep.subr.mxu0 0.0
        %1976 = vmatpush1.msra.mxu0 0.0
        %1977 = vmatprep.subr.mxu0 0.0
        %1978 = vmatpush1.msra.mxu0 0.0
        %1979 = vmatprep.subr.mxu0 0.0
        %1980 = vmatpush1.msra.mxu0 0.0
        %1981 = vmatprep.subr.mxu0 0.0
        %1982 = vmatpush1.msra.mxu0 0.0
        %1983 = vmatprep.subr.mxu0 0.0
        %1984 = vmatpush1.msra.mxu0 0.0
        %1985 = vmatprep.subr.mxu0 0.0
        %1986 = vmatpush1.msra.mxu0 0.0
        %1987 = vmatprep.subr.mxu0 0.0
        %1988 = vmatpush1.msra.mxu0 0.0
        %1989 = vmatprep.subr.mxu0 0.0
        %1990 = vmatpush1.msra.mxu0 0.0
        %1991 = vmatprep.subr.mxu0 0.0
        %1992 = vmatpush1.msra.mxu0 0.0
        %1993 = vmatprep.subr.mxu0 0.0
        %1994 = vmatpush1.msra.mxu0 0.0
        %1995 = vmatprep.mubr.f32.mxu0 0.0
        %1996 = vmatmul.mubr.f32.gmra.mrb[0].mxu0 %v1929
        %v1997 = vpop.f32.mrb[0].mxu0
        %v1998 = vadd.f32 0.0, %v1997
        %v1999 = vpop.f32.mrb[0].mxu0
        %2000 = vdwg.mxu0
        %2001 = vst.msk [vmem:[%s531] sm:$0xff] %vm1708, %v1779
        %2002 = vst.msk [vmem:[%s531 + $0x8] sm:$0xff] %vm1708, %v1852
        %2003 = vst.msk [vmem:[%s531 + $0x10] sm:$0xff] %vm1708, %v1925
        %2004 = vst.msk [vmem:[%s531 + $0x18] sm:$0xff] %vm1708, %v1998
        %v2005 = vsel %vm1708, %v1779, -inf
        %2006 = vmax.xlane.f32.xlu0 %v2005
        %v2007 = vpop.xlane.xlu0 %2006
        %v2008 = vsel %vm1708, %v1852, -inf
        %2009 = vmax.xlane.f32.xlu0 %v2008
        %v2010 = vpop.xlane.xlu0 %2009
        %v2011 = vsel %vm1708, %v1925, -inf
        %2012 = vmax.xlane.f32.xlu0 %v2011
        %v2013 = vpop.xlane.xlu0 %2012
        %v2014 = vsel %vm1708, %v1998, -inf
        %2015 = vmax.xlane.f32.xlu0 %v2014
        %v2016 = vpop.xlane.xlu0 %2015
        %v2017 = vsub.f32 %v1779, %v2007
        %v2018 = vsub.f32 %v1852, %v2010
        %v2019 = vsub.f32 %v1925, %v2013
        %v2020 = vsub.f32 %v1998, %v2016
        %v2021 = vmul.f32 %v2017, 1.442695
        %v2022 = vpow.pop %v2021
        %v2023 = vmul.f32 %v2018, 1.442695
        %v2024 = vpow.pop %v2023
        %v2025 = vmul.f32 %v2019, 1.442695
        %v2026 = vpow.pop %v2025
        %v2027 = vmul.f32 %v2020, 1.442695
        %v2028 = vpow.pop %v2027
        %v2029 = vsel %vm1708, %v2022, 0.0
        %2030 = vadd.xlane.f32.xlu0 %v2029
        %v2031 = vpop.xlane.xlu0 %2030
        %v2032 = vsel %vm1708, %v2024, 0.0
        %2033 = vadd.xlane.f32.xlu0 %v2032
        %v2034 = vpop.xlane.xlu0 %2033
        %v2035 = vsel %vm1708, %v2026, 0.0
        %2036 = vadd.xlane.f32.xlu0 %v2035
        %v2037 = vpop.xlane.xlu0 %2036
        %v2038 = vsel %vm1708, %v2028, 0.0
        %2039 = vadd.xlane.f32.xlu0 %v2038
        %v2040 = vpop.xlane.xlu0 %2039
        %v2041 = vrcp.pop %v2031
        %v2042 = vrcp.pop %v2034
        %v2043 = vrcp.pop %v2037
        %v2044 = vrcp.pop %v2040
        %v2045 = vmul.f32 %v2022, %v2041
        %v2046 = vmul.f32 %v2024, %v2042
        %v2047 = vmul.f32 %v2026, %v2043
        %v2048 = vmul.f32 %v2028, %v2044
        %v2050 = vsel %vm1708, %v2045, 0
        %2052 = vmatprep.subr.mxu0 0.0
        %2053 = vmatpush1.msra.mxu0 %v1704
        %2054 = vmatprep.subr.mxu0 0.0
        %2055 = vmatpush1.msra.mxu0 0.0
        %2056 = vmatprep.subr.mxu0 0.0
        %2057 = vmatpush1.msra.mxu0 0.0
        %2058 = vmatprep.subr.mxu0 0.0
        %2059 = vmatpush1.msra.mxu0 0.0
        %2060 = vmatprep.subr.mxu0 0.0
        %2061 = vmatpush1.msra.mxu0 0.0
        %2062 = vmatprep.subr.mxu0 0.0
        %2063 = vmatpush1.msra.mxu0 0.0
        %2064 = vmatprep.subr.mxu0 0.0
        %2065 = vmatpush1.msra.mxu0 0.0
        %2066 = vmatprep.subr.mxu0 0.0
        %2067 = vmatpush1.msra.mxu0 0.0
        %2068 = vmatprep.subr.mxu0 0.0
        %2069 = vmatpush1.msra.mxu0 0.0
        %2070 = vmatprep.subr.mxu0 0.0
        %2071 = vmatpush1.msra.mxu0 0.0
        %2072 = vmatprep.subr.mxu0 0.0
        %2073 = vmatpush1.msra.mxu0 0.0
        %2074 = vmatprep.subr.mxu0 0.0
        %2075 = vmatpush1.msra.mxu0 0.0
        %2076 = vmatprep.subr.mxu0 0.0
        %2077 = vmatpush1.msra.mxu0 0.0
        %2078 = vmatprep.subr.mxu0 0.0
        %2079 = vmatpush1.msra.mxu0 0.0
        %2080 = vmatprep.subr.mxu0 0.0
        %2081 = vmatpush1.msra.mxu0 0.0
        %2082 = vmatprep.subr.mxu0 0.0
        %2083 = vmatpush1.msra.mxu0 0.0
        %2084 = vmatprep.subr.mxu0 0.0
        %2085 = vmatpush1.msra.mxu0 0.0
        %2086 = vmatprep.subr.mxu0 0.0
        %2087 = vmatpush1.msra.mxu0 0.0
        %2088 = vmatprep.subr.mxu0 0.0
        %2089 = vmatpush1.msra.mxu0 0.0
        %2090 = vmatprep.subr.mxu0 0.0
        %2091 = vmatpush1.msra.mxu0 0.0
        %2092 = vmatprep.subr.mxu0 0.0
        %2093 = vmatpush1.msra.mxu0 0.0
        %2094 = vmatprep.subr.mxu0 0.0
        %2095 = vmatpush1.msra.mxu0 0.0
        %2096 = vmatprep.subr.mxu0 0.0
        %2097 = vmatpush1.msra.mxu0 0.0
        %2098 = vmatprep.subr.mxu0 0.0
        %2099 = vmatpush1.msra.mxu0 0.0
        %2100 = vmatprep.subr.mxu0 0.0
        %2101 = vmatpush1.msra.mxu0 0.0
        %2102 = vmatprep.subr.mxu0 0.0
        %2103 = vmatpush1.msra.mxu0 0.0
        %2104 = vmatprep.subr.mxu0 0.0
        %2105 = vmatpush1.msra.mxu0 0.0
        %2106 = vmatprep.subr.mxu0 0.0
        %2107 = vmatpush1.msra.mxu0 0.0
        %2108 = vmatprep.subr.mxu0 0.0
        %2109 = vmatpush1.msra.mxu0 0.0
        %2110 = vmatprep.subr.mxu0 0.0
        %2111 = vmatpush1.msra.mxu0 0.0
        %2112 = vmatprep.subr.mxu0 0.0
        %2113 = vmatpush1.msra.mxu0 0.0
        %2114 = vmatprep.subr.mxu0 0.0
        %2115 = vmatpush1.msra.mxu0 0.0
        %2116 = vmatprep.mubr.f32.mxu0 0.0
        %2117 = vmatmul.mubr.f32.gmra.mrb[0].mxu0 %v2050
        %v2118 = vpop.f32.mrb[0].mxu0
        %v2119 = vadd.f32 0.0, %v2118
        %v2120 = vpop.f32.mrb[0].mxu0
        %2121 = vdwg.mxu0
        %v2123 = vsel %vm1708, %v2046, 0
        %2125 = vmatprep.subr.mxu0 0.0
        %2126 = vmatpush1.msra.mxu0 %v1705
        %2127 = vmatprep.subr.mxu0 0.0
        %2128 = vmatpush1.msra.mxu0 0.0
        %2129 = vmatprep.subr.mxu0 0.0
        %2130 = vmatpush1.msra.mxu0 0.0
        %2131 = vmatprep.subr.mxu0 0.0
        %2132 = vmatpush1.msra.mxu0 0.0
        %2133 = vmatprep.subr.mxu0 0.0
        %2134 = vmatpush1.msra.mxu0 0.0
        %2135 = vmatprep.subr.mxu0 0.0
        %2136 = vmatpush1.msra.mxu0 0.0
        %2137 = vmatprep.subr.mxu0 0.0
        %2138 = vmatpush1.msra.mxu0 0.0
        %2139 = vmatprep.subr.mxu0 0.0
        %2140 = vmatpush1.msra.mxu0 0.0
        %2141 = vmatprep.subr.mxu0 0.0
        %2142 = vmatpush1.msra.mxu0 0.0
        %2143 = vmatprep.subr.mxu0 0.0
        %2144 = vmatpush1.msra.mxu0 0.0
        %2145 = vmatprep.subr.mxu0 0.0
        %2146 = vmatpush1.msra.mxu0 0.0
        %2147 = vmatprep.subr.mxu0 0.0
        %2148 = vmatpush1.msra.mxu0 0.0
        %2149 = vmatprep.subr.mxu0 0.0
        %2150 = vmatpush1.msra.mxu0 0.0
        %2151 = vmatprep.subr.mxu0 0.0
        %2152 = vmatpush1.msra.mxu0 0.0
        %2153 = vmatprep.subr.mxu0 0.0
        %2154 = vmatpush1.msra.mxu0 0.0
        %2155 = vmatprep.subr.mxu0 0.0
        %2156 = vmatpush1.msra.mxu0 0.0
        %2157 = vmatprep.subr.mxu0 0.0
        %2158 = vmatpush1.msra.mxu0 0.0
        %2159 = vmatprep.subr.mxu0 0.0
        %2160 = vmatpush1.msra.mxu0 0.0
        %2161 = vmatprep.subr.mxu0 0.0
        %2162 = vmatpush1.msra.mxu0 0.0
        %2163 = vmatprep.subr.mxu0 0.0
        %2164 = vmatpush1.msra.mxu0 0.0
        %2165 = vmatprep.subr.mxu0 0.0
        %2166 = vmatpush1.msra.mxu0 0.0
        %2167 = vmatprep.subr.mxu0 0.0
        %2168 = vmatpush1.msra.mxu0 0.0
        %2169 = vmatprep.subr.mxu0 0.0
        %2170 = vmatpush1.msra.mxu0 0.0
        %2171 = vmatprep.subr.mxu0 0.0
        %2172 = vmatpush1.msra.mxu0 0.0
        %2173 = vmatprep.subr.mxu0 0.0
        %2174 = vmatpush1.msra.mxu0 0.0
        %2175 = vmatprep.subr.mxu0 0.0
        %2176 = vmatpush1.msra.mxu0 0.0
        %2177 = vmatprep.subr.mxu0 0.0
        %2178 = vmatpush1.msra.mxu0 0.0
        %2179 = vmatprep.subr.mxu0 0.0
        %2180 = vmatpush1.msra.mxu0 0.0
        %2181 = vmatprep.subr.mxu0 0.0
        %2182 = vmatpush1.msra.mxu0 0.0
        %2183 = vmatprep.subr.mxu0 0.0
        %2184 = vmatpush1.msra.mxu0 0.0
        %2185 = vmatprep.subr.mxu0 0.0
        %2186 = vmatpush1.msra.mxu0 0.0
        %2187 = vmatprep.subr.mxu0 0.0
        %2188 = vmatpush1.msra.mxu0 0.0
        %2189 = vmatprep.mubr.f32.mxu0 0.0
        %2190 = vmatmul.mubr.f32.gmra.mrb[0].mxu0 %v2123
        %v2191 = vpop.f32.mrb[0].mxu0
        %v2192 = vadd.f32 0.0, %v2191
        %v2193 = vpop.f32.mrb[0].mxu0
        %2194 = vdwg.mxu0
        %v2196 = vsel %vm1708, %v2047, 0
        %2198 = vmatprep.subr.mxu0 0.0
        %2199 = vmatpush1.msra.mxu0 %v1706
        %2200 = vmatprep.subr.mxu0 0.0
        %2201 = vmatpush1.msra.mxu0 0.0
        %2202 = vmatprep.subr.mxu0 0.0
        %2203 = vmatpush1.msra.mxu0 0.0
        %2204 = vmatprep.subr.mxu0 0.0
        %2205 = vmatpush1.msra.mxu0 0.0
        %2206 = vmatprep.subr.mxu0 0.0
        %2207 = vmatpush1.msra.mxu0 0.0
        %2208 = vmatprep.subr.mxu0 0.0
        %2209 = vmatpush1.msra.mxu0 0.0
        %2210 = vmatprep.subr.mxu0 0.0
        %2211 = vmatpush1.msra.mxu0 0.0
        %2212 = vmatprep.subr.mxu0 0.0
        %2213 = vmatpush1.msra.mxu0 0.0
        %2214 = vmatprep.subr.mxu0 0.0
        %2215 = vmatpush1.msra.mxu0 0.0
        %2216 = vmatprep.subr.mxu0 0.0
        %2217 = vmatpush1.msra.mxu0 0.0
        %2218 = vmatprep.subr.mxu0 0.0
        %2219 = vmatpush1.msra.mxu0 0.0
        %2220 = vmatprep.subr.mxu0 0.0
        %2221 = vmatpush1.msra.mxu0 0.0
        %2222 = vmatprep.subr.mxu0 0.0
        %2223 = vmatpush1.msra.mxu0 0.0
        %2224 = vmatprep.subr.mxu0 0.0
        %2225 = vmatpush1.msra.mxu0 0.0
        %2226 = vmatprep.subr.mxu0 0.0
        %2227 = vmatpush1.msra.mxu0 0.0
        %2228 = vmatprep.subr.mxu0 0.0
        %2229 = vmatpush1.msra.mxu0 0.0
        %2230 = vmatprep.subr.mxu0 0.0
        %2231 = vmatpush1.msra.mxu0 0.0
        %2232 = vmatprep.subr.mxu0 0.0
        %2233 = vmatpush1.msra.mxu0 0.0
        %2234 = vmatprep.subr.mxu0 0.0
        %2235 = vmatpush1.msra.mxu0 0.0
        %2236 = vmatprep.subr.mxu0 0.0
        %2237 = vmatpush1.msra.mxu0 0.0
        %2238 = vmatprep.subr.mxu0 0.0
        %2239 = vmatpush1.msra.mxu0 0.0
        %2240 = vmatprep.subr.mxu0 0.0
        %2241 = vmatpush1.msra.mxu0 0.0
        %2242 = vmatprep.subr.mxu0 0.0
        %2243 = vmatpush1.msra.mxu0 0.0
        %2244 = vmatprep.subr.mxu0 0.0
        %2245 = vmatpush1.msra.mxu0 0.0
        %2246 = vmatprep.subr.mxu0 0.0
        %2247 = vmatpush1.msra.mxu0 0.0
        %2248 = vmatprep.subr.mxu0 0.0
        %2249 = vmatpush1.msra.mxu0 0.0
        %2250 = vmatprep.subr.mxu0 0.0
        %2251 = vmatpush1.msra.mxu0 0.0
        %2252 = vmatprep.subr.mxu0 0.0
        %2253 = vmatpush1.msra.mxu0 0.0
        %2254 = vmatprep.subr.mxu0 0.0
        %2255 = vmatpush1.msra.mxu0 0.0
        %2256 = vmatprep.subr.mxu0 0.0
        %2257 = vmatpush1.msra.mxu0 0.0
        %2258 = vmatprep.subr.mxu0 0.0
        %2259 = vmatpush1.msra.mxu0 0.0
        %2260 = vmatprep.subr.mxu0 0.0
        %2261 = vmatpush1.msra.mxu0 0.0
        %2262 = vmatprep.mubr.f32.mxu0 0.0
        %2263 = vmatmul.mubr.f32.gmra.mrb[0].mxu0 %v2196
        %v2264 = vpop.f32.mrb[0].mxu0
        %v2265 = vadd.f32 0.0, %v2264
        %v2266 = vpop.f32.mrb[0].mxu0
        %2267 = vdwg.mxu0
        %v2269 = vsel %vm1708, %v2048, 0
        %2271 = vmatprep.subr.mxu0 0.0
        %2272 = vmatpush1.msra.mxu0 %v1707
        %2273 = vmatprep.subr.mxu0 0.0
        %2274 = vmatpush1.msra.mxu0 0.0
        %2275 = vmatprep.subr.mxu0 0.0
        %2276 = vmatpush1.msra.mxu0 0.0
        %2277 = vmatprep.subr.mxu0 0.0
        %2278 = vmatpush1.msra.mxu0 0.0
        %2279 = vmatprep.subr.mxu0 0.0
        %2280 = vmatpush1.msra.mxu0 0.0
        %2281 = vmatprep.subr.mxu0 0.0
        %2282 = vmatpush1.msra.mxu0 0.0
        %2283 = vmatprep.subr.mxu0 0.0
        %2284 = vmatpush1.msra.mxu0 0.0
        %2285 = vmatprep.subr.mxu0 0.0
        %2286 = vmatpush1.msra.mxu0 0.0
        %2287 = vmatprep.subr.mxu0 0.0
        %2288 = vmatpush1.msra.mxu0 0.0
        %2289 = vmatprep.subr.mxu0 0.0
        %2290 = vmatpush1.msra.mxu0 0.0
        %2291 = vmatprep.subr.mxu0 0.0
        %2292 = vmatpush1.msra.mxu0 0.0
        %2293 = vmatprep.subr.mxu0 0.0
        %2294 = vmatpush1.msra.mxu0 0.0
        %2295 = vmatprep.subr.mxu0 0.0
        %2296 = vmatpush1.msra.mxu0 0.0
        %2297 = vmatprep.subr.mxu0 0.0
        %2298 = vmatpush1.msra.mxu0 0.0
        %2299 = vmatprep.subr.mxu0 0.0
        %2300 = vmatpush1.msra.mxu0 0.0
        %2301 = vmatprep.subr.mxu0 0.0
        %2302 = vmatpush1.msra.mxu0 0.0
        %2303 = vmatprep.subr.mxu0 0.0
        %2304 = vmatpush1.msra.mxu0 0.0
        %2305 = vmatprep.subr.mxu0 0.0
        %2306 = vmatpush1.msra.mxu0 0.0
        %2307 = vmatprep.subr.mxu0 0.0
        %2308 = vmatpush1.msra.mxu0 0.0
        %2309 = vmatprep.subr.mxu0 0.0
        %2310 = vmatpush1.msra.mxu0 0.0
        %2311 = vmatprep.subr.mxu0 0.0
        %2312 = vmatpush1.msra.mxu0 0.0
        %2313 = vmatprep.subr.mxu0 0.0
        %2314 = vmatpush1.msra.mxu0 0.0
        %2315 = vmatprep.subr.mxu0 0.0
        %2316 = vmatpush1.msra.mxu0 0.0
        %2317 = vmatprep.subr.mxu0 0.0
        %2318 = vmatpush1.msra.mxu0 0.0
        %2319 = vmatprep.subr.mxu0 0.0
        %2320 = vmatpush1.msra.mxu0 0.0
        %2321 = vmatprep.subr.mxu0 0.0
        %2322 = vmatpush1.msra.mxu0 0.0
        %2323 = vmatprep.subr.mxu0 0.0
        %2324 = vmatpush1.msra.mxu0 0.0
        %2325 = vmatprep.subr.mxu0 0.0
        %2326 = vmatpush1.msra.mxu0 0.0
        %2327 = vmatprep.subr.mxu0 0.0
        %2328 = vmatpush1.msra.mxu0 0.0
        %2329 = vmatprep.subr.mxu0 0.0
        %2330 = vmatpush1.msra.mxu0 0.0
        %2331 = vmatprep.subr.mxu0 0.0
        %2332 = vmatpush1.msra.mxu0 0.0
        %2333 = vmatprep.subr.mxu0 0.0
        %2334 = vmatpush1.msra.mxu0 0.0
        %2335 = vmatprep.mubr.f32.mxu0 0.0
        %2336 = vmatmul.mubr.f32.gmra.mrb[0].mxu0 %v2269
        %v2337 = vpop.f32.mrb[0].mxu0
        %v2338 = vadd.f32 0.0, %v2337
        %v2339 = vpop.f32.mrb[0].mxu0
        %2340 = vdwg.mxu0
        %v2341 = vcombine.low %v2119, %v2265
        %v2342 = vcombine.high %v2119, %v2265
        %v2344 = vunpack.c.l.s4 1983009808
        %v2345 = vunpack.c.0.s8 %v2344
        %v2346 = vlaneseq
        %v2347 = vshrl.u32 %v2346, 7
        %v2348 = vsub.s32 %v2345, %v2347
        %v2349 = vrot.slane %v2341, %v2348
        %v2351 = vunpack.c.l.s4 1983009808
        %v2352 = vunpack.c.0.s8 %v2351
        %v2353 = vlaneseq
        %v2354 = vshrl.u32 %v2353, 7
        %v2355 = vsub.s32 %v2352, %v2354
        %v2356 = vrot.slane %v2342, %v2355
        %v2357 = vcombine.low %v2192, %v2338
        %v2358 = vcombine.high %v2192, %v2338
        %v2360 = vunpack.c.l.s4 1983009808
        %v2361 = vunpack.c.0.s8 %v2360
        %v2362 = vlaneseq
        %v2363 = vshrl.u32 %v2362, 7
        %v2364 = vsub.s32 %v2361, %v2363
        %v2365 = vrot.slane %v2357, %v2364
        %v2367 = vunpack.c.l.s4 1983009808
        %v2368 = vunpack.c.0.s8 %v2367
        %v2369 = vlaneseq
        %v2370 = vshrl.u32 %v2369, 7
        %v2371 = vsub.s32 %v2368, %v2370
        %v2372 = vrot.slane %v2358, %v2371
        %v2373 = vcombine.low %v2349, %v2365
        %v2374 = vcombine.high %v2349, %v2365
        %v2376 = vunpack.c.l.s4 1934713408
        %v2377 = vunpack.c.0.s8 %v2376
        %v2378 = vlaneseq
        %v2379 = vshrl.u32 %v2378, 7
        %v2380 = vsub.s32 %v2377, %v2379
        %v2381 = vrot.slane %v2373, %v2380
        %v2383 = vunpack.c.l.s4 1934713408
        %v2384 = vunpack.c.0.s8 %v2383
        %v2385 = vlaneseq
        %v2386 = vshrl.u32 %v2385, 7
        %v2387 = vsub.s32 %v2384, %v2386
        %v2388 = vrot.slane %v2374, %v2387
        %v2389 = vcombine.low %v2356, %v2372
        %v2390 = vcombine.high %v2356, %v2372
        %v2392 = vunpack.c.l.s4 1934713408
        %v2393 = vunpack.c.0.s8 %v2392
        %v2394 = vlaneseq
        %v2395 = vshrl.u32 %v2394, 7
        %v2396 = vsub.s32 %v2393, %v2395
        %v2397 = vrot.slane %v2389, %v2396
        %v2399 = vunpack.c.l.s4 1934713408
        %v2400 = vunpack.c.0.s8 %v2399
        %v2401 = vlaneseq
        %v2402 = vshrl.u32 %v2401, 7
        %v2403 = vsub.s32 %v2400, %v2402
        %v2404 = vrot.slane %v2390, %v2403
        %v2405 = vcombine.high %v2381, 0.0
        %v2406 = vcombine.high %v2388, 0.0
        %v2407 = vcombine.high %v2397, 0.0
        %v2408 = vcombine.high %v2404, 0.0
        %v2409 = vcombine.low %v2381, %v2388
        %v2411 = vunpack.c.l.s4 1983009808
        %v2412 = vunpack.c.0.s8 %v2411
        %v2413 = vlaneseq
        %v2414 = vshrl.u32 %v2413, 7
        %v2415 = vsub.s32 %v2412, %v2414
        %v2416 = vrot.slane %v2409, %v2415
        %v2417 = vcombine.low %v2405, %v2406
        %v2419 = vunpack.c.l.s4 1983009808
        %v2420 = vunpack.c.0.s8 %v2419
        %v2421 = vlaneseq
        %v2422 = vshrl.u32 %v2421, 7
        %v2423 = vsub.s32 %v2420, %v2422
        %v2424 = vrot.slane %v2417, %v2423
        %v2425 = vcombine.low %v2397, %v2404
        %v2427 = vunpack.c.l.s4 1983009808
        %v2428 = vunpack.c.0.s8 %v2427
        %v2429 = vlaneseq
        %v2430 = vshrl.u32 %v2429, 7
        %v2431 = vsub.s32 %v2428, %v2430
        %v2432 = vrot.slane %v2425, %v2431
        %v2433 = vcombine.low %v2407, %v2408
        %v2435 = vunpack.c.l.s4 1983009808
        %v2436 = vunpack.c.0.s8 %v2435
        %v2437 = vlaneseq
        %v2438 = vshrl.u32 %v2437, 7
        %v2439 = vsub.s32 %v2436, %v2438
        %v2440 = vrot.slane %v2433, %v2439
        %v2441 = vcombine.low %v2416, %v2424
        %v2442 = vcombine.high %v2416, %v2424
        %v2444 = vunpack.c.l.s4 1934713408
        %v2445 = vunpack.c.0.s8 %v2444
        %v2446 = vlaneseq
        %v2447 = vshrl.u32 %v2446, 7
        %v2448 = vsub.s32 %v2445, %v2447
        %v2449 = vrot.slane %v2441, %v2448
        %v2451 = vunpack.c.l.s4 1934713408
        %v2452 = vunpack.c.0.s8 %v2451
        %v2453 = vlaneseq
        %v2454 = vshrl.u32 %v2453, 7
        %v2455 = vsub.s32 %v2452, %v2454
        %v2456 = vrot.slane %v2442, %v2455
        %v2457 = vcombine.low %v2432, %v2440
        %v2458 = vcombine.high %v2432, %v2440
        %v2460 = vunpack.c.l.s4 1934713408
        %v2461 = vunpack.c.0.s8 %v2460
        %v2462 = vlaneseq
        %v2463 = vshrl.u32 %v2462, 7
        %v2464 = vsub.s32 %v2461, %v2463
        %v2465 = vrot.slane %v2457, %v2464
        %v2467 = vunpack.c.l.s4 1934713408
        %v2468 = vunpack.c.0.s8 %v2467
        %v2469 = vlaneseq
        %v2470 = vshrl.u32 %v2469, 7
        %v2471 = vsub.s32 %v2468, %v2470
        %v2472 = vrot.slane %v2458, %v2471
        %v2473 = vcombine.low %v2449, %v2465
        %v2474 = vcombine.high %v2449, %v2465
        %v2475 = vcombine.low %v2456, %v2472
        %v2476 = vcombine.high %v2456, %v2472
        %2478 = vrot.lane.b32.xlu0 %v2474, 8
        %v2479 = vpop.permute.xlu0 %2478
        %2482 = vrot.lane.b32.xlu0 %v2475, 16
        %v2483 = vpop.permute.xlu0 %2482
        %2486 = vrot.lane.b32.xlu0 %v2476, 24
        %v2487 = vpop.permute.xlu0 %2486
        %v2489 = vsel %vm1708, %v2473, %v2479
        %vm2490 = vcmask 130048
        %v2491 = vsel %vm2490, %v2489, %v2483
        %vm2492 = vcmask 195584
        %v2493 = vsel %vm2492, %v2491, %v2487
        %v2494 = vld [vmem:[%s3] sm:$0xff]
        %v2495 = vld [vmem:[%s3 + $0x8] sm:$0xff]
        %v2496 = vld [vmem:[%s3 + $0x10] sm:$0xff]
        %v2497 = vld [vmem:[%s3 + $0x18] sm:$0xff]
        %v2498 = vld [vmem:[%s4] sm:$0x1]
        %v2500 = vlaneseq
        %v2501 = vshrl.u32 %v2500, 7
        %v2502 = vsub.s32 0, %v2501
        %v2503 = vrot.slane %v2498, %v2502
        %v2506 = vsel %vm544, %v2493, 0
        %2508 = vmatprep.subr.mxu0 0.0
        %2509 = vmatpush1.msra.mxu0 %v2494
        %2510 = vmatprep.subr.mxu0 0.0
        %2511 = vmatpush1.msra.mxu0 %v2495
        %2512 = vmatprep.subr.mxu0 0.0
        %2513 = vmatpush1.msra.mxu0 %v2496
        %2514 = vmatprep.subr.mxu0 0.0
        %2515 = vmatpush1.msra.mxu0 %v2497
        %2516 = vmatprep.subr.mxu0 0.0
        %2517 = vmatpush1.msra.mxu0 0.0
        %2518 = vmatprep.subr.mxu0 0.0
        %2519 = vmatpush1.msra.mxu0 0.0
        %2520 = vmatprep.subr.mxu0 0.0
        %2521 = vmatpush1.msra.mxu0 0.0
        %2522 = vmatprep.subr.mxu0 0.0
        %2523 = vmatpush1.msra.mxu0 0.0
        %2524 = vmatprep.subr.mxu0 0.0
        %2525 = vmatpush1.msra.mxu0 0.0
        %2526 = vmatprep.subr.mxu0 0.0
        %2527 = vmatpush1.msra.mxu0 0.0
        %2528 = vmatprep.subr.mxu0 0.0
        %2529 = vmatpush1.msra.mxu0 0.0
        %2530 = vmatprep.subr.mxu0 0.0
        %2531 = vmatpush1.msra.mxu0 0.0
        %2532 = vmatprep.subr.mxu0 0.0
        %2533 = vmatpush1.msra.mxu0 0.0
        %2534 = vmatprep.subr.mxu0 0.0
        %2535 = vmatpush1.msra.mxu0 0.0
        %2536 = vmatprep.subr.mxu0 0.0
        %2537 = vmatpush1.msra.mxu0 0.0
        %2538 = vmatprep.subr.mxu0 0.0
        %2539 = vmatpush1.msra.mxu0 0.0
        %2540 = vmatprep.subr.mxu0 0.0
        %2541 = vmatpush1.msra.mxu0 0.0
        %2542 = vmatprep.subr.mxu0 0.0
        %2543 = vmatpush1.msra.mxu0 0.0
        %2544 = vmatprep.subr.mxu0 0.0
        %2545 = vmatpush1.msra.mxu0 0.0
        %2546 = vmatprep.subr.mxu0 0.0
        %2547 = vmatpush1.msra.mxu0 0.0
        %2548 = vmatprep.subr.mxu0 0.0
        %2549 = vmatpush1.msra.mxu0 0.0
        %2550 = vmatprep.subr.mxu0 0.0
        %2551 = vmatpush1.msra.mxu0 0.0
        %2552 = vmatprep.subr.mxu0 0.0
        %2553 = vmatpush1.msra.mxu0 0.0
        %2554 = vmatprep.subr.mxu0 0.0
        %2555 = vmatpush1.msra.mxu0 0.0
        %2556 = vmatprep.subr.mxu0 0.0
        %2557 = vmatpush1.msra.mxu0 0.0
        %2558 = vmatprep.subr.mxu0 0.0
        %2559 = vmatpush1.msra.mxu0 0.0
        %2560 = vmatprep.subr.mxu0 0.0
        %2561 = vmatpush1.msra.mxu0 0.0
        %2562 = vmatprep.subr.mxu0 0.0
        %2563 = vmatpush1.msra.mxu0 0.0
        %2564 = vmatprep.subr.mxu0 0.0
        %2565 = vmatpush1.msra.mxu0 0.0
        %2566 = vmatprep.subr.mxu0 0.0
        %2567 = vmatpush1.msra.mxu0 0.0
        %2568 = vmatprep.subr.mxu0 0.0
        %2569 = vmatpush1.msra.mxu0 0.0
        %2570 = vmatprep.subr.mxu0 0.0
        %2571 = vmatpush1.msra.mxu0 0.0
        %2572 = vmatprep.mubr.f32.mxu0 0.0
        %2573 = vmatmul.mubr.f32.gmra.mrb[0].mxu0 %v2506
        %v2574 = vpop.f32.mrb[0].mxu0
        %v2575 = vadd.f32 %v2503, %v2574
        %v2576 = vpop.f32.mrb[0].mxu0
        %2577 = vdwg.mxu0
        %v2578 = vadd.f32 %v2575, %v532
        %v2579 = vld [vmem:[#allocation5] sm:$0x1]
        %v2580 = vld [vmem:[#allocation7] sm:$0x1]
        %v2581 = vsel %vm544, %v2578, 0.0
        %2582 = vadd.xlane.f32.xlu0 %v2581
        %v2583 = vpop.xlane.xlu0 %2582
        %v2584 = vrcp.pop 32.0
        %v2585 = vmul.f32 %v2583, %v2584
        %v2586 = vsub.f32 %v2578, %v2585
        %v2587 = vmul.f32 %v2586, %v2586
        %v2588 = vsel %vm544, %v2587, 0.0
        %2589 = vadd.xlane.f32.xlu0 %v2588
        %v2590 = vpop.xlane.xlu0 %2589
        %v2591 = vmul.f32 %v2590, %v2584
        %v2592 = vadd.f32 %v2591, 1e-05
        %v2593 = vrsqrt.pop %v2592
        %v2594 = vmul.f32 %v2586, %v2593
        %v2596 = vlaneseq
        %v2597 = vshrl.u32 %v2596, 7
        %v2598 = vsub.s32 0, %v2597
        %v2599 = vrot.slane %v2579, %v2598
        %v2601 = vmul.f32 %v2594, %v2599
        %v2603 = vlaneseq
        %v2604 = vshrl.u32 %v2603, 7
        %v2605 = vsub.s32 0, %v2604
        %v2606 = vrot.slane %v2580, %v2605
        %v2608 = vadd.f32 %v2601, %v2606
        %v2609 = vld [vmem:[%s7] sm:$0xff]
        %v2610 = vld [vmem:[%s7 + $0x8] sm:$0xff]
        %v2611 = vld [vmem:[%s7 + $0x10] sm:$0xff]
        %v2612 = vld [vmem:[%s7 + $0x18] sm:$0xff]
        %v2613 = vld [vmem:[#allocation8] sm:$0x1]
        %v2615 = vlaneseq
        %v2616 = vshrl.u32 %v2615, 7
        %v2617 = vsub.s32 0, %v2616
        %v2618 = vrot.slane %v2613, %v2617
        %v2621 = vsel %vm544, %v2608, 0
        %2623 = vmatprep.subr.mxu0 0.0
        %2624 = vmatpush1.msra.mxu0 %v2609
        %2625 = vmatprep.subr.mxu0 0.0
        %2626 = vmatpush1.msra.mxu0 %v2610
        %2627 = vmatprep.subr.mxu0 0.0
        %2628 = vmatpush1.msra.mxu0 %v2611
        %2629 = vmatprep.subr.mxu0 0.0
        %2630 = vmatpush1.msra.mxu0 %v2612
        %2631 = vmatprep.subr.mxu0 0.0
        %2632 = vmatpush1.msra.mxu0 0.0
        %2633 = vmatprep.subr.mxu0 0.0
        %2634 = vmatpush1.msra.mxu0 0.0
        %2635 = vmatprep.subr.mxu0 0.0
        %2636 = vmatpush1.msra.mxu0 0.0
        %2637 = vmatprep.subr.mxu0 0.0
        %2638 = vmatpush1.msra.mxu0 0.0
        %2639 = vmatprep.subr.mxu0 0.0
        %2640 = vmatpush1.msra.mxu0 0.0
        %2641 = vmatprep.subr.mxu0 0.0
        %2642 = vmatpush1.msra.mxu0 0.0
        %2643 = vmatprep.subr.mxu0 0.0
        %2644 = vmatpush1.msra.mxu0 0.0
        %2645 = vmatprep.subr.mxu0 0.0
        %2646 = vmatpush1.msra.mxu0 0.0
        %2647 = vmatprep.subr.mxu0 0.0
        %2648 = vmatpush1.msra.mxu0 0.0
        %2649 = vmatprep.subr.mxu0 0.0
        %2650 = vmatpush1.msra.mxu0 0.0
        %2651 = vmatprep.subr.mxu0 0.0
        %2652 = vmatpush1.msra.mxu0 0.0
        %2653 = vmatprep.subr.mxu0 0.0
        %2654 = vmatpush1.msra.mxu0 0.0
        %2655 = vmatprep.subr.mxu0 0.0
        %2656 = vmatpush1.msra.mxu0 0.0
        %2657 = vmatprep.subr.mxu0 0.0
        %2658 = vmatpush1.msra.mxu0 0.0
        %2659 = vmatprep.subr.mxu0 0.0
        %2660 = vmatpush1.msra.mxu0 0.0
        %2661 = vmatprep.subr.mxu0 0.0
        %2662 = vmatpush1.msra.mxu0 0.0
        %2663 = vmatprep.subr.mxu0 0.0
        %2664 = vmatpush1.msra.mxu0 0.0
        %2665 = vmatprep.subr.mxu0 0.0
        %2666 = vmatpush1.msra.mxu0 0.0
        %2667 = vmatprep.subr.mxu0 0.0
        %2668 = vmatpush1.msra.mxu0 0.0
        %2669 = vmatprep.subr.mxu0 0.0
        %2670 = vmatpush1.msra.mxu0 0.0
        %2671 = vmatprep.subr.mxu0 0.0
        %2672 = vmatpush1.msra.mxu0 0.0
        %2673 = vmatprep.subr.mxu0 0.0
        %2674 = vmatpush1.msra.mxu0 0.0
        %2675 = vmatprep.subr.mxu0 0.0
        %2676 = vmatpush1.msra.mxu0 0.0
        %2677 = vmatprep.subr.mxu0 0.0
        %2678 = vmatpush1.msra.mxu0 0.0
        %2679 = vmatprep.subr.mxu0 0.0
        %2680 = vmatpush1.msra.mxu0 0.0
        %2681 = vmatprep.subr.mxu0 0.0
        %2682 = vmatpush1.msra.mxu0 0.0
        %2683 = vmatprep.subr.mxu0 0.0
        %2684 = vmatpush1.msra.mxu0 0.0
        %2685 = vmatprep.subr.mxu0 0.0
        %2686 = vmatpush1.msra.mxu0 0.0
        %2687 = vmatprep.mubr.f32.mxu0 0.0
        %2688 = vmatmul.mubr.f32.gmra.mrb[0].mxu0 %v2621
        %v2689 = vpop.f32.mrb[0].mxu0
        %v2690 = vadd.f32 %v2618, %v2689
        %v2691 = vpop.f32.mrb[0].mxu0
        %2692 = vdwg.mxu0
        %v2693 = vmax.f32 %v2690, 0.0
        %v2694 = vld [vmem:[%s9] sm:$0xff]
        %v2695 = vld [vmem:[%s9 + $0x8] sm:$0xff]
        %v2696 = vld [vmem:[%s9 + $0x10] sm:$0xff]
        %v2697 = vld [vmem:[%s9 + $0x18] sm:$0xff]
        %v2698 = vld [vmem:[%s9 + $0x20] sm:$0xff]
        %v2699 = vld [vmem:[%s9 + $0x28] sm:$0xff]
        %v2700 = vld [vmem:[%s9 + $0x30] sm:$0xff]
        %v2701 = vld [vmem:[%s9 + $0x38] sm:$0xff]
        %v2702 = vld [vmem:[%s10] sm:$0x1]
        %v2704 = vlaneseq
        %v2705 = vshrl.u32 %v2704, 7
        %v2706 = vsub.s32 0, %v2705
        %v2707 = vrot.slane %v2702, %v2706
        %vm2709 = vcmask 523264
        %v2711 = vsel %vm2709, %v2693, 0
        %2713 = vmatprep.subr.mxu0 0.0
        %2714 = vmatpush1.msra.mxu0 %v2694
        %2715 = vmatprep.subr.mxu0 0.0
        %2716 = vmatpush1.msra.mxu0 %v2695
        %2717 = vmatprep.subr.mxu0 0.0
        %2718 = vmatpush1.msra.mxu0 %v2696
        %2719 = vmatprep.subr.mxu0 0.0
        %2720 = vmatpush1.msra.mxu0 %v2697
        %2721 = vmatprep.subr.mxu0 0.0
        %2722 = vmatpush1.msra.mxu0 %v2698
        %2723 = vmatprep.subr.mxu0 0.0
        %2724 = vmatpush1.msra.mxu0 %v2699
        %2725 = vmatprep.subr.mxu0 0.0
        %2726 = vmatpush1.msra.mxu0 %v2700
        %2727 = vmatprep.subr.mxu0 0.0
        %2728 = vmatpush1.msra.mxu0 %v2701
        %2729 = vmatprep.subr.mxu0 0.0
        %2730 = vmatpush1.msra.mxu0 0.0
        %2731 = vmatprep.subr.mxu0 0.0
        %2732 = vmatpush1.msra.mxu0 0.0
        %2733 = vmatprep.subr.mxu0 0.0
        %2734 = vmatpush1.msra.mxu0 0.0
        %2735 = vmatprep.subr.mxu0 0.0
        %2736 = vmatpush1.msra.mxu0 0.0
        %2737 = vmatprep.subr.mxu0 0.0
        %2738 = vmatpush1.msra.mxu0 0.0
        %2739 = vmatprep.subr.mxu0 0.0
        %2740 = vmatpush1.msra.mxu0 0.0
        %2741 = vmatprep.subr.mxu0 0.0
        %2742 = vmatpush1.msra.mxu0 0.0
        %2743 = vmatprep.subr.mxu0 0.0
        %2744 = vmatpush1.msra.mxu0 0.0
        %2745 = vmatprep.subr.mxu0 0.0
        %2746 = vmatpush1.msra.mxu0 0.0
        %2747 = vmatprep.subr.mxu0 0.0
        %2748 = vmatpush1.msra.mxu0 0.0
        %2749 = vmatprep.subr.mxu0 0.0
        %2750 = vmatpush1.msra.mxu0 0.0
        %2751 = vmatprep.subr.mxu0 0.0
        %2752 = vmatpush1.msra.mxu0 0.0
        %2753 = vmatprep.subr.mxu0 0.0
        %2754 = vmatpush1.msra.mxu0 0.0
        %2755 = vmatprep.subr.mxu0 0.0
        %2756 = vmatpush1.msra.mxu0 0.0
        %2757 = vmatprep.subr.mxu0 0.0
        %2758 = vmatpush1.msra.mxu0 0.0
        %2759 = vmatprep.subr.mxu0 0.0
        %2760 = vmatpush1.msra.mxu0 0.0
        %2761 = vmatprep.subr.mxu0 0.0
        %2762 = vmatpush1.msra.mxu0 0.0
        %2763 = vmatprep.subr.mxu0 0.0
        %2764 = vmatpush1.msra.mxu0 0.0
        %2765 = vmatprep.subr.mxu0 0.0
        %2766 = vmatpush1.msra.mxu0 0.0
        %2767 = vmatprep.subr.mxu0 0.0
        %2768 = vmatpush1.msra.mxu0 0.0
        %2769 = vmatprep.subr.mxu0 0.0
        %2770 = vmatpush1.msra.mxu0 0.0
        %2771 = vmatprep.subr.mxu0 0.0
        %2772 = vmatpush1.msra.mxu0 0.0
        %2773 = vmatprep.subr.mxu0 0.0
        %2774 = vmatpush1.msra.mxu0 0.0
        %2775 = vmatprep.subr.mxu0 0.0
        %2776 = vmatpush1.msra.mxu0 0.0
        %2777 = vmatprep.mubr.f32.mxu0 0.0
        %2778 = vmatmul.mubr.f32.gmra.mrb[0].mxu0 %v2711
        %v2779 = vpop.f32.mrb[0].mxu0
        %v2780 = vadd.f32 %v2707, %v2779
        %v2781 = vpop.f32.mrb[0].mxu0
        %2782 = vdwg.mxu0
        %v2783 = vadd.f32 %v2780, %v2608
        %v2784 = vld [vmem:[%s11] sm:$0x1]
        %v2785 = vld [vmem:[%s12] sm:$0x1]
        %v2786 = vsel %vm544, %v2783, 0.0
        %2787 = vadd.xlane.f32.xlu0 %v2786
        %v2788 = vpop.xlane.xlu0 %2787
        %v2789 = vmul.f32 %v2788, %v2584
        %v2790 = vsub.f32 %v2783, %v2789
        %v2791 = vmul.f32 %v2790, %v2790
        %v2792 = vsel %vm544, %v2791, 0.0
        %2793 = vadd.xlane.f32.xlu0 %v2792
        %v2794 = vpop.xlane.xlu0 %2793
        %v2795 = vmul.f32 %v2794, %v2584
        %v2796 = vadd.f32 %v2795, 1e-05
        %v2797 = vrsqrt.pop %v2796
        %v2798 = vmul.f32 %v2790, %v2797
        %v2800 = vlaneseq
        %v2801 = vshrl.u32 %v2800, 7
        %v2802 = vsub.s32 0, %v2801
        %v2803 = vrot.slane %v2784, %v2802
        %v2805 = vmul.f32 %v2798, %v2803
        %v2807 = vlaneseq
        %v2808 = vshrl.u32 %v2807, 7
        %v2809 = vsub.s32 0, %v2808
        %v2810 = vrot.slane %v2785, %v2809
        %v2812 = vadd.f32 %v2805, %v2810
        %2813 = vst.msk [vmem:[%s524] sm:$0xff] %vm544, %v2812
        %s2814 = sand.u32 %s323, 1
        %s2815 = scalar_lea.sflag [#allocation4], %s2814
        %s2816 = sand.u32 %s323, 1
        %s2817 = smul.addr %s2816, 8
        %s2818 = scalar_lea.vmem [#allocation10], %s2817
        %s2819 = sand.u32 %s349, 1
        %s2820 = scalar_lea.sflag [#allocation12], %s2819
        %s2821 = sand.u32 %s349, 1
        %s2822 = smul.addr %s2821, 32
        %s2823 = scalar_lea.vmem [#allocation11], %s2822
        // Predicated region
        $region89: #{tpu_custom_call.1} parent=71 // pred_check
          %p2824 = pneg %p333
        $region90: #{tpu_custom_call.1} parent=71 // pred_check_branch
          %2826 = sbr.rel (%p2824) target = $region92
        $region91: #{tpu_custom_call.1} parent=71 // pred_region
          %s2828 = ssub.s32 128, 128
          %2829 = vsyncadd %s2815, %s2828
          %s2830 = smul.addr %s37, 128
          %s2831 = scalar_lea.hbm %s13, %s2830
          %s2833 = sshll.u32 %s2818, 4
          %s2834 = int_to_ptr.vmem [resolvable:$true] %s2833
          %2836 = dma.vmem_to_hbm [thread:$0]  %s2834, 128, %s2831, %s2815
        $region92: #{tpu_custom_call.1} parent=71 // pred_fallthru
          _
        // Predicated region
        $region93: #{tpu_custom_call.1} parent=71 // pred_check
          %p2837 = pneg %p359
        $region94: #{tpu_custom_call.1} parent=71 // pred_check_branch
          %2839 = sbr.rel (%p2837) target = $region96
        $region95: #{tpu_custom_call.1} parent=71 // pred_region
          %s2841 = ssub.s32 512, 512
          %2842 = vsyncadd %s2820, %s2841
          %s2843 = smul.addr %s37, 128
          %s2844 = scalar_lea.hbm %s14, %s2843
          %s2845 = sshll.u32 %s2823, 4
          %s2846 = int_to_ptr.vmem [resolvable:$true] %s2845
          %2851 = dma.vmem_to_hbm [thread:$0]  %s2846, 512, %s2844, %s2820, 128, 256, 8
        $region96: #{tpu_custom_call.1} parent=71 // pred_fallthru
          _
      $region72: #{tpu_custom_call.1} parent=5 // pred_fallthru
        _
      %p2852 = scmp.le.s32.totalorder 2, %s32
      // Predicated region
      $region97: #{tpu_custom_call.1} parent=5 // pred_check
        %p2853 = pneg %p2852
      $region98: #{tpu_custom_call.1} parent=5 // pred_check_branch
        %2855 = sbr.rel (%p2853) target = $region100
      $region99: #{tpu_custom_call.1} parent=5 // pred_region
        %s2856 = ssub.s32 %s32, 2
        // Predicated region
        $region101: #{tpu_custom_call.1} parent=99 // pred_check
          %p2857 = pneg %p339
        $region102: #{tpu_custom_call.1} parent=99 // pred_check_branch
          %2859 = sbr.rel (%p2857) target = $region104
        $region103: #{tpu_custom_call.1} parent=99 // pred_region
          %s2860 = sand.u32 %s324, 1
          %s2861 = scalar_lea.sflag [#allocation4], %s2860
          %s2862 = sand.u32 %s324, 1
          %s2863 = smul.addr %s2862, 8
          %s2864 = scalar_lea.vmem [#allocation10], %s2863
          %2865 = dma.done %s2861, 128
        $region104: #{tpu_custom_call.1} parent=99 // pred_fallthru
          _
        // Predicated region
        $region105: #{tpu_custom_call.1} parent=99 // pred_check
          %p2866 = pneg %p365
        $region106: #{tpu_custom_call.1} parent=99 // pred_check_branch
          %2868 = sbr.rel (%p2866) target = $region108
        $region107: #{tpu_custom_call.1} parent=99 // pred_region
          %s2869 = sand.u32 %s350, 1
          %s2870 = scalar_lea.sflag [#allocation12], %s2869
          %s2871 = sand.u32 %s350, 1
          %s2872 = smul.addr %s2871, 32
          %s2873 = scalar_lea.vmem [#allocation11], %s2872
          %2874 = dma.done %s2870, 512
        $region108: #{tpu_custom_call.1} parent=99 // pred_fallthru
          _
      $region100: #{tpu_custom_call.1} parent=5 // pred_fallthru
        _
    $region6: #{tpu_custom_call.1} parent=1 // loop_footer
      %s36 = sadd.s32 1, %s32
    $region7: #{tpu_custom_call.1} parent=1 // loop_footer_branch
      %31 = sbr.rel target = $region3
    $region8: #{tpu_custom_call.1} parent=1 // loop_exit
      _
    %2875 = vsyncpa [#allocation3], 1
    %s2876 = scalar_lea.sflag [#allocation3], 1
    %2877 = vsyncpa %s2876, 1
    %2878 = vsyncpa [#allocation6], 1
    %2879 = vsyncpa [#allocation9], 1
    %2880 = vsyncpa [#allocation4], 1
    %s2881 = scalar_lea.sflag [#allocation4], 1
    %2882 = vsyncpa %s2881, 1
    %2883 = vsyncpa [#allocation12], 1
    %s2884 = scalar_lea.sflag [#allocation12], 1
    %2885 = vsyncpa %s2884, 1

// kernel: tpu_custom_call.1
$region0: #{tpu_custom_call.1}
  #allocation0 [shape = 'u32[]', space=smem, size = 0x4, offset = 0x4, fixed_abs, tag = 'smem constant byte address 0x4 - core index']
  #allocation1 [shape = 'u32[144,128]{1,0:T(1,128)}', space=vmem, size = 0x12000, scoped, tag = 'internal scratch']
  %s0 = inlined_call_operand.hbm [shape: f32[2,8,32], index: 0, kind: input, shape index: {}]
  %s1 = inlined_call_operand.vmem [shape: f32[32,96], index: 1, kind: input, shape index: {}]
  %s2 = inlined_call_operand.vmem [shape: f32[1,96], index: 2, kind: input, shape index: {}]
  %s3 = inlined_call_operand.vmem [shape: f32[32,32], index: 3, kind: input, shape index: {}]
  %s4 = inlined_call_operand.vmem [shape: f32[1,32], index: 4, kind: input, shape index: {}]
  %s5 = inlined_call_operand.hbm [shape: f32[1,32], index: 5, kind: input, shape index: {}]
  %s6 = inlined_call_operand.hbm [shape: f32[1,32], index: 6, kind: input, shape index: {}]
  %s7 = inlined_call_operand.vmem [shape: f32[32,64], index: 7, kind: input, shape index: {}]
  %s8 = inlined_call_operand.hbm [shape: f32[1,64], index: 8, kind: input, shape index: {}]
  %s9 = inlined_call_operand.vmem [shape: f32[64,32], index: 9, kind: input, shape index: {}]
  %s10 = inlined_call_operand.vmem [shape: f32[1,32], index: 10, kind: input, shape index: {}]
  %s11 = inlined_call_operand.vmem [shape: f32[1,32], index: 11, kind: input, shape index: {}]
  %s12 = inlined_call_operand.vmem [shape: f32[1,32], index: 12, kind: input, shape index: {}]
  %s13 = inlined_call_operand.hbm [shape: f32[2,8,32], index: 13, kind: output, shape index: {0}]
  %s14 = inlined_call_operand.hbm [shape: f32[4,2,8,8], index: 14, kind: output, shape index: {1}]
  %15 = xla_tuple %s13, %s14
  %s16 = sld [smem:[#allocation0]]
  $region109: #{tpu_custom_call.1} parent=0
    _
  %s18 = ssub.s32 1, %s16
  %s19 = scalar_select 0, %s18, %s16
  $region1: #{tpu_custom_call.1} parent=0
    #allocation2 [shape = 'u8[8192]{0}', space=vmem, size = 0x2000, scoped, tag = 'input window, operand 0']
    #allocation3 [shape = 's32[2]{0}', space=sflag, size = 0x8, scoped, tag = 'scoped memory for tpu_custom_call.1']
    #allocation4 [shape = 's32[2]{0}', space=sflag, size = 0x8, scoped, tag = 'scoped memory for tpu_custom_call.1']
    #allocation5 [shape = 'u8[512]{0}', space=vmem, size = 0x400, scoped, tag = 'input window, operand 5, single buffered']
    #allocation6 [shape = 's32[1]{0}', space=sflag, size = 0x4, scoped, tag = 'scoped memory for tpu_custom_call.1']
    #allocation7 [shape = 'u8[512]{0}', space=vmem, size = 0x400, scoped, tag = 'input window, operand 6, single buffered']
    #allocation8 [shape = 'u8[512]{0}', space=vmem, size = 0x400, scoped, tag = 'input window, operand 8, single buffered']
    #allocation9 [shape = 's32[1]{0}', space=sflag, size = 0x4, scoped, tag = 'scoped memory for tpu_custom_call.1']
    #allocation10 [shape = 'u8[8192]{0}', space=vmem, size = 0x2000, scoped, tag = 'output window, operand 0']
    #allocation11 [shape = 'u8[32768]{0}', space=vmem, size = 0x8000, scoped, tag = 'output window, operand 1']
    #allocation12 [shape = 's32[2]{0}', space=sflag, size = 0x8, scoped, tag = 'scoped memory for tpu_custom_call.1']
    %20 = vsyncpa [#allocation3], 0
    %s21 = scalar_lea.sflag [#allocation3], 1
    %22 = vsyncpa %s21, 0
    %23 = vsyncpa [#allocation6], 0
    %24 = vsyncpa [#allocation9], 0
    %25 = vsyncpa [#allocation4], 0
    %s26 = scalar_lea.sflag [#allocation4], 1
    %27 = vsyncpa %s26, 0
    %28 = vsyncpa [#allocation12], 0
    %s29 = scalar_lea.sflag [#allocation12], 1
    %30 = vsyncpa %s29, 0
    loop: start=0, step=1, limit=4
    $region2: #{tpu_custom_call.1} parent=1 // loop_pre_header
      _
    $region3: #{tpu_custom_call.1} parent=1 // loop_header
      %s32 = sphi 0, %s36
      %p33 = scmp.ge.s32.totalorder %s32, 4
      %s42 = sphi 0, %s44
      %s45 = sphi 0, %s42
      %s46 = sphi 0, %s45
      %s62 = sphi 0, %s46
      %s66 = sphi 0, %s66
      %s68 = sphi 0, %s66
      %s69 = sphi 0, %s68
      %s83 = sphi 0, %s69
      %s87 = sphi 0, %s87
      %s89 = sphi 0, %s87
      %s90 = sphi 0, %s89
      %s104 = sphi 0, %s90
      %s108 = sphi 0, %s108
      %s110 = sphi 0, %s108
      %s111 = sphi 0, %s110
      %s125 = sphi 0, %s111
      %s129 = sphi 0, %s129
      %s131 = sphi 0, %s129
      %s132 = sphi 0, %s131
      %s146 = sphi 0, %s132
      %s150 = sphi 0, %s150
      %s152 = sphi 0, %s150
      %s153 = sphi 0, %s152
      %s167 = sphi 0, %s153
      %s171 = sphi 0, %s171
      %s173 = sphi 0, %s171
      %s174 = sphi 0, %s173
      %s188 = sphi 0, %s174
      %s192 = sphi 0, %s192
      %s194 = sphi 0, %s192
      %s195 = sphi 0, %s194
      %s209 = sphi 0, %s195
      %s213 = sphi 0, %s213
      %s215 = sphi 0, %s213
      %s216 = sphi 0, %s215
      %s230 = sphi 0, %s216
      %s234 = sphi 0, %s234
      %s236 = sphi 0, %s234
      %s237 = sphi 0, %s236
      %s251 = sphi 0, %s237
      %s255 = sphi 0, %s255
      %s257 = sphi 0, %s255
      %s258 = sphi 0, %s257
      %s272 = sphi 0, %s258
      %s276 = sphi 0, %s276
      %s278 = sphi 0, %s276
      %s279 = sphi 0, %s278
      %s293 = sphi 0, %s279
      %s297 = sphi 0, %s297
      %s299 = sphi 0, %s297
      %s300 = sphi 0, %s299
      %s314 = sphi 0, %s300
      %s320 = sphi 0, %s322
      %s323 = sphi 0, %s320
      %s324 = sphi 0, %s323
      %s340 = sphi 0, %s324
      %s346 = sphi 0, %s348
      %s349 = sphi 0, %s346
      %s350 = sphi 0, %s349
      %s366 = sphi 0, %s350
    $region4: #{tpu_custom_call.1} parent=1 // loop_header_branch
      %35 = sbr.rel (%p33) target = $region8
    $region5: #{tpu_custom_call.1} parent=1 // loop_body
      %s37 = ssub.s32 %s32, 1
      %s38 = ssub.s32 %s32, 2
      %s39 = sadd.s32 %s32, 1
      %s40 = ssub.s32 %s32, %s39
      %p41 = scmp.eq.s32.totalorder %s40, 0
      %s43 = sadd.s32 %s42, 1
      %s44 = scalar_select %p41, %s42, %s43
      %p47 = pneg %p41
      %p48 = scmp.eq.s32.totalorder %s32, 1
      %p49 = por %p47, %p48
      %p50 = scmp.ne.s32.totalorder %s42, %s45
      %p51 = scmp.eq.s32.totalorder %s32, 0
      %p52 = por %p50, %p51
      %p53 = scmp.ne.s32.totalorder %s42, %s45
      %p54 = scmp.eq.s32.totalorder %s37, 1
      %p55 = por %p53, %p54
      %p56 = scmp.ne.s32.totalorder %s45, %s46
      %p57 = scmp.eq.s32.totalorder %s37, 0
      %p58 = por %p56, %p57
      %p59 = scmp.ne.s32.totalorder %s45, %s46
      %p60 = scmp.eq.s32.totalorder %s38, 1
      %p61 = por %p59, %p60
      %p63 = scmp.ne.s32.totalorder %s46, %s62
      %p64 = scmp.eq.s32.totalorder %s38, 0
      %p65 = por %p63, %p64
      %s67 = sadd.s32 %s66, 1
      %p70 = scmp.eq.s32.totalorder %s32, 1
      %p71 = scmp.ne.s32.totalorder %s66, %s68
      %p72 = scmp.eq.s32.totalorder %s32, 0
      %p73 = por %p71, %p72
      %p74 = scmp.ne.s32.totalorder %s66, %s68
      %p75 = scmp.eq.s32.totalorder %s37, 1
      %p76 = por %p74, %p75
      %p77 = scmp.ne.s32.totalorder %s68, %s69
      %p78 = scmp.eq.s32.totalorder %s37, 0
      %p79 = por %p77, %p78
      %p80 = scmp.ne.s32.totalorder %s68, %s69
      %p81 = scmp.eq.s32.totalorder %s38, 1
      %p82 = por %p80, %p81
      %p84 = scmp.ne.s32.totalorder %s69, %s83
      %p85 = scmp.eq.s32.totalorder %s38, 0
      %p86 = por %p84, %p85
      %s88 = sadd.s32 %s87, 1
      %p91 = scmp.eq.s32.totalorder %s32, 1
      %p92 = scmp.ne.s32.totalorder %s87, %s89
      %p93 = scmp.eq.s32.totalorder %s32, 0
      %p94 = por %p92, %p93
      %p95 = scmp.ne.s32.totalorder %s87, %s89
      %p96 = scmp.eq.s32.totalorder %s37, 1
      %p97 = por %p95, %p96
      %p98 = scmp.ne.s32.totalorder %s89, %s90
      %p99 = scmp.eq.s32.totalorder %s37, 0
      %p100 = por %p98, %p99
      %p101 = scmp.ne.s32.totalorder %s89, %s90
      %p102 = scmp.eq.s32.totalorder %s38, 1
      %p103 = por %p101, %p102
      %p105 = scmp.ne.s32.totalorder %s90, %s104
      %p106 = scmp.eq.s32.totalorder %s38, 0
      %p107 = por %p105, %p106
      %s109 = sadd.s32 %s108, 1
      %p112 = scmp.eq.s32.totalorder %s32, 1
      %p113 = scmp.ne.s32.totalorder %s108, %s110
      %p114 = scmp.eq.s32.totalorder %s32, 0
      %p115 = por %p113, %p114
      %p116 = scmp.ne.s32.totalorder %s108, %s110
      %p117 = scmp.eq.s32.totalorder %s37, 1
      %p118 = por %p116, %p117
      %p119 = scmp.ne.s32.totalorder %s110, %s111
      %p120 = scmp.eq.s32.totalorder %s37, 0
      %p121 = por %p119, %p120
      %p122 = scmp.ne.s32.totalorder %s110, %s111
      %p123 = scmp.eq.s32.totalorder %s38, 1
      %p124 = por %p122, %p123
      %p126 = scmp.ne.s32.totalorder %s111, %s125
      %p127 = scmp.eq.s32.totalorder %s38, 0
      %p128 = por %p126, %p127
      %s130 = sadd.s32 %s129, 1
      %p133 = scmp.eq.s32.totalorder %s32, 1
      %p134 = scmp.ne.s32.totalorder %s129, %s131
      %p135 = scmp.eq.s32.totalorder %s32, 0
      %p136 = por %p134, %p135
      %p137 = scmp.ne.s32.totalorder %s129, %s131
      %p138 = scmp.eq.s32.totalorder %s37, 1
      %p139 = por %p137, %p138
      %p140 = scmp.ne.s32.totalorder %s131, %s132
      %p141 = scmp.eq.s32.totalorder %s37, 0
      %p142 = por %p140, %p141
      %p143 = scmp.ne.s32.totalorder %s131, %s132
      %p144 = scmp.eq.s32.totalorder %s38, 1
      %p145 = por %p143, %p144
      %p147 = scmp.ne.s32.totalorder %s132, %s146
      %p148 = scmp.eq.s32.totalorder %s38, 0
      %p149 = por %p147, %p148
      %s151 = sadd.s32 %s150, 1
      %p154 = scmp.eq.s32.totalorder %s32, 1
      %p155 = scmp.ne.s32.totalorder %s150, %s152
      %p156 = scmp.eq.s32.totalorder %s32, 0
      %p157 = por %p155, %p156
      %p158 = scmp.ne.s32.totalorder %s150, %s152
      %p159 = scmp.eq.s32.totalorder %s37, 1
      %p160 = por %p158, %p159
      %p161 = scmp.ne.s32.totalorder %s152, %s153
      %p162 = scmp.eq.s32.totalorder %s37, 0
      %p163 = por %p161, %p162
      %p164 = scmp.ne.s32.totalorder %s152, %s153
      %p165 = scmp.eq.s32.totalorder %s38, 1
      %p166 = por %p164, %p165
      %p168 = scmp.ne.s32.totalorder %s153, %s167
      %p169 = scmp.eq.s32.totalorder %s38, 0
      %p170 = por %p168, %p169
      %s172 = sadd.s32 %s171, 1
      %p175 = scmp.eq.s32.totalorder %s32, 1
      %p176 = scmp.ne.s32.totalorder %s171, %s173
      %p177 = scmp.eq.s32.totalorder %s32, 0
      %p178 = por %p176, %p177
      %p179 = scmp.ne.s32.totalorder %s171, %s173
      %p180 = scmp.eq.s32.totalorder %s37, 1
      %p181 = por %p179, %p180
      %p182 = scmp.ne.s32.totalorder %s173, %s174
      %p183 = scmp.eq.s32.totalorder %s37, 0
      %p184 = por %p182, %p183
      %p185 = scmp.ne.s32.totalorder %s173, %s174
      %p186 = scmp.eq.s32.totalorder %s38, 1
      %p187 = por %p185, %p186
      %p189 = scmp.ne.s32.totalorder %s174, %s188
      %p190 = scmp.eq.s32.totalorder %s38, 0
      %p191 = por %p189, %p190
      %s193 = sadd.s32 %s192, 1
      %p196 = scmp.eq.s32.totalorder %s32, 1
      %p197 = scmp.ne.s32.totalorder %s192, %s194
      %p198 = scmp.eq.s32.totalorder %s32, 0
      %p199 = por %p197, %p198
      %p200 = scmp.ne.s32.totalorder %s192, %s194
      %p201 = scmp.eq.s32.totalorder %s37, 1
      %p202 = por %p200, %p201
      %p203 = scmp.ne.s32.totalorder %s194, %s195
      %p204 = scmp.eq.s32.totalorder %s37, 0
      %p205 = por %p203, %p204
      %p206 = scmp.ne.s32.totalorder %s194, %s195
      %p207 = scmp.eq.s32.totalorder %s38, 1
      %p208 = por %p206, %p207
      %p210 = scmp.ne.s32.totalorder %s195, %s209
      %p211 = scmp.eq.s32.totalorder %s38, 0
      %p212 = por %p210, %p211
      %s214 = sadd.s32 %s213, 1
      %p217 = scmp.eq.s32.totalorder %s32, 1
      %p218 = scmp.ne.s32.totalorder %s213, %s215
      %p219 = scmp.eq.s32.totalorder %s32, 0
      %p220 = por %p218, %p219
      %p221 = scmp.ne.s32.totalorder %s213, %s215
      %p222 = scmp.eq.s32.totalorder %s37, 1
      %p223 = por %p221, %p222
      %p224 = scmp.ne.s32.totalorder %s215, %s216
      %p225 = scmp.eq.s32.totalorder %s37, 0
      %p226 = por %p224, %p225
      %p227 = scmp.ne.s32.totalorder %s215, %s216
      %p228 = scmp.eq.s32.totalorder %s38, 1
      %p229 = por %p227, %p228
      %p231 = scmp.ne.s32.totalorder %s216, %s230
      %p232 = scmp.eq.s32.totalorder %s38, 0
      %p233 = por %p231, %p232
      %s235 = sadd.s32 %s234, 1
      %p238 = scmp.eq.s32.totalorder %s32, 1
      %p239 = scmp.ne.s32.totalorder %s234, %s236
      %p240 = scmp.eq.s32.totalorder %s32, 0
      %p241 = por %p239, %p240
      %p242 = scmp.ne.s32.totalorder %s234, %s236
      %p243 = scmp.eq.s32.totalorder %s37, 1
      %p244 = por %p242, %p243
      %p245 = scmp.ne.s32.totalorder %s236, %s237
      %p246 = scmp.eq.s32.totalorder %s37, 0
      %p247 = por %p245, %p246
      %p248 = scmp.ne.s32.totalorder %s236, %s237
      %p249 = scmp.eq.s32.totalorder %s38, 1
      %p250 = por %p248, %p249
      %p252 = scmp.ne.s32.totalorder %s237, %s251
      %p253 = scmp.eq.s32.totalorder %s38, 0
      %p254 = por %p252, %p253
      %s256 = sadd.s32 %s255, 1
      %p259 = scmp.eq.s32.totalorder %s32, 1
      %p260 = scmp.ne.s32.totalorder %s255, %s257
      %p261 = scmp.eq.s32.totalorder %s32, 0
      %p262 = por %p260, %p261
      %p263 = scmp.ne.s32.totalorder %s255, %s257
      %p264 = scmp.eq.s32.totalorder %s37, 1
      %p265 = por %p263, %p264
      %p266 = scmp.ne.s32.totalorder %s257, %s258
      %p267 = scmp.eq.s32.totalorder %s37, 0
      %p268 = por %p266, %p267
      %p269 = scmp.ne.s32.totalorder %s257, %s258
      %p270 = scmp.eq.s32.totalorder %s38, 1
      %p271 = por %p269, %p270
      %p273 = scmp.ne.s32.totalorder %s258, %s272
      %p274 = scmp.eq.s32.totalorder %s38, 0
      %p275 = por %p273, %p274
      %s277 = sadd.s32 %s276, 1
      %p280 = scmp.eq.s32.totalorder %s32, 1
      %p281 = scmp.ne.s32.totalorder %s276, %s278
      %p282 = scmp.eq.s32.totalorder %s32, 0
      %p283 = por %p281, %p282
      %p284 = scmp.ne.s32.totalorder %s276, %s278
      %p285 = scmp.eq.s32.totalorder %s37, 1
      %p286 = por %p284, %p285
      %p287 = scmp.ne.s32.totalorder %s278, %s279
      %p288 = scmp.eq.s32.totalorder %s37, 0
      %p289 = por %p287, %p288
      %p290 = scmp.ne.s32.totalorder %s278, %s279
      %p291 = scmp.eq.s32.totalorder %s38, 1
      %p292 = por %p290, %p291
      %p294 = scmp.ne.s32.totalorder %s279, %s293
      %p295 = scmp.eq.s32.totalorder %s38, 0
      %p296 = por %p294, %p295
      %s298 = sadd.s32 %s297, 1
      %p301 = scmp.eq.s32.totalorder %s32, 1
      %p302 = scmp.ne.s32.totalorder %s297, %s299
      %p303 = scmp.eq.s32.totalorder %s32, 0
      %p304 = por %p302, %p303
      %p305 = scmp.ne.s32.totalorder %s297, %s299
      %p306 = scmp.eq.s32.totalorder %s37, 1
      %p307 = por %p305, %p306
      %p308 = scmp.ne.s32.totalorder %s299, %s300
      %p309 = scmp.eq.s32.totalorder %s37, 0
      %p310 = por %p308, %p309
      %p311 = scmp.ne.s32.totalorder %s299, %s300
      %p312 = scmp.eq.s32.totalorder %s38, 1
      %p313 = por %p311, %p312
      %p315 = scmp.ne.s32.totalorder %s300, %s314
      %p316 = scmp.eq.s32.totalorder %s38, 0
      %p317 = por %p315, %p316
      %s318 = ssub.s32 %s32, %s39
      %p319 = scmp.eq.s32.totalorder %s318, 0
      %s321 = sadd.s32 %s320, 1
      %s322 = scalar_select %p319, %s320, %s321
      %p325 = pneg %p319
      %p326 = scmp.eq.s32.totalorder %s32, 1
      %p327 = por %p325, %p326
      %p328 = scmp.ne.s32.totalorder %s320, %s323
      %p329 = scmp.eq.s32.totalorder %s32, 0
      %p330 = por %p328, %p329
      %p331 = scmp.ne.s32.totalorder %s320, %s323
      %p332 = scmp.eq.s32.totalorder %s37, 1
      %p333 = por %p331, %p332
      %p334 = scmp.ne.s32.totalorder %s323, %s324
      %p335 = scmp.eq.s32.totalorder %s37, 0
      %p336 = por %p334, %p335
      %p337 = scmp.ne.s32.totalorder %s323, %s324
      %p338 = scmp.eq.s32.totalorder %s38, 1
      %p339 = por %p337, %p338
      %p341 = scmp.ne.s32.totalorder %s324, %s340
      %p342 = scmp.eq.s32.totalorder %s38, 0
      %p343 = por %p341, %p342
      %s344 = ssub.s32 %s32, %s39
      %p345 = scmp.eq.s32.totalorder %s344, 0
      %s347 = sadd.s32 %s346, 1
      %s348 = scalar_select %p345, %s346, %s347
      %p351 = pneg %p345
      %p352 = scmp.eq.s32.totalorder %s32, 1
      %p353 = por %p351, %p352
      %p354 = scmp.ne.s32.totalorder %s346, %s349
      %p355 = scmp.eq.s32.totalorder %s32, 0
      %p356 = por %p354, %p355
      %p357 = scmp.ne.s32.totalorder %s346, %s349
      %p358 = scmp.eq.s32.totalorder %s37, 1
      %p359 = por %p357, %p358
      %p360 = scmp.ne.s32.totalorder %s349, %s350
      %p361 = scmp.eq.s32.totalorder %s37, 0
      %p362 = por %p360, %p361
      %p363 = scmp.ne.s32.totalorder %s349, %s350
      %p364 = scmp.eq.s32.totalorder %s38, 1
      %p365 = por %p363, %p364
      %p367 = scmp.ne.s32.totalorder %s350, %s366
      %p368 = scmp.eq.s32.totalorder %s38, 0
      %p369 = por %p367, %p368
      %p370 = scmp.le.s32.totalorder 1, %s32
      %p371 = scmp.lt.s32.totalorder %s32, 3
      %p372 = pnand %p370, %p371
      %p373 = pneg %p372
      // Predicated region
      $region9: #{tpu_custom_call.1} parent=5 // pred_check
        _
      $region10: #{tpu_custom_call.1} parent=5 // pred_check_branch
        %375 = sbr.rel (%p372) target = $region12
      $region11: #{tpu_custom_call.1} parent=5 // pred_region
        %s376 = ssub.s32 %s32, 1
        // Predicated region
        $region13: #{tpu_custom_call.1} parent=11 // pred_check
          %p377 = pneg %p79
        $region14: #{tpu_custom_call.1} parent=11 // pred_check_branch
          %379 = sbr.rel (%p377) target = $region16
        $region15: #{tpu_custom_call.1} parent=11 // pred_region
          _
        $region16: #{tpu_custom_call.1} parent=11 // pred_fallthru
          _
        // Predicated region
        $region17: #{tpu_custom_call.1} parent=11 // pred_check
          %p380 = pneg %p100
        $region18: #{tpu_custom_call.1} parent=11 // pred_check_branch
          %382 = sbr.rel (%p380) target = $region20
        $region19: #{tpu_custom_call.1} parent=11 // pred_region
          _
        $region20: #{tpu_custom_call.1} parent=11 // pred_fallthru
          _
        // Predicated region
        $region21: #{tpu_custom_call.1} parent=11 // pred_check
          %p383 = pneg %p121
        $region22: #{tpu_custom_call.1} parent=11 // pred_check_branch
          %385 = sbr.rel (%p383) target = $region24
        $region23: #{tpu_custom_call.1} parent=11 // pred_region
          _
        $region24: #{tpu_custom_call.1} parent=11 // pred_fallthru
          _
        // Predicated region
        $region25: #{tpu_custom_call.1} parent=11 // pred_check
          %p386 = pneg %p142
        $region26: #{tpu_custom_call.1} parent=11 // pred_check_branch
          %388 = sbr.rel (%p386) target = $region28
        $region27: #{tpu_custom_call.1} parent=11 // pred_region
          _
        $region28: #{tpu_custom_call.1} parent=11 // pred_fallthru
          _
        // Predicated region
        $region29: #{tpu_custom_call.1} parent=11 // pred_check
          %p389 = pneg %p163
        $region30: #{tpu_custom_call.1} parent=11 // pred_check_branch
          %391 = sbr.rel (%p389) target = $region32
        $region31: #{tpu_custom_call.1} parent=11 // pred_region
          %s393 = ssub.s32 16, 16
          %394 = vsyncadd [#allocation6], %s393
          %s396 = sshll.u32 [#allocation5], 4
          %s397 = int_to_ptr.vmem [resolvable:$true] %s396
          %399 = dma.hbm_to_vmem [thread:$0]  %s5, 16, %s397, [#allocation6]
        $region32: #{tpu_custom_call.1} parent=11 // pred_fallthru
          _
        // Predicated region
        $region33: #{tpu_custom_call.1} parent=11 // pred_check
          %p400 = pneg %p184
        $region34: #{tpu_custom_call.1} parent=11 // pred_check_branch
          %402 = sbr.rel (%p400) target = $region36
        $region35: #{tpu_custom_call.1} parent=11 // pred_region
          %s404 = ssub.s32 16, 16
          %405 = vsyncadd [#allocation6], %s404
          %s407 = sshll.u32 [#allocation7], 4
          %s408 = int_to_ptr.vmem [resolvable:$true] %s407
          %410 = dma.hbm_to_vmem [thread:$0]  %s6, 16, %s408, [#allocation6]
        $region36: #{tpu_custom_call.1} parent=11 // pred_fallthru
          _
        // Predicated region
        $region37: #{tpu_custom_call.1} parent=11 // pred_check
          %p411 = pneg %p205
        $region38: #{tpu_custom_call.1} parent=11 // pred_check_branch
          %413 = sbr.rel (%p411) target = $region40
        $region39: #{tpu_custom_call.1} parent=11 // pred_region
          _
        $region40: #{tpu_custom_call.1} parent=11 // pred_fallthru
          _
        // Predicated region
        $region41: #{tpu_custom_call.1} parent=11 // pred_check
          %p414 = pneg %p226
        $region42: #{tpu_custom_call.1} parent=11 // pred_check_branch
          %416 = sbr.rel (%p414) target = $region44
        $region43: #{tpu_custom_call.1} parent=11 // pred_region
          %s418 = ssub.s32 16, 16
          %419 = vsyncadd [#allocation9], %s418
          %s421 = sshll.u32 [#allocation8], 4
          %s422 = int_to_ptr.vmem [resolvable:$true] %s421
          %424 = dma.hbm_to_vmem [thread:$0]  %s8, 16, %s422, [#allocation9]
        $region44: #{tpu_custom_call.1} parent=11 // pred_fallthru
          _
        // Predicated region
        $region45: #{tpu_custom_call.1} parent=11 // pred_check
          %p425 = pneg %p247
        $region46: #{tpu_custom_call.1} parent=11 // pred_check_branch
          %427 = sbr.rel (%p425) target = $region48
        $region47: #{tpu_custom_call.1} parent=11 // pred_region
          _
        $region48: #{tpu_custom_call.1} parent=11 // pred_fallthru
          _
        // Predicated region
        $region49: #{tpu_custom_call.1} parent=11 // pred_check
          %p428 = pneg %p268
        $region50: #{tpu_custom_call.1} parent=11 // pred_check_branch
          %430 = sbr.rel (%p428) target = $region52
        $region51: #{tpu_custom_call.1} parent=11 // pred_region
          _
        $region52: #{tpu_custom_call.1} parent=11 // pred_fallthru
          _
        // Predicated region
        $region53: #{tpu_custom_call.1} parent=11 // pred_check
          %p431 = pneg %p289
        $region54: #{tpu_custom_call.1} parent=11 // pred_check_branch
          %433 = sbr.rel (%p431) target = $region56
        $region55: #{tpu_custom_call.1} parent=11 // pred_region
          _
        $region56: #{tpu_custom_call.1} parent=11 // pred_fallthru
          _
        // Predicated region
        $region57: #{tpu_custom_call.1} parent=11 // pred_check
          %p434 = pneg %p310
        $region58: #{tpu_custom_call.1} parent=11 // pred_check_branch
          %436 = sbr.rel (%p434) target = $region60
        $region59: #{tpu_custom_call.1} parent=11 // pred_region
          _
        $region60: #{tpu_custom_call.1} parent=11 // pred_fallthru
          _
      $region12: #{tpu_custom_call.1} parent=5 // pred_fallthru
        _
      %p437 = scmp.lt.s32.totalorder %s32, 2
      // Predicated region
      $region61: #{tpu_custom_call.1} parent=5 // pred_check
        %p438 = pneg %p437
      $region62: #{tpu_custom_call.1} parent=5 // pred_check_branch
        %440 = sbr.rel (%p438) target = $region64
      $region63: #{tpu_custom_call.1} parent=5 // pred_region
        // Predicated region
        $region65: #{tpu_custom_call.1} parent=63 // pred_check
          %p441 = pneg %p52
        $region66: #{tpu_custom_call.1} parent=63 // pred_check_branch
          %443 = sbr.rel (%p441) target = $region68
        $region67: #{tpu_custom_call.1} parent=63 // pred_region
          %s444 = sand.u32 %s42, 1
          %s445 = scalar_lea.sflag [#allocation3], %s444
          %s446 = sand.u32 %s42, 1
          %s447 = smul.addr %s446, 8
          %s448 = scalar_lea.vmem [#allocation2], %s447
          %s450 = ssub.s32 128, 128
          %451 = vsyncadd %s445, %s450
          %s452 = smul.addr %s32, 128
          %s453 = scalar_lea.hbm %s0, %s452
          %s455 = sshll.u32 %s448, 4
          %s456 = int_to_ptr.vmem [resolvable:$true] %s455
          %458 = dma.hbm_to_vmem [thread:$0]  %s453, 128, %s456, %s445
        $region68: #{tpu_custom_call.1} parent=63 // pred_fallthru
          _
      $region64: #{tpu_custom_call.1} parent=5 // pred_fallthru
        _
      %p459 = scmp.le.s32.totalorder 1, %s32
      %p460 = scmp.lt.s32.totalorder %s32, 3
      %p461 = pnand %p459, %p460
      %p462 = pneg %p461
      // Predicated region
      $region69: #{tpu_custom_call.1} parent=5 // pred_check
        _
      $region70: #{tpu_custom_call.1} parent=5 // pred_check_branch
        %464 = sbr.rel (%p461) target = $region72
      $region71: #{tpu_custom_call.1} parent=5 // pred_region
        %s465 = ssub.s32 %s32, 1
        %s466 = sand.u32 %s45, 1
        %s467 = scalar_lea.sflag [#allocation3], %s466
        %s468 = sand.u32 %s45, 1
        %s469 = smul.addr %s468, 8
        %s470 = scalar_lea.vmem [#allocation2], %s469
        // Predicated region
        $region73: #{tpu_custom_call.1} parent=71 // pred_check
          %p471 = pneg %p58
        $region74: #{tpu_custom_call.1} parent=71 // pred_check_branch
          %473 = sbr.rel (%p471) target = $region76
        $region75: #{tpu_custom_call.1} parent=71 // pred_region
          %474 = dma.done %s467, 128
        $region76: #{tpu_custom_call.1} parent=71 // pred_fallthru
          _
        // Predicated region
        $region77: #{tpu_custom_call.1} parent=71 // pred_check
          %p475 = pneg %p163
        $region78: #{tpu_custom_call.1} parent=71 // pred_check_branch
          %477 = sbr.rel (%p475) target = $region80
        $region79: #{tpu_custom_call.1} parent=71 // pred_region
          %478 = dma.done [#allocation6], 16
        $region80: #{tpu_custom_call.1} parent=71 // pred_fallthru
          _
        // Predicated region
        $region81: #{tpu_custom_call.1} parent=71 // pred_check
          %p479 = pneg %p184
        $region82: #{tpu_custom_call.1} parent=71 // pred_check_branch
          %481 = sbr.rel (%p479) target = $region84
        $region83: #{tpu_custom_call.1} parent=71 // pred_region
          %482 = dma.done [#allocation6], 16
        $region84: #{tpu_custom_call.1} parent=71 // pred_fallthru
          _
        // Predicated region
        $region85: #{tpu_custom_call.1} parent=71 // pred_check
          %p483 = pneg %p226
        $region86: #{tpu_custom_call.1} parent=71 // pred_check_branch
          %485 = sbr.rel (%p483) target = $region88
        $region87: #{tpu_custom_call.1} parent=71 // pred_region
          %486 = dma.done [#allocation9], 16
        $region88: #{tpu_custom_call.1} parent=71 // pred_fallthru
          _
        %s487 = sand.u32 %s45, 1
        %s488 = scalar_lea.sflag [#allocation3], %s487
        %s489 = sand.u32 %s45, 1
        %s490 = smul.addr %s489, 8
        %s491 = scalar_lea.vmem [#allocation2], %s490
        %p492 = pneg %p58
        %p493 = pneg %p55
        %p494 = pneg %p79
        %p495 = pneg %p76
        %p496 = pneg %p100
        %p497 = pneg %p97
        %p498 = pneg %p121
        %p499 = pneg %p118
        %p500 = pneg %p142
        %p501 = pneg %p139
        %p502 = pneg %p163
        %p503 = pneg %p160
        %p504 = pneg %p184
        %p505 = pneg %p181
        %p506 = pneg %p205
        %p507 = pneg %p202
        %p508 = pneg %p226
        %p509 = pneg %p223
        %p510 = pneg %p247
        %p511 = pneg %p244
        %p512 = pneg %p268
        %p513 = pneg %p265
        %p514 = pneg %p289
        %p515 = pneg %p286
        %p516 = pneg %p310
        %p517 = pneg %p307
        %p518 = pneg %p336
        %p519 = pneg %p333
        %s520 = sand.u32 %s323, 1
        %s521 = scalar_lea.sflag [#allocation4], %s520
        %s522 = sand.u32 %s323, 1
        %s523 = smul.addr %s522, 8
        %s524 = scalar_lea.vmem [#allocation10], %s523
        %p525 = pneg %p362
        %p526 = pneg %p359
        %s527 = sand.u32 %s349, 1
        %s528 = scalar_lea.sflag [#allocation12], %s527
        %s529 = sand.u32 %s349, 1
        %s530 = smul.addr %s529, 32
        %s531 = scalar_lea.vmem [#allocation11], %s530
        %v532 = vld [vmem:[%s470] sm:$0xff]
        %v533 = vld [vmem:[%s1] sm:$0xff]
        %v534 = vld [vmem:[%s1 + $0x8] sm:$0xff]
        %v535 = vld [vmem:[%s1 + $0x10] sm:$0xff]
        %v536 = vld [vmem:[%s1 + $0x18] sm:$0xff]
        %v537 = vld [vmem:[%s2] sm:$0x1]
        %v539 = vlaneseq
        %v540 = vshrl.u32 %v539, 7
        %v541 = vsub.s32 0, %v540
        %v542 = vrot.slane %v537, %v541
        %vm544 = vcmask 261120
        %v546 = vsel %vm544, %v532, 0
        %548 = vmatprep.subr.mxu0 0.0
        %549 = vmatpush1.msra.mxu0 %v533
        %550 = vmatprep.subr.mxu0 0.0
        %551 = vmatpush1.msra.mxu0 %v534
        %552 = vmatprep.subr.mxu0 0.0
        %553 = vmatpush1.msra.mxu0 %v535
        %554 = vmatprep.subr.mxu0 0.0
        %555 = vmatpush1.msra.mxu0 %v536
        %556 = vmatprep.subr.mxu0 0.0
        %557 = vmatpush1.msra.mxu0 0.0
        %558 = vmatprep.subr.mxu0 0.0
        %559 = vmatpush1.msra.mxu0 0.0
        %560 = vmatprep.subr.mxu0 0.0
        %561 = vmatpush1.msra.mxu0 0.0
        %562 = vmatprep.subr.mxu0 0.0
        %563 = vmatpush1.msra.mxu0 0.0
        %564 = vmatprep.subr.mxu0 0.0
        %565 = vmatpush1.msra.mxu0 0.0
        %566 = vmatprep.subr.mxu0 0.0
        %567 = vmatpush1.msra.mxu0 0.0
        %568 = vmatprep.subr.mxu0 0.0
        %569 = vmatpush1.msra.mxu0 0.0
        %570 = vmatprep.subr.mxu0 0.0
        %571 = vmatpush1.msra.mxu0 0.0
        %572 = vmatprep.subr.mxu0 0.0
        %573 = vmatpush1.msra.mxu0 0.0
        %574 = vmatprep.subr.mxu0 0.0
        %575 = vmatpush1.msra.mxu0 0.0
        %576 = vmatprep.subr.mxu0 0.0
        %577 = vmatpush1.msra.mxu0 0.0
        %578 = vmatprep.subr.mxu0 0.0
        %579 = vmatpush1.msra.mxu0 0.0
        %580 = vmatprep.subr.mxu0 0.0
        %581 = vmatpush1.msra.mxu0 0.0
        %582 = vmatprep.subr.mxu0 0.0
        %583 = vmatpush1.msra.mxu0 0.0
        %584 = vmatprep.subr.mxu0 0.0
        %585 = vmatpush1.msra.mxu0 0.0
        %586 = vmatprep.subr.mxu0 0.0
        %587 = vmatpush1.msra.mxu0 0.0
        %588 = vmatprep.subr.mxu0 0.0
        %589 = vmatpush1.msra.mxu0 0.0
        %590 = vmatprep.subr.mxu0 0.0
        %591 = vmatpush1.msra.mxu0 0.0
        %592 = vmatprep.subr.mxu0 0.0
        %593 = vmatpush1.msra.mxu0 0.0
        %594 = vmatprep.subr.mxu0 0.0
        %595 = vmatpush1.msra.mxu0 0.0
        %596 = vmatprep.subr.mxu0 0.0
        %597 = vmatpush1.msra.mxu0 0.0
        %598 = vmatprep.subr.mxu0 0.0
        %599 = vmatpush1.msra.mxu0 0.0
        %600 = vmatprep.subr.mxu0 0.0
        %601 = vmatpush1.msra.mxu0 0.0
        %602 = vmatprep.subr.mxu0 0.0
        %603 = vmatpush1.msra.mxu0 0.0
        %604 = vmatprep.subr.mxu0 0.0
        %605 = vmatpush1.msra.mxu0 0.0
        %606 = vmatprep.subr.mxu0 0.0
        %607 = vmatpush1.msra.mxu0 0.0
        %608 = vmatprep.subr.mxu0 0.0
        %609 = vmatpush1.msra.mxu0 0.0
        %610 = vmatprep.subr.mxu0 0.0
        %611 = vmatpush1.msra.mxu0 0.0
        %612 = vmatprep.mubr.f32.mxu0 0.0
        %613 = vmatmul.mubr.f32.gmra.mrb[0].mxu0 %v546
        %v614 = vpop.f32.mrb[0].mxu0
        %v615 = vadd.f32 %v542, %v614
        %v616 = vpop.f32.mrb[0].mxu0
        %617 = vdwg.mxu0
        %619 = vrot.lane.b32.xlu0 %v615, 120
        %v620 = vpop.permute.xlu0 %619
        %622 = vrot.lane.b32.xlu0 %v615, 112
        %v623 = vpop.permute.xlu0 %622
        %625 = vrot.lane.b32.xlu0 %v615, 104
        %v626 = vpop.permute.xlu0 %625
        %v628 = vcombine.low %v615, %v623
        %v629 = vcombine.high %v615, %v623
        %v631 = vunpack.c.l.s4 1983009808
        %v632 = vunpack.c.0.s8 %v631
        %v633 = vlaneseq
        %v634 = vshrl.u32 %v633, 7
        %v635 = vsub.s32 %v632, %v634
        %v636 = vrot.slane %v628, %v635
        %v638 = vunpack.c.l.s4 1983009808
        %v639 = vunpack.c.0.s8 %v638
        %v640 = vlaneseq
        %v641 = vshrl.u32 %v640, 7
        %v642 = vsub.s32 %v639, %v641
        %v643 = vrot.slane %v629, %v642
        %v644 = vcombine.low %v620, %v626
        %v645 = vcombine.high %v620, %v626
        %v647 = vunpack.c.l.s4 1983009808
        %v648 = vunpack.c.0.s8 %v647
        %v649 = vlaneseq
        %v650 = vshrl.u32 %v649, 7
        %v651 = vsub.s32 %v648, %v650
        %v652 = vrot.slane %v644, %v651
        %v654 = vunpack.c.l.s4 1983009808
        %v655 = vunpack.c.0.s8 %v654
        %v656 = vlaneseq
        %v657 = vshrl.u32 %v656, 7
        %v658 = vsub.s32 %v655, %v657
        %v659 = vrot.slane %v645, %v658
        %v660 = vcombine.low %v636, %v652
        %v661 = vcombine.high %v636, %v652
        %v663 = vunpack.c.l.s4 1934713408
        %v664 = vunpack.c.0.s8 %v663
        %v665 = vlaneseq
        %v666 = vshrl.u32 %v665, 7
        %v667 = vsub.s32 %v664, %v666
        %v668 = vrot.slane %v660, %v667
        %v670 = vunpack.c.l.s4 1934713408
        %v671 = vunpack.c.0.s8 %v670
        %v672 = vlaneseq
        %v673 = vshrl.u32 %v672, 7
        %v674 = vsub.s32 %v671, %v673
        %v675 = vrot.slane %v661, %v674
        %v676 = vcombine.low %v643, %v659
        %v677 = vcombine.high %v643, %v659
        %v679 = vunpack.c.l.s4 1934713408
        %v680 = vunpack.c.0.s8 %v679
        %v681 = vlaneseq
        %v682 = vshrl.u32 %v681, 7
        %v683 = vsub.s32 %v680, %v682
        %v684 = vrot.slane %v676, %v683
        %v686 = vunpack.c.l.s4 1934713408
        %v687 = vunpack.c.0.s8 %v686
        %v688 = vlaneseq
        %v689 = vshrl.u32 %v688, 7
        %v690 = vsub.s32 %v687, %v689
        %v691 = vrot.slane %v677, %v690
        %v692 = vcombine.high %v668, 0.0
        %v693 = vcombine.high %v675, 0.0
        %v694 = vcombine.high %v684, 0.0
        %v695 = vcombine.high %v691, 0.0
        %v696 = vcombine.low %v668, %v675
        %v698 = vunpack.c.l.s4 1983009808
        %v699 = vunpack.c.0.s8 %v698
        %v700 = vlaneseq
        %v701 = vshrl.u32 %v700, 7
        %v702 = vsub.s32 %v699, %v701
        %v703 = vrot.slane %v696, %v702
        %v704 = vcombine.low %v692, %v693
        %v706 = vunpack.c.l.s4 1983009808
        %v707 = vunpack.c.0.s8 %v706
        %v708 = vlaneseq
        %v709 = vshrl.u32 %v708, 7
        %v710 = vsub.s32 %v707, %v709
        %v711 = vrot.slane %v704, %v710
        %v712 = vcombine.low %v684, %v691
        %v714 = vunpack.c.l.s4 1983009808
        %v715 = vunpack.c.0.s8 %v714
        %v716 = vlaneseq
        %v717 = vshrl.u32 %v716, 7
        %v718 = vsub.s32 %v715, %v717
        %v719 = vrot.slane %v712, %v718
        %v720 = vcombine.low %v694, %v695
        %v722 = vunpack.c.l.s4 1983009808
        %v723 = vunpack.c.0.s8 %v722
        %v724 = vlaneseq
        %v725 = vshrl.u32 %v724, 7
        %v726 = vsub.s32 %v723, %v725
        %v727 = vrot.slane %v720, %v726
        %v728 = vcombine.low %v703, %v711
        %v729 = vcombine.high %v703, %v711
        %v731 = vunpack.c.l.s4 1934713408
        %v732 = vunpack.c.0.s8 %v731
        %v733 = vlaneseq
        %v734 = vshrl.u32 %v733, 7
        %v735 = vsub.s32 %v732, %v734
        %v736 = vrot.slane %v728, %v735
        %v738 = vunpack.c.l.s4 1934713408
        %v739 = vunpack.c.0.s8 %v738
        %v740 = vlaneseq
        %v741 = vshrl.u32 %v740, 7
        %v742 = vsub.s32 %v739, %v741
        %v743 = vrot.slane %v729, %v742
        %v744 = vcombine.low %v719, %v727
        %v745 = vcombine.high %v719, %v727
        %v747 = vunpack.c.l.s4 1934713408
        %v748 = vunpack.c.0.s8 %v747
        %v749 = vlaneseq
        %v750 = vshrl.u32 %v749, 7
        %v751 = vsub.s32 %v748, %v750
        %v752 = vrot.slane %v744, %v751
        %v754 = vunpack.c.l.s4 1934713408
        %v755 = vunpack.c.0.s8 %v754
        %v756 = vlaneseq
        %v757 = vshrl.u32 %v756, 7
        %v758 = vsub.s32 %v755, %v757
        %v759 = vrot.slane %v745, %v758
        %v760 = vcombine.low %v736, %v752
        %v761 = vcombine.high %v736, %v752
        %v762 = vcombine.low %v743, %v759
        %v763 = vcombine.high %v743, %v759
        %764 = vrot.lane.b32.xlu0 %v615, 96
        %v765 = vpop.permute.xlu0 %764
        %766 = vrot.lane.b32.xlu0 %v620, 96
        %v767 = vpop.permute.xlu0 %766
        %768 = vrot.lane.b32.xlu0 %v623, 96
        %v769 = vpop.permute.xlu0 %768
        %770 = vrot.lane.b32.xlu0 %v626, 96
        %v771 = vpop.permute.xlu0 %770
        %v776 = vcombine.low %v765, %v769
        %v777 = vcombine.high %v765, %v769
        %v779 = vunpack.c.l.s4 1983009808
        %v780 = vunpack.c.0.s8 %v779
        %v781 = vlaneseq
        %v782 = vshrl.u32 %v781, 7
        %v783 = vsub.s32 %v780, %v782
        %v784 = vrot.slane %v776, %v783
        %v786 = vunpack.c.l.s4 1983009808
        %v787 = vunpack.c.0.s8 %v786
        %v788 = vlaneseq
        %v789 = vshrl.u32 %v788, 7
        %v790 = vsub.s32 %v787, %v789
        %v791 = vrot.slane %v777, %v790
        %v792 = vcombine.low %v767, %v771
        %v793 = vcombine.high %v767, %v771
        %v795 = vunpack.c.l.s4 1983009808
        %v796 = vunpack.c.0.s8 %v795
        %v797 = vlaneseq
        %v798 = vshrl.u32 %v797, 7
        %v799 = vsub.s32 %v796, %v798
        %v800 = vrot.slane %v792, %v799
        %v802 = vunpack.c.l.s4 1983009808
        %v803 = vunpack.c.0.s8 %v802
        %v804 = vlaneseq
        %v805 = vshrl.u32 %v804, 7
        %v806 = vsub.s32 %v803, %v805
        %v807 = vrot.slane %v793, %v806
        %v808 = vcombine.low %v784, %v800
        %v809 = vcombine.high %v784, %v800
        %v811 = vunpack.c.l.s4 1934713408
        %v812 = vunpack.c.0.s8 %v811
        %v813 = vlaneseq
        %v814 = vshrl.u32 %v813, 7
        %v815 = vsub.s32 %v812, %v814
        %v816 = vrot.slane %v808, %v815
        %v818 = vunpack.c.l.s4 1934713408
        %v819 = vunpack.c.0.s8 %v818
        %v820 = vlaneseq
        %v821 = vshrl.u32 %v820, 7
        %v822 = vsub.s32 %v819, %v821
        %v823 = vrot.slane %v809, %v822
        %v824 = vcombine.low %v791, %v807
        %v825 = vcombine.high %v791, %v807
        %v827 = vunpack.c.l.s4 1934713408
        %v828 = vunpack.c.0.s8 %v827
        %v829 = vlaneseq
        %v830 = vshrl.u32 %v829, 7
        %v831 = vsub.s32 %v828, %v830
        %v832 = vrot.slane %v824, %v831
        %v834 = vunpack.c.l.s4 1934713408
        %v835 = vunpack.c.0.s8 %v834
        %v836 = vlaneseq
        %v837 = vshrl.u32 %v836, 7
        %v838 = vsub.s32 %v835, %v837
        %v839 = vrot.slane %v825, %v838
        %v840 = vcombine.high %v816, 0.0
        %v841 = vcombine.high %v823, 0.0
        %v842 = vcombine.high %v832, 0.0
        %v843 = vcombine.high %v839, 0.0
        %844 = vxpose.xlu0.b32.start [1/16] %v816, 128
        %845 = vxpose.xlu0.b32.cont [2/16] 0.0, 128
        %846 = vxpose.xlu0.b32.cont [3/16] 0.0, 128
        %847 = vxpose.xlu0.b32.cont [4/16] 0.0, 128
        %848 = vxpose.xlu0.b32.cont [5/16] 0.0, 128
        %849 = vxpose.xlu0.b32.cont [6/16] 0.0, 128
        %850 = vxpose.xlu0.b32.cont [7/16] 0.0, 128
        %851 = vxpose.xlu0.b32.cont [8/16] 0.0, 128
        %852 = vxpose.xlu0.b32.cont [9/16] 0.0, 128
        %853 = vxpose.xlu0.b32.cont [10/16] 0.0, 128
        %854 = vxpose.xlu0.b32.cont [11/16] 0.0, 128
        %855 = vxpose.xlu0.b32.cont [12/16] 0.0, 128
        %856 = vxpose.xlu0.b32.cont [13/16] 0.0, 128
        %857 = vxpose.xlu0.b32.cont [14/16] 0.0, 128
        %858 = vxpose.xlu0.b32.cont [15/16] 0.0, 128
        %859 = vxpose.xlu0.b32.end [16/16] 0.0, 128
        %v860 = vpop.trf.xlu0
        %v861 = vpop.trf.xlu0
        %v862 = vpop.trf.xlu0
        %v863 = vpop.trf.xlu0
        %v864 = vpop.trf.xlu0
        %v865 = vpop.trf.xlu0
        %v866 = vpop.trf.xlu0
        %v867 = vpop.trf.xlu0
        %v868 = vpop.trf.xlu0
        %v869 = vpop.trf.xlu0
        %v870 = vpop.trf.xlu0
        %v871 = vpop.trf.xlu0
        %v872 = vpop.trf.xlu0
        %v873 = vpop.trf.xlu0
        %v874 = vpop.trf.xlu0
        %v875 = vpop.trf.xlu0
        %876 = vxpose.xlu0.b32.start [1/16] %v840, 128
        %877 = vxpose.xlu0.b32.cont [2/16] 0.0, 128
        %878 = vxpose.xlu0.b32.cont [3/16] 0.0, 128
        %879 = vxpose.xlu0.b32.cont [4/16] 0.0, 128
        %880 = vxpose.xlu0.b32.cont [5/16] 0.0, 128
        %881 = vxpose.xlu0.b32.cont [6/16] 0.0, 128
        %882 = vxpose.xlu0.b32.cont [7/16] 0.0, 128
        %883 = vxpose.xlu0.b32.cont [8/16] 0.0, 128
        %884 = vxpose.xlu0.b32.cont [9/16] 0.0, 128
        %885 = vxpose.xlu0.b32.cont [10/16] 0.0, 128
        %886 = vxpose.xlu0.b32.cont [11/16] 0.0, 128
        %887 = vxpose.xlu0.b32.cont [12/16] 0.0, 128
        %888 = vxpose.xlu0.b32.cont [13/16] 0.0, 128
        %889 = vxpose.xlu0.b32.cont [14/16] 0.0, 128
        %890 = vxpose.xlu0.b32.cont [15/16] 0.0, 128
        %891 = vxpose.xlu0.b32.end [16/16] 0.0, 128
        %v892 = vpop.trf.xlu0
        %v893 = vpop.trf.xlu0
        %v894 = vpop.trf.xlu0
        %v895 = vpop.trf.xlu0
        %v896 = vpop.trf.xlu0
        %v897 = vpop.trf.xlu0
        %v898 = vpop.trf.xlu0
        %v899 = vpop.trf.xlu0
        %v900 = vpop.trf.xlu0
        %v901 = vpop.trf.xlu0
        %v902 = vpop.trf.xlu0
        %v903 = vpop.trf.xlu0
        %v904 = vpop.trf.xlu0
        %v905 = vpop.trf.xlu0
        %v906 = vpop.trf.xlu0
        %v907 = vpop.trf.xlu0
        %908 = vxpose.xlu0.b32.start [1/16] %v823, 128
        %909 = vxpose.xlu0.b32.cont [2/16] 0.0, 128
        %910 = vxpose.xlu0.b32.cont [3/16] 0.0, 128
        %911 = vxpose.xlu0.b32.cont [4/16] 0.0, 128
        %912 = vxpose.xlu0.b32.cont [5/16] 0.0, 128
        %913 = vxpose.xlu0.b32.cont [6/16] 0.0, 128
        %914 = vxpose.xlu0.b32.cont [7/16] 0.0, 128
        %915 = vxpose.xlu0.b32.cont [8/16] 0.0, 128
        %916 = vxpose.xlu0.b32.cont [9/16] 0.0, 128
        %917 = vxpose.xlu0.b32.cont [10/16] 0.0, 128
        %918 = vxpose.xlu0.b32.cont [11/16] 0.0, 128
        %919 = vxpose.xlu0.b32.cont [12/16] 0.0, 128
        %920 = vxpose.xlu0.b32.cont [13/16] 0.0, 128
        %921 = vxpose.xlu0.b32.cont [14/16] 0.0, 128
        %922 = vxpose.xlu0.b32.cont [15/16] 0.0, 128
        %923 = vxpose.xlu0.b32.end [16/16] 0.0, 128
        %v924 = vpop.trf.xlu0
        %v925 = vpop.trf.xlu0
        %v926 = vpop.trf.xlu0
        %v927 = vpop.trf.xlu0
        %v928 = vpop.trf.xlu0
        %v929 = vpop.trf.xlu0
        %v930 = vpop.trf.xlu0
        %v931 = vpop.trf.xlu0
        %v932 = vpop.trf.xlu0
        %v933 = vpop.trf.xlu0
        %v934 = vpop.trf.xlu0
        %v935 = vpop.trf.xlu0
        %v936 = vpop.trf.xlu0
        %v937 = vpop.trf.xlu0
        %v938 = vpop.trf.xlu0
        %v939 = vpop.trf.xlu0
        %940 = vxpose.xlu0.b32.start [1/16] %v841, 128
        %941 = vxpose.xlu0.b32.cont [2/16] 0.0, 128
        %942 = vxpose.xlu0.b32.cont [3/16] 0.0, 128
        %943 = vxpose.xlu0.b32.cont [4/16] 0.0, 128
        %944 = vxpose.xlu0.b32.cont [5/16] 0.0, 128
        %945 = vxpose.xlu0.b32.cont [6/16] 0.0, 128
        %946 = vxpose.xlu0.b32.cont [7/16] 0.0, 128
        %947 = vxpose.xlu0.b32.cont [8/16] 0.0, 128
        %948 = vxpose.xlu0.b32.cont [9/16] 0.0, 128
        %949 = vxpose.xlu0.b32.cont [10/16] 0.0, 128
        %950 = vxpose.xlu0.b32.cont [11/16] 0.0, 128
        %951 = vxpose.xlu0.b32.cont [12/16] 0.0, 128
        %952 = vxpose.xlu0.b32.cont [13/16] 0.0, 128
        %953 = vxpose.xlu0.b32.cont [14/16] 0.0, 128
        %954 = vxpose.xlu0.b32.cont [15/16] 0.0, 128
        %955 = vxpose.xlu0.b32.end [16/16] 0.0, 128
        %v956 = vpop.trf.xlu0
        %v957 = vpop.trf.xlu0
        %v958 = vpop.trf.xlu0
        %v959 = vpop.trf.xlu0
        %v960 = vpop.trf.xlu0
        %v961 = vpop.trf.xlu0
        %v962 = vpop.trf.xlu0
        %v963 = vpop.trf.xlu0
        %v964 = vpop.trf.xlu0
        %v965 = vpop.trf.xlu0
        %v966 = vpop.trf.xlu0
        %v967 = vpop.trf.xlu0
        %v968 = vpop.trf.xlu0
        %v969 = vpop.trf.xlu0
        %v970 = vpop.trf.xlu0
        %v971 = vpop.trf.xlu0
        %972 = vxpose.xlu0.b32.start [1/16] %v832, 128
        %973 = vxpose.xlu0.b32.cont [2/16] 0.0, 128
        %974 = vxpose.xlu0.b32.cont [3/16] 0.0, 128
        %975 = vxpose.xlu0.b32.cont [4/16] 0.0, 128
        %976 = vxpose.xlu0.b32.cont [5/16] 0.0, 128
        %977 = vxpose.xlu0.b32.cont [6/16] 0.0, 128
        %978 = vxpose.xlu0.b32.cont [7/16] 0.0, 128
        %979 = vxpose.xlu0.b32.cont [8/16] 0.0, 128
        %980 = vxpose.xlu0.b32.cont [9/16] 0.0, 128
        %981 = vxpose.xlu0.b32.cont [10/16] 0.0, 128
        %982 = vxpose.xlu0.b32.cont [11/16] 0.0, 128
        %983 = vxpose.xlu0.b32.cont [12/16] 0.0, 128
        %984 = vxpose.xlu0.b32.cont [13/16] 0.0, 128
        %985 = vxpose.xlu0.b32.cont [14/16] 0.0, 128
        %986 = vxpose.xlu0.b32.cont [15/16] 0.0, 128
        %987 = vxpose.xlu0.b32.end [16/16] 0.0, 128
        %v988 = vpop.trf.xlu0
        %v989 = vpop.trf.xlu0
        %v990 = vpop.trf.xlu0
        %v991 = vpop.trf.xlu0
        %v992 = vpop.trf.xlu0
        %v993 = vpop.trf.xlu0
        %v994 = vpop.trf.xlu0
        %v995 = vpop.trf.xlu0
        %v996 = vpop.trf.xlu0
        %v997 = vpop.trf.xlu0
        %v998 = vpop.trf.xlu0
        %v999 = vpop.trf.xlu0
        %v1000 = vpop.trf.xlu0
        %v1001 = vpop.trf.xlu0
        %v1002 = vpop.trf.xlu0
        %v1003 = vpop.trf.xlu0
        %1004 = vxpose.xlu0.b32.start [1/16] %v842, 128
        %1005 = vxpose.xlu0.b32.cont [2/16] 0.0, 128
        %1006 = vxpose.xlu0.b32.cont [3/16] 0.0, 128
        %1007 = vxpose.xlu0.b32.cont [4/16] 0.0, 128
        %1008 = vxpose.xlu0.b32.cont [5/16] 0.0, 128
        %1009 = vxpose.xlu0.b32.cont [6/16] 0.0, 128
        %1010 = vxpose.xlu0.b32.cont [7/16] 0.0, 128
        %1011 = vxpose.xlu0.b32.cont [8/16] 0.0, 128
        %1012 = vxpose.xlu0.b32.cont [9/16] 0.0, 128
        %1013 = vxpose.xlu0.b32.cont [10/16] 0.0, 128
        %1014 = vxpose.xlu0.b32.cont [11/16] 0.0, 128
        %1015 = vxpose.xlu0.b32.cont [12/16] 0.0, 128
        %1016 = vxpose.xlu0.b32.cont [13/16] 0.0, 128
        %1017 = vxpose.xlu0.b32.cont [14/16] 0.0, 128
        %1018 = vxpose.xlu0.b32.cont [15/16] 0.0, 128
        %1019 = vxpose.xlu0.b32.end [16/16] 0.0, 128
        %v1020 = vpop.trf.xlu0
        %v1021 = vpop.trf.xlu0
        %v1022 = vpop.trf.xlu0
        %v1023 = vpop.trf.xlu0
        %v1024 = vpop.trf.xlu0
        %v1025 = vpop.trf.xlu0
        %v1026 = vpop.trf.xlu0
        %v1027 = vpop.trf.xlu0
        %v1028 = vpop.trf.xlu0
        %v1029 = vpop.trf.xlu0
        %v1030 = vpop.trf.xlu0
        %v1031 = vpop.trf.xlu0
        %v1032 = vpop.trf.xlu0
        %v1033 = vpop.trf.xlu0
        %v1034 = vpop.trf.xlu0
        %v1035 = vpop.trf.xlu0
        %1036 = vxpose.xlu0.b32.start [1/16] %v839, 128
        %1037 = vxpose.xlu0.b32.cont [2/16] 0.0, 128
        %1038 = vxpose.xlu0.b32.cont [3/16] 0.0, 128
        %1039 = vxpose.xlu0.b32.cont [4/16] 0.0, 128
        %1040 = vxpose.xlu0.b32.cont [5/16] 0.0, 128
        %1041 = vxpose.xlu0.b32.cont [6/16] 0.0, 128
        %1042 = vxpose.xlu0.b32.cont [7/16] 0.0, 128
        %1043 = vxpose.xlu0.b32.cont [8/16] 0.0, 128
        %1044 = vxpose.xlu0.b32.cont [9/16] 0.0, 128
        %1045 = vxpose.xlu0.b32.cont [10/16] 0.0, 128
        %1046 = vxpose.xlu0.b32.cont [11/16] 0.0, 128
        %1047 = vxpose.xlu0.b32.cont [12/16] 0.0, 128
        %1048 = vxpose.xlu0.b32.cont [13/16] 0.0, 128
        %1049 = vxpose.xlu0.b32.cont [14/16] 0.0, 128
        %1050 = vxpose.xlu0.b32.cont [15/16] 0.0, 128
        %1051 = vxpose.xlu0.b32.end [16/16] 0.0, 128
        %v1052 = vpop.trf.xlu0
        %v1053 = vpop.trf.xlu0
        %v1054 = vpop.trf.xlu0
        %v1055 = vpop.trf.xlu0
        %v1056 = vpop.trf.xlu0
        %v1057 = vpop.trf.xlu0
        %v1058 = vpop.trf.xlu0
        %v1059 = vpop.trf.xlu0
        %v1060 = vpop.trf.xlu0
        %v1061 = vpop.trf.xlu0
        %v1062 = vpop.trf.xlu0
        %v1063 = vpop.trf.xlu0
        %v1064 = vpop.trf.xlu0
        %v1065 = vpop.trf.xlu0
        %v1066 = vpop.trf.xlu0
        %v1067 = vpop.trf.xlu0
        %1068 = vxpose.xlu0.b32.start [1/16] %v843, 128
        %1069 = vxpose.xlu0.b32.cont [2/16] 0.0, 128
        %1070 = vxpose.xlu0.b32.cont [3/16] 0.0, 128
        %1071 = vxpose.xlu0.b32.cont [4/16] 0.0, 128
        %1072 = vxpose.xlu0.b32.cont [5/16] 0.0, 128
        %1073 = vxpose.xlu0.b32.cont [6/16] 0.0, 128
        %1074 = vxpose.xlu0.b32.cont [7/16] 0.0, 128
        %1075 = vxpose.xlu0.b32.cont [8/16] 0.0, 128
        %1076 = vxpose.xlu0.b32.cont [9/16] 0.0, 128
        %1077 = vxpose.xlu0.b32.cont [10/16] 0.0, 128
        %1078 = vxpose.xlu0.b32.cont [11/16] 0.0, 128
        %1079 = vxpose.xlu0.b32.cont [12/16] 0.0, 128
        %1080 = vxpose.xlu0.b32.cont [13/16] 0.0, 128
        %1081 = vxpose.xlu0.b32.cont [14/16] 0.0, 128
        %1082 = vxpose.xlu0.b32.cont [15/16] 0.0, 128
        %1083 = vxpose.xlu0.b32.end [16/16] 0.0, 128
        %v1084 = vpop.trf.xlu0
        %v1085 = vpop.trf.xlu0
        %v1086 = vpop.trf.xlu0
        %v1087 = vpop.trf.xlu0
        %v1088 = vpop.trf.xlu0
        %v1089 = vpop.trf.xlu0
        %v1090 = vpop.trf.xlu0
        %v1091 = vpop.trf.xlu0
        %v1092 = vpop.trf.xlu0
        %v1093 = vpop.trf.xlu0
        %v1094 = vpop.trf.xlu0
        %v1095 = vpop.trf.xlu0
        %v1096 = vpop.trf.xlu0
        %v1097 = vpop.trf.xlu0
        %v1098 = vpop.trf.xlu0
        %v1099 = vpop.trf.xlu0
        %v1100 = vcombine.low %v860, %v924
        %v1101 = vcombine.high %v860, %v924
        %v1103 = vunpack.c.l.s4 1983009808
        %v1104 = vunpack.c.0.s8 %v1103
        %v1105 = vlaneseq
        %v1106 = vshrl.u32 %v1105, 7
        %v1107 = vsub.s32 %v1104, %v1106
        %v1108 = vrot.slane %v1100, %v1107
        %v1110 = vunpack.c.l.s4 1983009808
        %v1111 = vunpack.c.0.s8 %v1110
        %v1112 = vlaneseq
        %v1113 = vshrl.u32 %v1112, 7
        %v1114 = vsub.s32 %v1111, %v1113
        %v1115 = vrot.slane %v1101, %v1114
        %v1116 = vcombine.low %v892, %v956
        %v1117 = vcombine.high %v892, %v956
        %v1119 = vunpack.c.l.s4 1983009808
        %v1120 = vunpack.c.0.s8 %v1119
        %v1121 = vlaneseq
        %v1122 = vshrl.u32 %v1121, 7
        %v1123 = vsub.s32 %v1120, %v1122
        %v1124 = vrot.slane %v1116, %v1123
        %v1126 = vunpack.c.l.s4 1983009808
        %v1127 = vunpack.c.0.s8 %v1126
        %v1128 = vlaneseq
        %v1129 = vshrl.u32 %v1128, 7
        %v1130 = vsub.s32 %v1127, %v1129
        %v1131 = vrot.slane %v1117, %v1130
        %v1132 = vcombine.low %v988, %v1052
        %v1133 = vcombine.high %v988, %v1052
        %v1135 = vunpack.c.l.s4 1983009808
        %v1136 = vunpack.c.0.s8 %v1135
        %v1137 = vlaneseq
        %v1138 = vshrl.u32 %v1137, 7
        %v1139 = vsub.s32 %v1136, %v1138
        %v1140 = vrot.slane %v1132, %v1139
        %v1142 = vunpack.c.l.s4 1983009808
        %v1143 = vunpack.c.0.s8 %v1142
        %v1144 = vlaneseq
        %v1145 = vshrl.u32 %v1144, 7
        %v1146 = vsub.s32 %v1143, %v1145
        %v1147 = vrot.slane %v1133, %v1146
        %v1148 = vcombine.low %v1020, %v1084
        %v1149 = vcombine.high %v1020, %v1084
        %v1151 = vunpack.c.l.s4 1983009808
        %v1152 = vunpack.c.0.s8 %v1151
        %v1153 = vlaneseq
        %v1154 = vshrl.u32 %v1153, 7
        %v1155 = vsub.s32 %v1152, %v1154
        %v1156 = vrot.slane %v1148, %v1155
        %v1158 = vunpack.c.l.s4 1983009808
        %v1159 = vunpack.c.0.s8 %v1158
        %v1160 = vlaneseq
        %v1161 = vshrl.u32 %v1160, 7
        %v1162 = vsub.s32 %v1159, %v1161
        %v1163 = vrot.slane %v1149, %v1162
        %v1164 = vcombine.low %v1108, %v1124
        %v1165 = vcombine.high %v1108, %v1124
        %v1167 = vunpack.c.l.s4 1934713408
        %v1168 = vunpack.c.0.s8 %v1167
        %v1169 = vlaneseq
        %v1170 = vshrl.u32 %v1169, 7
        %v1171 = vsub.s32 %v1168, %v1170
        %v1172 = vrot.slane %v1164, %v1171
        %v1174 = vunpack.c.l.s4 1934713408
        %v1175 = vunpack.c.0.s8 %v1174
        %v1176 = vlaneseq
        %v1177 = vshrl.u32 %v1176, 7
        %v1178 = vsub.s32 %v1175, %v1177
        %v1179 = vrot.slane %v1165, %v1178
        %v1180 = vcombine.low %v1115, %v1131
        %v1181 = vcombine.high %v1115, %v1131
        %v1183 = vunpack.c.l.s4 1934713408
        %v1184 = vunpack.c.0.s8 %v1183
        %v1185 = vlaneseq
        %v1186 = vshrl.u32 %v1185, 7
        %v1187 = vsub.s32 %v1184, %v1186
        %v1188 = vrot.slane %v1180, %v1187
        %v1190 = vunpack.c.l.s4 1934713408
        %v1191 = vunpack.c.0.s8 %v1190
        %v1192 = vlaneseq
        %v1193 = vshrl.u32 %v1192, 7
        %v1194 = vsub.s32 %v1191, %v1193
        %v1195 = vrot.slane %v1181, %v1194
        %v1196 = vcombine.low %v1140, %v1156
        %v1197 = vcombine.high %v1140, %v1156
        %v1199 = vunpack.c.l.s4 1934713408
        %v1200 = vunpack.c.0.s8 %v1199
        %v1201 = vlaneseq
        %v1202 = vshrl.u32 %v1201, 7
        %v1203 = vsub.s32 %v1200, %v1202
        %v1204 = vrot.slane %v1196, %v1203
        %v1206 = vunpack.c.l.s4 1934713408
        %v1207 = vunpack.c.0.s8 %v1206
        %v1208 = vlaneseq
        %v1209 = vshrl.u32 %v1208, 7
        %v1210 = vsub.s32 %v1207, %v1209
        %v1211 = vrot.slane %v1197, %v1210
        %v1212 = vcombine.low %v1147, %v1163
        %v1213 = vcombine.high %v1147, %v1163
        %v1215 = vunpack.c.l.s4 1934713408
        %v1216 = vunpack.c.0.s8 %v1215
        %v1217 = vlaneseq
        %v1218 = vshrl.u32 %v1217, 7
        %v1219 = vsub.s32 %v1216, %v1218
        %v1220 = vrot.slane %v1212, %v1219
        %v1222 = vunpack.c.l.s4 1934713408
        %v1223 = vunpack.c.0.s8 %v1222
        %v1224 = vlaneseq
        %v1225 = vshrl.u32 %v1224, 7
        %v1226 = vsub.s32 %v1223, %v1225
        %v1227 = vrot.slane %v1213, %v1226
        %v1228 = vcombine.low %v1172, %v1204
        %v1229 = vcombine.high %v1172, %v1204
        %v1230 = vcombine.low %v1179, %v1211
        %v1231 = vcombine.high %v1179, %v1211
        %v1232 = vcombine.low %v1188, %v1220
        %v1233 = vcombine.high %v1188, %v1220
        %v1234 = vcombine.low %v1195, %v1227
        %v1235 = vcombine.high %v1195, %v1227
        %1236 = vxpose.xlu0.b32.start [1/16] %v1228, 128
        %1237 = vxpose.xlu0.b32.cont [2/16] 0.0, 128
        %1238 = vxpose.xlu0.b32.cont [3/16] 0.0, 128
        %1239 = vxpose.xlu0.b32.cont [4/16] 0.0, 128
        %1240 = vxpose.xlu0.b32.cont [5/16] 0.0, 128
        %1241 = vxpose.xlu0.b32.cont [6/16] 0.0, 128
        %1242 = vxpose.xlu0.b32.cont [7/16] 0.0, 128
        %1243 = vxpose.xlu0.b32.cont [8/16] 0.0, 128
        %1244 = vxpose.xlu0.b32.cont [9/16] 0.0, 128
        %1245 = vxpose.xlu0.b32.cont [10/16] 0.0, 128
        %1246 = vxpose.xlu0.b32.cont [11/16] 0.0, 128
        %1247 = vxpose.xlu0.b32.cont [12/16] 0.0, 128
        %1248 = vxpose.xlu0.b32.cont [13/16] 0.0, 128
        %1249 = vxpose.xlu0.b32.cont [14/16] 0.0, 128
        %1250 = vxpose.xlu0.b32.cont [15/16] 0.0, 128
        %1251 = vxpose.xlu0.b32.end [16/16] 0.0, 128
        %v1252 = vpop.trf.xlu0
        %v1253 = vpop.trf.xlu0
        %v1254 = vpop.trf.xlu0
        %v1255 = vpop.trf.xlu0
        %v1256 = vpop.trf.xlu0
        %v1257 = vpop.trf.xlu0
        %v1258 = vpop.trf.xlu0
        %v1259 = vpop.trf.xlu0
        %v1260 = vpop.trf.xlu0
        %v1261 = vpop.trf.xlu0
        %v1262 = vpop.trf.xlu0
        %v1263 = vpop.trf.xlu0
        %v1264 = vpop.trf.xlu0
        %v1265 = vpop.trf.xlu0
        %v1266 = vpop.trf.xlu0
        %v1267 = vpop.trf.xlu0
        %1268 = vxpose.xlu0.b32.start [1/16] %v1229, 128
        %1269 = vxpose.xlu0.b32.cont [2/16] 0.0, 128
        %1270 = vxpose.xlu0.b32.cont [3/16] 0.0, 128
        %1271 = vxpose.xlu0.b32.cont [4/16] 0.0, 128
        %1272 = vxpose.xlu0.b32.cont [5/16] 0.0, 128
        %1273 = vxpose.xlu0.b32.cont [6/16] 0.0, 128
        %1274 = vxpose.xlu0.b32.cont [7/16] 0.0, 128
        %1275 = vxpose.xlu0.b32.cont [8/16] 0.0, 128
        %1276 = vxpose.xlu0.b32.cont [9/16] 0.0, 128
        %1277 = vxpose.xlu0.b32.cont [10/16] 0.0, 128
        %1278 = vxpose.xlu0.b32.cont [11/16] 0.0, 128
        %1279 = vxpose.xlu0.b32.cont [12/16] 0.0, 128
        %1280 = vxpose.xlu0.b32.cont [13/16] 0.0, 128
        %1281 = vxpose.xlu0.b32.cont [14/16] 0.0, 128
        %1282 = vxpose.xlu0.b32.cont [15/16] 0.0, 128
        %1283 = vxpose.xlu0.b32.end [16/16] 0.0, 128
        %v1284 = vpop.trf.xlu0
        %v1285 = vpop.trf.xlu0
        %v1286 = vpop.trf.xlu0
        %v1287 = vpop.trf.xlu0
        %v1288 = vpop.trf.xlu0
        %v1289 = vpop.trf.xlu0
        %v1290 = vpop.trf.xlu0
        %v1291 = vpop.trf.xlu0
        %v1292 = vpop.trf.xlu0
        %v1293 = vpop.trf.xlu0
        %v1294 = vpop.trf.xlu0
        %v1295 = vpop.trf.xlu0
        %v1296 = vpop.trf.xlu0
        %v1297 = vpop.trf.xlu0
        %v1298 = vpop.trf.xlu0
        %v1299 = vpop.trf.xlu0
        %1300 = vxpose.xlu0.b32.start [1/16] %v1230, 128
        %1301 = vxpose.xlu0.b32.cont [2/16] 0.0, 128
        %1302 = vxpose.xlu0.b32.cont [3/16] 0.0, 128
        %1303 = vxpose.xlu0.b32.cont [4/16] 0.0, 128
        %1304 = vxpose.xlu0.b32.cont [5/16] 0.0, 128
        %1305 = vxpose.xlu0.b32.cont [6/16] 0.0, 128
        %1306 = vxpose.xlu0.b32.cont [7/16] 0.0, 128
        %1307 = vxpose.xlu0.b32.cont [8/16] 0.0, 128
        %1308 = vxpose.xlu0.b32.cont [9/16] 0.0, 128
        %1309 = vxpose.xlu0.b32.cont [10/16] 0.0, 128
        %1310 = vxpose.xlu0.b32.cont [11/16] 0.0, 128
        %1311 = vxpose.xlu0.b32.cont [12/16] 0.0, 128
        %1312 = vxpose.xlu0.b32.cont [13/16] 0.0, 128
        %1313 = vxpose.xlu0.b32.cont [14/16] 0.0, 128
        %1314 = vxpose.xlu0.b32.cont [15/16] 0.0, 128
        %1315 = vxpose.xlu0.b32.end [16/16] 0.0, 128
        %v1316 = vpop.trf.xlu0
        %v1317 = vpop.trf.xlu0
        %v1318 = vpop.trf.xlu0
        %v1319 = vpop.trf.xlu0
        %v1320 = vpop.trf.xlu0
        %v1321 = vpop.trf.xlu0
        %v1322 = vpop.trf.xlu0
        %v1323 = vpop.trf.xlu0
        %v1324 = vpop.trf.xlu0
        %v1325 = vpop.trf.xlu0
        %v1326 = vpop.trf.xlu0
        %v1327 = vpop.trf.xlu0
        %v1328 = vpop.trf.xlu0
        %v1329 = vpop.trf.xlu0
        %v1330 = vpop.trf.xlu0
        %v1331 = vpop.trf.xlu0
        %1332 = vxpose.xlu0.b32.start [1/16] %v1231, 128
        %1333 = vxpose.xlu0.b32.cont [2/16] 0.0, 128
        %1334 = vxpose.xlu0.b32.cont [3/16] 0.0, 128
        %1335 = vxpose.xlu0.b32.cont [4/16] 0.0, 128
        %1336 = vxpose.xlu0.b32.cont [5/16] 0.0, 128
        %1337 = vxpose.xlu0.b32.cont [6/16] 0.0, 128
        %1338 = vxpose.xlu0.b32.cont [7/16] 0.0, 128
        %1339 = vxpose.xlu0.b32.cont [8/16] 0.0, 128
        %1340 = vxpose.xlu0.b32.cont [9/16] 0.0, 128
        %1341 = vxpose.xlu0.b32.cont [10/16] 0.0, 128
        %1342 = vxpose.xlu0.b32.cont [11/16] 0.0, 128
        %1343 = vxpose.xlu0.b32.cont [12/16] 0.0, 128
        %1344 = vxpose.xlu0.b32.cont [13/16] 0.0, 128
        %1345 = vxpose.xlu0.b32.cont [14/16] 0.0, 128
        %1346 = vxpose.xlu0.b32.cont [15/16] 0.0, 128
        %1347 = vxpose.xlu0.b32.end [16/16] 0.0, 128
        %v1348 = vpop.trf.xlu0
        %v1349 = vpop.trf.xlu0
        %v1350 = vpop.trf.xlu0
        %v1351 = vpop.trf.xlu0
        %v1352 = vpop.trf.xlu0
        %v1353 = vpop.trf.xlu0
        %v1354 = vpop.trf.xlu0
        %v1355 = vpop.trf.xlu0
        %v1356 = vpop.trf.xlu0
        %v1357 = vpop.trf.xlu0
        %v1358 = vpop.trf.xlu0
        %v1359 = vpop.trf.xlu0
        %v1360 = vpop.trf.xlu0
        %v1361 = vpop.trf.xlu0
        %v1362 = vpop.trf.xlu0
        %v1363 = vpop.trf.xlu0
        %1364 = vxpose.xlu0.b32.start [1/16] %v1232, 128
        %1365 = vxpose.xlu0.b32.cont [2/16] 0.0, 128
        %1366 = vxpose.xlu0.b32.cont [3/16] 0.0, 128
        %1367 = vxpose.xlu0.b32.cont [4/16] 0.0, 128
        %1368 = vxpose.xlu0.b32.cont [5/16] 0.0, 128
        %1369 = vxpose.xlu0.b32.cont [6/16] 0.0, 128
        %1370 = vxpose.xlu0.b32.cont [7/16] 0.0, 128
        %1371 = vxpose.xlu0.b32.cont [8/16] 0.0, 128
        %1372 = vxpose.xlu0.b32.cont [9/16] 0.0, 128
        %1373 = vxpose.xlu0.b32.cont [10/16] 0.0, 128
        %1374 = vxpose.xlu0.b32.cont [11/16] 0.0, 128
        %1375 = vxpose.xlu0.b32.cont [12/16] 0.0, 128
        %1376 = vxpose.xlu0.b32.cont [13/16] 0.0, 128
        %1377 = vxpose.xlu0.b32.cont [14/16] 0.0, 128
        %1378 = vxpose.xlu0.b32.cont [15/16] 0.0, 128
        %1379 = vxpose.xlu0.b32.end [16/16] 0.0, 128
        %v1380 = vpop.trf.xlu0
        %v1381 = vpop.trf.xlu0
        %v1382 = vpop.trf.xlu0
        %v1383 = vpop.trf.xlu0
        %v1384 = vpop.trf.xlu0
        %v1385 = vpop.trf.xlu0
        %v1386 = vpop.trf.xlu0
        %v1387 = vpop.trf.xlu0
        %v1388 = vpop.trf.xlu0
        %v1389 = vpop.trf.xlu0
        %v1390 = vpop.trf.xlu0
        %v1391 = vpop.trf.xlu0
        %v1392 = vpop.trf.xlu0
        %v1393 = vpop.trf.xlu0
        %v1394 = vpop.trf.xlu0
        %v1395 = vpop.trf.xlu0
        %1396 = vxpose.xlu0.b32.start [1/16] %v1233, 128
        %1397 = vxpose.xlu0.b32.cont [2/16] 0.0, 128
        %1398 = vxpose.xlu0.b32.cont [3/16] 0.0, 128
        %1399 = vxpose.xlu0.b32.cont [4/16] 0.0, 128
        %1400 = vxpose.xlu0.b32.cont [5/16] 0.0, 128
        %1401 = vxpose.xlu0.b32.cont [6/16] 0.0, 128
        %1402 = vxpose.xlu0.b32.cont [7/16] 0.0, 128
        %1403 = vxpose.xlu0.b32.cont [8/16] 0.0, 128
        %1404 = vxpose.xlu0.b32.cont [9/16] 0.0, 128
        %1405 = vxpose.xlu0.b32.cont [10/16] 0.0, 128
        %1406 = vxpose.xlu0.b32.cont [11/16] 0.0, 128
        %1407 = vxpose.xlu0.b32.cont [12/16] 0.0, 128
        %1408 = vxpose.xlu0.b32.cont [13/16] 0.0, 128
        %1409 = vxpose.xlu0.b32.cont [14/16] 0.0, 128
        %1410 = vxpose.xlu0.b32.cont [15/16] 0.0, 128
        %1411 = vxpose.xlu0.b32.end [16/16] 0.0, 128
        %v1412 = vpop.trf.xlu0
        %v1413 = vpop.trf.xlu0
        %v1414 = vpop.trf.xlu0
        %v1415 = vpop.trf.xlu0
        %v1416 = vpop.trf.xlu0
        %v1417 = vpop.trf.xlu0
        %v1418 = vpop.trf.xlu0
        %v1419 = vpop.trf.xlu0
        %v1420 = vpop.trf.xlu0
        %v1421 = vpop.trf.xlu0
        %v1422 = vpop.trf.xlu0
        %v1423 = vpop.trf.xlu0
        %v1424 = vpop.trf.xlu0
        %v1425 = vpop.trf.xlu0
        %v1426 = vpop.trf.xlu0
        %v1427 = vpop.trf.xlu0
        %1428 = vxpose.xlu0.b32.start [1/16] %v1234, 128
        %1429 = vxpose.xlu0.b32.cont [2/16] 0.0, 128
        %1430 = vxpose.xlu0.b32.cont [3/16] 0.0, 128
        %1431 = vxpose.xlu0.b32.cont [4/16] 0.0, 128
        %1432 = vxpose.xlu0.b32.cont [5/16] 0.0, 128
        %1433 = vxpose.xlu0.b32.cont [6/16] 0.0, 128
        %1434 = vxpose.xlu0.b32.cont [7/16] 0.0, 128
        %1435 = vxpose.xlu0.b32.cont [8/16] 0.0, 128
        %1436 = vxpose.xlu0.b32.cont [9/16] 0.0, 128
        %1437 = vxpose.xlu0.b32.cont [10/16] 0.0, 128
        %1438 = vxpose.xlu0.b32.cont [11/16] 0.0, 128
        %1439 = vxpose.xlu0.b32.cont [12/16] 0.0, 128
        %1440 = vxpose.xlu0.b32.cont [13/16] 0.0, 128
        %1441 = vxpose.xlu0.b32.cont [14/16] 0.0, 128
        %1442 = vxpose.xlu0.b32.cont [15/16] 0.0, 128
        %1443 = vxpose.xlu0.b32.end [16/16] 0.0, 128
        %v1444 = vpop.trf.xlu0
        %v1445 = vpop.trf.xlu0
        %v1446 = vpop.trf.xlu0
        %v1447 = vpop.trf.xlu0
        %v1448 = vpop.trf.xlu0
        %v1449 = vpop.trf.xlu0
        %v1450 = vpop.trf.xlu0
        %v1451 = vpop.trf.xlu0
        %v1452 = vpop.trf.xlu0
        %v1453 = vpop.trf.xlu0
        %v1454 = vpop.trf.xlu0
        %v1455 = vpop.trf.xlu0
        %v1456 = vpop.trf.xlu0
        %v1457 = vpop.trf.xlu0
        %v1458 = vpop.trf.xlu0
        %v1459 = vpop.trf.xlu0
        %1460 = vxpose.xlu0.b32.start [1/16] %v1235, 128
        %1461 = vxpose.xlu0.b32.cont [2/16] 0.0, 128
        %1462 = vxpose.xlu0.b32.cont [3/16] 0.0, 128
        %1463 = vxpose.xlu0.b32.cont [4/16] 0.0, 128
        %1464 = vxpose.xlu0.b32.cont [5/16] 0.0, 128
        %1465 = vxpose.xlu0.b32.cont [6/16] 0.0, 128
        %1466 = vxpose.xlu0.b32.cont [7/16] 0.0, 128
        %1467 = vxpose.xlu0.b32.cont [8/16] 0.0, 128
        %1468 = vxpose.xlu0.b32.cont [9/16] 0.0, 128
        %1469 = vxpose.xlu0.b32.cont [10/16] 0.0, 128
        %1470 = vxpose.xlu0.b32.cont [11/16] 0.0, 128
        %1471 = vxpose.xlu0.b32.cont [12/16] 0.0, 128
        %1472 = vxpose.xlu0.b32.cont [13/16] 0.0, 128
        %1473 = vxpose.xlu0.b32.cont [14/16] 0.0, 128
        %1474 = vxpose.xlu0.b32.cont [15/16] 0.0, 128
        %1475 = vxpose.xlu0.b32.end [16/16] 0.0, 128
        %v1476 = vpop.trf.xlu0
        %v1477 = vpop.trf.xlu0
        %v1478 = vpop.trf.xlu0
        %v1479 = vpop.trf.xlu0
        %v1480 = vpop.trf.xlu0
        %v1481 = vpop.trf.xlu0
        %v1482 = vpop.trf.xlu0
        %v1483 = vpop.trf.xlu0
        %v1484 = vpop.trf.xlu0
        %v1485 = vpop.trf.xlu0
        %v1486 = vpop.trf.xlu0
        %v1487 = vpop.trf.xlu0
        %v1488 = vpop.trf.xlu0
        %v1489 = vpop.trf.xlu0
        %v1490 = vpop.trf.xlu0
        %v1491 = vpop.trf.xlu0
        %v1492 = vcombine.low %v1252, %v1316
        %v1494 = vunpack.c.l.s4 1983009808
        %v1495 = vunpack.c.0.s8 %v1494
        %v1496 = vlaneseq
        %v1497 = vshrl.u32 %v1496, 7
        %v1498 = vsub.s32 %v1495, %v1497
        %v1499 = vrot.slane %v1492, %v1498
        %v1500 = vcombine.low %v1284, %v1348
        %v1502 = vunpack.c.l.s4 1983009808
        %v1503 = vunpack.c.0.s8 %v1502
        %v1504 = vlaneseq
        %v1505 = vshrl.u32 %v1504, 7
        %v1506 = vsub.s32 %v1503, %v1505
        %v1507 = vrot.slane %v1500, %v1506
        %v1508 = vcombine.low %v1380, %v1444
        %v1510 = vunpack.c.l.s4 1983009808
        %v1511 = vunpack.c.0.s8 %v1510
        %v1512 = vlaneseq
        %v1513 = vshrl.u32 %v1512, 7
        %v1514 = vsub.s32 %v1511, %v1513
        %v1515 = vrot.slane %v1508, %v1514
        %v1516 = vcombine.low %v1412, %v1476
        %v1518 = vunpack.c.l.s4 1983009808
        %v1519 = vunpack.c.0.s8 %v1518
        %v1520 = vlaneseq
        %v1521 = vshrl.u32 %v1520, 7
        %v1522 = vsub.s32 %v1519, %v1521
        %v1523 = vrot.slane %v1516, %v1522
        %v1524 = vcombine.low %v1499, %v1507
        %v1525 = vcombine.high %v1499, %v1507
        %v1527 = vunpack.c.l.s4 1934713408
        %v1528 = vunpack.c.0.s8 %v1527
        %v1529 = vlaneseq
        %v1530 = vshrl.u32 %v1529, 7
        %v1531 = vsub.s32 %v1528, %v1530
        %v1532 = vrot.slane %v1524, %v1531
        %v1534 = vunpack.c.l.s4 1934713408
        %v1535 = vunpack.c.0.s8 %v1534
        %v1536 = vlaneseq
        %v1537 = vshrl.u32 %v1536, 7
        %v1538 = vsub.s32 %v1535, %v1537
        %v1539 = vrot.slane %v1525, %v1538
        %v1540 = vcombine.low %v1515, %v1523
        %v1541 = vcombine.high %v1515, %v1523
        %v1543 = vunpack.c.l.s4 1934713408
        %v1544 = vunpack.c.0.s8 %v1543
        %v1545 = vlaneseq
        %v1546 = vshrl.u32 %v1545, 7
        %v1547 = vsub.s32 %v1544, %v1546
        %v1548 = vrot.slane %v1540, %v1547
        %v1550 = vunpack.c.l.s4 1934713408
        %v1551 = vunpack.c.0.s8 %v1550
        %v1552 = vlaneseq
        %v1553 = vshrl.u32 %v1552, 7
        %v1554 = vsub.s32 %v1551, %v1553
        %v1555 = vrot.slane %v1541, %v1554
        %v1556 = vcombine.low %v1532, %v1548
        %v1557 = vcombine.high %v1532, %v1548
        %v1558 = vcombine.low %v1539, %v1555
        %v1559 = vcombine.high %v1539, %v1555
        %1560 = vrot.lane.b32.xlu0 %v615, 64
        %v1561 = vpop.permute.xlu0 %1560
        %1562 = vrot.lane.b32.xlu0 %v620, 64
        %v1563 = vpop.permute.xlu0 %1562
        %1564 = vrot.lane.b32.xlu0 %v623, 64
        %v1565 = vpop.permute.xlu0 %1564
        %1566 = vrot.lane.b32.xlu0 %v626, 64
        %v1567 = vpop.permute.xlu0 %1566
        %v1572 = vcombine.low %v1561, %v1565
        %v1573 = vcombine.high %v1561, %v1565
        %v1575 = vunpack.c.l.s4 1983009808
        %v1576 = vunpack.c.0.s8 %v1575
        %v1577 = vlaneseq
        %v1578 = vshrl.u32 %v1577, 7
        %v1579 = vsub.s32 %v1576, %v1578
        %v1580 = vrot.slane %v1572, %v1579
        %v1582 = vunpack.c.l.s4 1983009808
        %v1583 = vunpack.c.0.s8 %v1582
        %v1584 = vlaneseq
        %v1585 = vshrl.u32 %v1584, 7
        %v1586 = vsub.s32 %v1583, %v1585
        %v1587 = vrot.slane %v1573, %v1586
        %v1588 = vcombine.low %v1563, %v1567
        %v1589 = vcombine.high %v1563, %v1567
        %v1591 = vunpack.c.l.s4 1983009808
        %v1592 = vunpack.c.0.s8 %v1591
        %v1593 = vlaneseq
        %v1594 = vshrl.u32 %v1593, 7
        %v1595 = vsub.s32 %v1592, %v1594
        %v1596 = vrot.slane %v1588, %v1595
        %v1598 = vunpack.c.l.s4 1983009808
        %v1599 = vunpack.c.0.s8 %v1598
        %v1600 = vlaneseq
        %v1601 = vshrl.u32 %v1600, 7
        %v1602 = vsub.s32 %v1599, %v1601
        %v1603 = vrot.slane %v1589, %v1602
        %v1604 = vcombine.low %v1580, %v1596
        %v1605 = vcombine.high %v1580, %v1596
        %v1607 = vunpack.c.l.s4 1934713408
        %v1608 = vunpack.c.0.s8 %v1607
        %v1609 = vlaneseq
        %v1610 = vshrl.u32 %v1609, 7
        %v1611 = vsub.s32 %v1608, %v1610
        %v1612 = vrot.slane %v1604, %v1611
        %v1614 = vunpack.c.l.s4 1934713408
        %v1615 = vunpack.c.0.s8 %v1614
        %v1616 = vlaneseq
        %v1617 = vshrl.u32 %v1616, 7
        %v1618 = vsub.s32 %v1615, %v1617
        %v1619 = vrot.slane %v1605, %v1618
        %v1620 = vcombine.low %v1587, %v1603
        %v1621 = vcombine.high %v1587, %v1603
        %v1623 = vunpack.c.l.s4 1934713408
        %v1624 = vunpack.c.0.s8 %v1623
        %v1625 = vlaneseq
        %v1626 = vshrl.u32 %v1625, 7
        %v1627 = vsub.s32 %v1624, %v1626
        %v1628 = vrot.slane %v1620, %v1627
        %v1630 = vunpack.c.l.s4 1934713408
        %v1631 = vunpack.c.0.s8 %v1630
        %v1632 = vlaneseq
        %v1633 = vshrl.u32 %v1632, 7
        %v1634 = vsub.s32 %v1631, %v1633
        %v1635 = vrot.slane %v1621, %v1634
        %v1636 = vcombine.high %v1612, 0.0
        %v1637 = vcombine.high %v1619, 0.0
        %v1638 = vcombine.high %v1628, 0.0
        %v1639 = vcombine.high %v1635, 0.0
        %v1640 = vcombine.low %v1612, %v1619
        %v1642 = vunpack.c.l.s4 1983009808
        %v1643 = vunpack.c.0.s8 %v1642
        %v1644 = vlaneseq
        %v1645 = vshrl.u32 %v1644, 7
        %v1646 = vsub.s32 %v1643, %v1645
        %v1647 = vrot.slane %v1640, %v1646
        %v1648 = vcombine.low %v1636, %v1637
        %v1650 = vunpack.c.l.s4 1983009808
        %v1651 = vunpack.c.0.s8 %v1650
        %v1652 = vlaneseq
        %v1653 = vshrl.u32 %v1652, 7
        %v1654 = vsub.s32 %v1651, %v1653
        %v1655 = vrot.slane %v1648, %v1654
        %v1656 = vcombine.low %v1628, %v1635
        %v1658 = vunpack.c.l.s4 1983009808
        %v1659 = vunpack.c.0.s8 %v1658
        %v1660 = vlaneseq
        %v1661 = vshrl.u32 %v1660, 7
        %v1662 = vsub.s32 %v1659, %v1661
        %v1663 = vrot.slane %v1656, %v1662
        %v1664 = vcombine.low %v1638, %v1639
        %v1666 = vunpack.c.l.s4 1983009808
        %v1667 = vunpack.c.0.s8 %v1666
        %v1668 = vlaneseq
        %v1669 = vshrl.u32 %v1668, 7
        %v1670 = vsub.s32 %v1667, %v1669
        %v1671 = vrot.slane %v1664, %v1670
        %v1672 = vcombine.low %v1647, %v1655
        %v1673 = vcombine.high %v1647, %v1655
        %v1675 = vunpack.c.l.s4 1934713408
        %v1676 = vunpack.c.0.s8 %v1675
        %v1677 = vlaneseq
        %v1678 = vshrl.u32 %v1677, 7
        %v1679 = vsub.s32 %v1676, %v1678
        %v1680 = vrot.slane %v1672, %v1679
        %v1682 = vunpack.c.l.s4 1934713408
        %v1683 = vunpack.c.0.s8 %v1682
        %v1684 = vlaneseq
        %v1685 = vshrl.u32 %v1684, 7
        %v1686 = vsub.s32 %v1683, %v1685
        %v1687 = vrot.slane %v1673, %v1686
        %v1688 = vcombine.low %v1663, %v1671
        %v1689 = vcombine.high %v1663, %v1671
        %v1691 = vunpack.c.l.s4 1934713408
        %v1692 = vunpack.c.0.s8 %v1691
        %v1693 = vlaneseq
        %v1694 = vshrl.u32 %v1693, 7
        %v1695 = vsub.s32 %v1692, %v1694
        %v1696 = vrot.slane %v1688, %v1695
        %v1698 = vunpack.c.l.s4 1934713408
        %v1699 = vunpack.c.0.s8 %v1698
        %v1700 = vlaneseq
        %v1701 = vshrl.u32 %v1700, 7
        %v1702 = vsub.s32 %v1699, %v1701
        %v1703 = vrot.slane %v1689, %v1702
        %v1704 = vcombine.low %v1680, %v1696
        %v1705 = vcombine.high %v1680, %v1696
        %v1706 = vcombine.low %v1687, %v1703
        %v1707 = vcombine.high %v1687, %v1703
        %vm1708 = vcmask 64512
        %v1710 = vsel %vm1708, %v760, 0
        %1712 = vmatprep.subr.mxu0 0.0
        %1713 = vmatpush1.msra.mxu0 %v1556
        %1714 = vmatprep.subr.mxu0 0.0
        %1715 = vmatpush1.msra.mxu0 0.0
        %1716 = vmatprep.subr.mxu0 0.0
        %1717 = vmatpush1.msra.mxu0 0.0
        %1718 = vmatprep.subr.mxu0 0.0
        %1719 = vmatpush1.msra.mxu0 0.0
        %1720 = vmatprep.subr.mxu0 0.0
        %1721 = vmatpush1.msra.mxu0 0.0
        %1722 = vmatprep.subr.mxu0 0.0
        %1723 = vmatpush1.msra.mxu0 0.0
        %1724 = vmatprep.subr.mxu0 0.0
        %1725 = vmatpush1.msra.mxu0 0.0
        %1726 = vmatprep.subr.mxu0 0.0
        %1727 = vmatpush1.msra.mxu0 0.0
        %1728 = vmatprep.subr.mxu0 0.0
        %1729 = vmatpush1.msra.mxu0 0.0
        %1730 = vmatprep.subr.mxu0 0.0
        %1731 = vmatpush1.msra.mxu0 0.0
        %1732 = vmatprep.subr.mxu0 0.0
        %1733 = vmatpush1.msra.mxu0 0.0
        %1734 = vmatprep.subr.mxu0 0.0
        %1735 = vmatpush1.msra.mxu0 0.0
        %1736 = vmatprep.subr.mxu0 0.0
        %1737 = vmatpush1.msra.mxu0 0.0
        %1738 = vmatprep.subr.mxu0 0.0
        %1739 = vmatpush1.msra.mxu0 0.0
        %1740 = vmatprep.subr.mxu0 0.0
        %1741 = vmatpush1.msra.mxu0 0.0
        %1742 = vmatprep.subr.mxu0 0.0
        %1743 = vmatpush1.msra.mxu0 0.0
        %1744 = vmatprep.subr.mxu0 0.0
        %1745 = vmatpush1.msra.mxu0 0.0
        %1746 = vmatprep.subr.mxu0 0.0
        %1747 = vmatpush1.msra.mxu0 0.0
        %1748 = vmatprep.subr.mxu0 0.0
        %1749 = vmatpush1.msra.mxu0 0.0
        %1750 = vmatprep.subr.mxu0 0.0
        %1751 = vmatpush1.msra.mxu0 0.0
        %1752 = vmatprep.subr.mxu0 0.0
        %1753 = vmatpush1.msra.mxu0 0.0
        %1754 = vmatprep.subr.mxu0 0.0
        %1755 = vmatpush1.msra.mxu0 0.0
        %1756 = vmatprep.subr.mxu0 0.0
        %1757 = vmatpush1.msra.mxu0 0.0
        %1758 = vmatprep.subr.mxu0 0.0
        %1759 = vmatpush1.msra.mxu0 0.0
        %1760 = vmatprep.subr.mxu0 0.0
        %1761 = vmatpush1.msra.mxu0 0.0
        %1762 = vmatprep.subr.mxu0 0.0
        %1763 = vmatpush1.msra.mxu0 0.0
        %1764 = vmatprep.subr.mxu0 0.0
        %1765 = vmatpush1.msra.mxu0 0.0
        %1766 = vmatprep.subr.mxu0 0.0
        %1767 = vmatpush1.msra.mxu0 0.0
        %1768 = vmatprep.subr.mxu0 0.0
        %1769 = vmatpush1.msra.mxu0 0.0
        %1770 = vmatprep.subr.mxu0 0.0
        %1771 = vmatpush1.msra.mxu0 0.0
        %1772 = vmatprep.subr.mxu0 0.0
        %1773 = vmatpush1.msra.mxu0 0.0
        %1774 = vmatprep.subr.mxu0 0.0
        %1775 = vmatpush1.msra.mxu0 0.0
        %1776 = vmatprep.mubr.f32.mxu0 0.0
        %1777 = vmatmul.mubr.f32.gmra.mrb[0].mxu0 %v1710
        %v1778 = vpop.f32.mrb[0].mxu0
        %v1779 = vadd.f32 0.0, %v1778
        %v1780 = vpop.f32.mrb[0].mxu0
        %1781 = vdwg.mxu0
        %v1783 = vsel %vm1708, %v761, 0
        %1785 = vmatprep.subr.mxu0 0.0
        %1786 = vmatpush1.msra.mxu0 %v1557
        %1787 = vmatprep.subr.mxu0 0.0
        %1788 = vmatpush1.msra.mxu0 0.0
        %1789 = vmatprep.subr.mxu0 0.0
        %1790 = vmatpush1.msra.mxu0 0.0
        %1791 = vmatprep.subr.mxu0 0.0
        %1792 = vmatpush1.msra.mxu0 0.0
        %1793 = vmatprep.subr.mxu0 0.0
        %1794 = vmatpush1.msra.mxu0 0.0
        %1795 = vmatprep.subr.mxu0 0.0
        %1796 = vmatpush1.msra.mxu0 0.0
        %1797 = vmatprep.subr.mxu0 0.0
        %1798 = vmatpush1.msra.mxu0 0.0
        %1799 = vmatprep.subr.mxu0 0.0
        %1800 = vmatpush1.msra.mxu0 0.0
        %1801 = vmatprep.subr.mxu0 0.0
        %1802 = vmatpush1.msra.mxu0 0.0
        %1803 = vmatprep.subr.mxu0 0.0
        %1804 = vmatpush1.msra.mxu0 0.0
        %1805 = vmatprep.subr.mxu0 0.0
        %1806 = vmatpush1.msra.mxu0 0.0
        %1807 = vmatprep.subr.mxu0 0.0
        %1808 = vmatpush1.msra.mxu0 0.0
        %1809 = vmatprep.subr.mxu0 0.0
        %1810 = vmatpush1.msra.mxu0 0.0
        %1811 = vmatprep.subr.mxu0 0.0
        %1812 = vmatpush1.msra.mxu0 0.0
        %1813 = vmatprep.subr.mxu0 0.0
        %1814 = vmatpush1.msra.mxu0 0.0
        %1815 = vmatprep.subr.mxu0 0.0
        %1816 = vmatpush1.msra.mxu0 0.0
        %1817 = vmatprep.subr.mxu0 0.0
        %1818 = vmatpush1.msra.mxu0 0.0
        %1819 = vmatprep.subr.mxu0 0.0
        %1820 = vmatpush1.msra.mxu0 0.0
        %1821 = vmatprep.subr.mxu0 0.0
        %1822 = vmatpush1.msra.mxu0 0.0
        %1823 = vmatprep.subr.mxu0 0.0
        %1824 = vmatpush1.msra.mxu0 0.0
        %1825 = vmatprep.subr.mxu0 0.0
        %1826 = vmatpush1.msra.mxu0 0.0
        %1827 = vmatprep.subr.mxu0 0.0
        %1828 = vmatpush1.msra.mxu0 0.0
        %1829 = vmatprep.subr.mxu0 0.0
        %1830 = vmatpush1.msra.mxu0 0.0
        %1831 = vmatprep.subr.mxu0 0.0
        %1832 = vmatpush1.msra.mxu0 0.0
        %1833 = vmatprep.subr.mxu0 0.0
        %1834 = vmatpush1.msra.mxu0 0.0
        %1835 = vmatprep.subr.mxu0 0.0
        %1836 = vmatpush1.msra.mxu0 0.0
        %1837 = vmatprep.subr.mxu0 0.0
        %1838 = vmatpush1.msra.mxu0 0.0
        %1839 = vmatprep.subr.mxu0 0.0
        %1840 = vmatpush1.msra.mxu0 0.0
        %1841 = vmatprep.subr.mxu0 0.0
        %1842 = vmatpush1.msra.mxu0 0.0
        %1843 = vmatprep.subr.mxu0 0.0
        %1844 = vmatpush1.msra.mxu0 0.0
        %1845 = vmatprep.subr.mxu0 0.0
        %1846 = vmatpush1.msra.mxu0 0.0
        %1847 = vmatprep.subr.mxu0 0.0
        %1848 = vmatpush1.msra.mxu0 0.0
        %1849 = vmatprep.mubr.f32.mxu0 0.0
        %1850 = vmatmul.mubr.f32.gmra.mrb[0].mxu0 %v1783
        %v1851 = vpop.f32.mrb[0].mxu0
        %v1852 = vadd.f32 0.0, %v1851
        %v1853 = vpop.f32.mrb[0].mxu0
        %1854 = vdwg.mxu0
        %v1856 = vsel %vm1708, %v762, 0
        %1858 = vmatprep.subr.mxu0 0.0
        %1859 = vmatpush1.msra.mxu0 %v1558
        %1860 = vmatprep.subr.mxu0 0.0
        %1861 = vmatpush1.msra.mxu0 0.0
        %1862 = vmatprep.subr.mxu0 0.0
        %1863 = vmatpush1.msra.mxu0 0.0
        %1864 = vmatprep.subr.mxu0 0.0
        %1865 = vmatpush1.msra.mxu0 0.0
        %1866 = vmatprep.subr.mxu0 0.0
        %1867 = vmatpush1.msra.mxu0 0.0
        %1868 = vmatprep.subr.mxu0 0.0
        %1869 = vmatpush1.msra.mxu0 0.0
        %1870 = vmatprep.subr.mxu0 0.0
        %1871 = vmatpush1.msra.mxu0 0.0
        %1872 = vmatprep.subr.mxu0 0.0
        %1873 = vmatpush1.msra.mxu0 0.0
        %1874 = vmatprep.subr.mxu0 0.0
        %1875 = vmatpush1.msra.mxu0 0.0
        %1876 = vmatprep.subr.mxu0 0.0
        %1877 = vmatpush1.msra.mxu0 0.0
        %1878 = vmatprep.subr.mxu0 0.0
        %1879 = vmatpush1.msra.mxu0 0.0
        %1880 = vmatprep.subr.mxu0 0.0
        %1881 = vmatpush1.msra.mxu0 0.0
        %1882 = vmatprep.subr.mxu0 0.0
        %1883 = vmatpush1.msra.mxu0 0.0
        %1884 = vmatprep.subr.mxu0 0.0
        %1885 = vmatpush1.msra.mxu0 0.0
        %1886 = vmatprep.subr.mxu0 0.0
        %1887 = vmatpush1.msra.mxu0 0.0
        %1888 = vmatprep.subr.mxu0 0.0
        %1889 = vmatpush1.msra.mxu0 0.0
        %1890 = vmatprep.subr.mxu0 0.0
        %1891 = vmatpush1.msra.mxu0 0.0
        %1892 = vmatprep.subr.mxu0 0.0
        %1893 = vmatpush1.msra.mxu0 0.0
        %1894 = vmatprep.subr.mxu0 0.0
        %1895 = vmatpush1.msra.mxu0 0.0
        %1896 = vmatprep.subr.mxu0 0.0
        %1897 = vmatpush1.msra.mxu0 0.0
        %1898 = vmatprep.subr.mxu0 0.0
        %1899 = vmatpush1.msra.mxu0 0.0
        %1900 = vmatprep.subr.mxu0 0.0
        %1901 = vmatpush1.msra.mxu0 0.0
        %1902 = vmatprep.subr.mxu0 0.0
        %1903 = vmatpush1.msra.mxu0 0.0
        %1904 = vmatprep.subr.mxu0 0.0
        %1905 = vmatpush1.msra.mxu0 0.0
        %1906 = vmatprep.subr.mxu0 0.0
        %1907 = vmatpush1.msra.mxu0 0.0
        %1908 = vmatprep.subr.mxu0 0.0
        %1909 = vmatpush1.msra.mxu0 0.0
        %1910 = vmatprep.subr.mxu0 0.0
        %1911 = vmatpush1.msra.mxu0 0.0
        %1912 = vmatprep.subr.mxu0 0.0
        %1913 = vmatpush1.msra.mxu0 0.0
        %1914 = vmatprep.subr.mxu0 0.0
        %1915 = vmatpush1.msra.mxu0 0.0
        %1916 = vmatprep.subr.mxu0 0.0
        %1917 = vmatpush1.msra.mxu0 0.0
        %1918 = vmatprep.subr.mxu0 0.0
        %1919 = vmatpush1.msra.mxu0 0.0
        %1920 = vmatprep.subr.mxu0 0.0
        %1921 = vmatpush1.msra.mxu0 0.0
        %1922 = vmatprep.mubr.f32.mxu0 0.0
        %1923 = vmatmul.mubr.f32.gmra.mrb[0].mxu0 %v1856
        %v1924 = vpop.f32.mrb[0].mxu0
        %v1925 = vadd.f32 0.0, %v1924
        %v1926 = vpop.f32.mrb[0].mxu0
        %1927 = vdwg.mxu0
        %v1929 = vsel %vm1708, %v763, 0
        %1931 = vmatprep.subr.mxu0 0.0
        %1932 = vmatpush1.msra.mxu0 %v1559
        %1933 = vmatprep.subr.mxu0 0.0
        %1934 = vmatpush1.msra.mxu0 0.0
        %1935 = vmatprep.subr.mxu0 0.0
        %1936 = vmatpush1.msra.mxu0 0.0
        %1937 = vmatprep.subr.mxu0 0.0
        %1938 = vmatpush1.msra.mxu0 0.0
        %1939 = vmatprep.subr.mxu0 0.0
        %1940 = vmatpush1.msra.mxu0 0.0
        %1941 = vmatprep.subr.mxu0 0.0
        %1942 = vmatpush1.msra.mxu0 0.0
        %1943 = vmatprep.subr.mxu0 0.0
        %1944 = vmatpush1.msra.mxu0 0.0
        %1945 = vmatprep.subr.mxu0 0.0
        %1946 = vmatpush1.msra.mxu0 0.0
        %1947 = vmatprep.subr.mxu0 0.0
        %1948 = vmatpush1.msra.mxu0 0.0
        %1949 = vmatprep.subr.mxu0 0.0
        %1950 = vmatpush1.msra.mxu0 0.0
        %1951 = vmatprep.subr.mxu0 0.0
        %1952 = vmatpush1.msra.mxu0 0.0
        %1953 = vmatprep.subr.mxu0 0.0
        %1954 = vmatpush1.msra.mxu0 0.0
        %1955 = vmatprep.subr.mxu0 0.0
        %1956 = vmatpush1.msra.mxu0 0.0
        %1957 = vmatprep.subr.mxu0 0.0
        %1958 = vmatpush1.msra.mxu0 0.0
        %1959 = vmatprep.subr.mxu0 0.0
        %1960 = vmatpush1.msra.mxu0 0.0
        %1961 = vmatprep.subr.mxu0 0.0
        %1962 = vmatpush1.msra.mxu0 0.0
        %1963 = vmatprep.subr.mxu0 0.0
        %1964 = vmatpush1.msra.mxu0 0.0
        %1965 = vmatprep.subr.mxu0 0.0
        %1966 = vmatpush1.msra.mxu0 0.0
        %1967 = vmatprep.subr.mxu0 0.0
        %1968 = vmatpush1.msra.mxu0 0.0
        %1969 = vmatprep.subr.mxu0 0.0
        %1970 = vmatpush1.msra.mxu0 0.0
        %1971 = vmatprep.subr.mxu0 0.0
        %1972 = vmatpush1.msra.mxu0 0.0
        %1973 = vmatprep.subr.mxu0 0.0
        %1974 = vmatpush1.msra.mxu0 0.0
        %1975 = vmatprep.subr.mxu0 0.0
        %1976 = vmatpush1.msra.mxu0 0.0
        %1977 = vmatprep.subr.mxu0 0.0
        %1978 = vmatpush1.msra.mxu0 0.0
        %1979 = vmatprep.subr.mxu0 0.0
        %1980 = vmatpush1.msra.mxu0 0.0
        %1981 = vmatprep.subr.mxu0 0.0
        %1982 = vmatpush1.msra.mxu0 0.0
        %1983 = vmatprep.subr.mxu0 0.0
        %1984 = vmatpush1.msra.mxu0 0.0
        %1985 = vmatprep.subr.mxu0 0.0
        %1986 = vmatpush1.msra.mxu0 0.0
        %1987 = vmatprep.subr.mxu0 0.0
        %1988 = vmatpush1.msra.mxu0 0.0
        %1989 = vmatprep.subr.mxu0 0.0
        %1990 = vmatpush1.msra.mxu0 0.0
        %1991 = vmatprep.subr.mxu0 0.0
        %1992 = vmatpush1.msra.mxu0 0.0
        %1993 = vmatprep.subr.mxu0 0.0
        %1994 = vmatpush1.msra.mxu0 0.0
        %1995 = vmatprep.mubr.f32.mxu0 0.0
        %1996 = vmatmul.mubr.f32.gmra.mrb[0].mxu0 %v1929
        %v1997 = vpop.f32.mrb[0].mxu0
        %v1998 = vadd.f32 0.0, %v1997
        %v1999 = vpop.f32.mrb[0].mxu0
        %2000 = vdwg.mxu0
        %2001 = vst.msk [vmem:[%s531] sm:$0xff] %vm1708, %v1779
        %2002 = vst.msk [vmem:[%s531 + $0x8] sm:$0xff] %vm1708, %v1852
        %2003 = vst.msk [vmem:[%s531 + $0x10] sm:$0xff] %vm1708, %v1925
        %2004 = vst.msk [vmem:[%s531 + $0x18] sm:$0xff] %vm1708, %v1998
        %v2005 = vsel %vm1708, %v1779, -inf
        %2006 = vmax.xlane.f32.xlu0 %v2005
        %v2007 = vpop.xlane.xlu0 %2006
        %v2008 = vsel %vm1708, %v1852, -inf
        %2009 = vmax.xlane.f32.xlu0 %v2008
        %v2010 = vpop.xlane.xlu0 %2009
        %v2011 = vsel %vm1708, %v1925, -inf
        %2012 = vmax.xlane.f32.xlu0 %v2011
        %v2013 = vpop.xlane.xlu0 %2012
        %v2014 = vsel %vm1708, %v1998, -inf
        %2015 = vmax.xlane.f32.xlu0 %v2014
        %v2016 = vpop.xlane.xlu0 %2015
        %v2017 = vsub.f32 %v1779, %v2007
        %v2018 = vsub.f32 %v1852, %v2010
        %v2019 = vsub.f32 %v1925, %v2013
        %v2020 = vsub.f32 %v1998, %v2016
        %v2021 = vmul.f32 %v2017, 1.442695
        %v2022 = vpow.pop %v2021
        %v2023 = vmul.f32 %v2018, 1.442695
        %v2024 = vpow.pop %v2023
        %v2025 = vmul.f32 %v2019, 1.442695
        %v2026 = vpow.pop %v2025
        %v2027 = vmul.f32 %v2020, 1.442695
        %v2028 = vpow.pop %v2027
        %v2029 = vsel %vm1708, %v2022, 0.0
        %2030 = vadd.xlane.f32.xlu0 %v2029
        %v2031 = vpop.xlane.xlu0 %2030
        %v2032 = vsel %vm1708, %v2024, 0.0
        %2033 = vadd.xlane.f32.xlu0 %v2032
        %v2034 = vpop.xlane.xlu0 %2033
        %v2035 = vsel %vm1708, %v2026, 0.0
        %2036 = vadd.xlane.f32.xlu0 %v2035
        %v2037 = vpop.xlane.xlu0 %2036
        %v2038 = vsel %vm1708, %v2028, 0.0
        %2039 = vadd.xlane.f32.xlu0 %v2038
        %v2040 = vpop.xlane.xlu0 %2039
        %v2041 = vrcp.pop %v2031
        %v2042 = vrcp.pop %v2034
        %v2043 = vrcp.pop %v2037
        %v2044 = vrcp.pop %v2040
        %v2045 = vmul.f32 %v2022, %v2041
        %v2046 = vmul.f32 %v2024, %v2042
        %v2047 = vmul.f32 %v2026, %v2043
        %v2048 = vmul.f32 %v2028, %v2044
        %v2050 = vsel %vm1708, %v2045, 0
        %2052 = vmatprep.subr.mxu0 0.0
        %2053 = vmatpush1.msra.mxu0 %v1704
        %2054 = vmatprep.subr.mxu0 0.0
        %2055 = vmatpush1.msra.mxu0 0.0
        %2056 = vmatprep.subr.mxu0 0.0
        %2057 = vmatpush1.msra.mxu0 0.0
        %2058 = vmatprep.subr.mxu0 0.0
        %2059 = vmatpush1.msra.mxu0 0.0
        %2060 = vmatprep.subr.mxu0 0.0
        %2061 = vmatpush1.msra.mxu0 0.0
        %2062 = vmatprep.subr.mxu0 0.0
        %2063 = vmatpush1.msra.mxu0 0.0
        %2064 = vmatprep.subr.mxu0 0.0
        %2065 = vmatpush1.msra.mxu0 0.0
        %2066 = vmatprep.subr.mxu0 0.0
        %2067 = vmatpush1.msra.mxu0 0.0
        %2068 = vmatprep.subr.mxu0 0.0
        %2069 = vmatpush1.msra.mxu0 0.0
        %2070 = vmatprep.subr.mxu0 0.0
        %2071 = vmatpush1.msra.mxu0 0.0
        %2072 = vmatprep.subr.mxu0 0.0
        %2073 = vmatpush1.msra.mxu0 0.0
        %2074 = vmatprep.subr.mxu0 0.0
        %2075 = vmatpush1.msra.mxu0 0.0
        %2076 = vmatprep.subr.mxu0 0.0
        %2077 = vmatpush1.msra.mxu0 0.0
        %2078 = vmatprep.subr.mxu0 0.0
        %2079 = vmatpush1.msra.mxu0 0.0
        %2080 = vmatprep.subr.mxu0 0.0
        %2081 = vmatpush1.msra.mxu0 0.0
        %2082 = vmatprep.subr.mxu0 0.0
        %2083 = vmatpush1.msra.mxu0 0.0
        %2084 = vmatprep.subr.mxu0 0.0
        %2085 = vmatpush1.msra.mxu0 0.0
        %2086 = vmatprep.subr.mxu0 0.0
        %2087 = vmatpush1.msra.mxu0 0.0
        %2088 = vmatprep.subr.mxu0 0.0
        %2089 = vmatpush1.msra.mxu0 0.0
        %2090 = vmatprep.subr.mxu0 0.0
        %2091 = vmatpush1.msra.mxu0 0.0
        %2092 = vmatprep.subr.mxu0 0.0
        %2093 = vmatpush1.msra.mxu0 0.0
        %2094 = vmatprep.subr.mxu0 0.0
        %2095 = vmatpush1.msra.mxu0 0.0
        %2096 = vmatprep.subr.mxu0 0.0
        %2097 = vmatpush1.msra.mxu0 0.0
        %2098 = vmatprep.subr.mxu0 0.0
        %2099 = vmatpush1.msra.mxu0 0.0
        %2100 = vmatprep.subr.mxu0 0.0
        %2101 = vmatpush1.msra.mxu0 0.0
        %2102 = vmatprep.subr.mxu0 0.0
        %2103 = vmatpush1.msra.mxu0 0.0
        %2104 = vmatprep.subr.mxu0 0.0
        %2105 = vmatpush1.msra.mxu0 0.0
        %2106 = vmatprep.subr.mxu0 0.0
        %2107 = vmatpush1.msra.mxu0 0.0
        %2108 = vmatprep.subr.mxu0 0.0
        %2109 = vmatpush1.msra.mxu0 0.0
        %2110 = vmatprep.subr.mxu0 0.0
        %2111 = vmatpush1.msra.mxu0 0.0
        %2112 = vmatprep.subr.mxu0 0.0
        %2113 = vmatpush1.msra.mxu0 0.0
        %2114 = vmatprep.subr.mxu0 0.0
        %2115 = vmatpush1.msra.mxu0 0.0
        %2116 = vmatprep.mubr.f32.mxu0 0.0
        %2117 = vmatmul.mubr.f32.gmra.mrb[0].mxu0 %v2050
        %v2118 = vpop.f32.mrb[0].mxu0
        %v2119 = vadd.f32 0.0, %v2118
        %v2120 = vpop.f32.mrb[0].mxu0
        %2121 = vdwg.mxu0
        %v2123 = vsel %vm1708, %v2046, 0
        %2125 = vmatprep.subr.mxu0 0.0
        %2126 = vmatpush1.msra.mxu0 %v1705
        %2127 = vmatprep.subr.mxu0 0.0
        %2128 = vmatpush1.msra.mxu0 0.0
        %2129 = vmatprep.subr.mxu0 0.0
        %2130 = vmatpush1.msra.mxu0 0.0
        %2131 = vmatprep.subr.mxu0 0.0
        %2132 = vmatpush1.msra.mxu0 0.0
        %2133 = vmatprep.subr.mxu0 0.0
        %2134 = vmatpush1.msra.mxu0 0.0
        %2135 = vmatprep.subr.mxu0 0.0
        %2136 = vmatpush1.msra.mxu0 0.0
        %2137 = vmatprep.subr.mxu0 0.0
        %2138 = vmatpush1.msra.mxu0 0.0
        %2139 = vmatprep.subr.mxu0 0.0
        %2140 = vmatpush1.msra.mxu0 0.0
        %2141 = vmatprep.subr.mxu0 0.0
        %2142 = vmatpush1.msra.mxu0 0.0
        %2143 = vmatprep.subr.mxu0 0.0
        %2144 = vmatpush1.msra.mxu0 0.0
        %2145 = vmatprep.subr.mxu0 0.0
        %2146 = vmatpush1.msra.mxu0 0.0
        %2147 = vmatprep.subr.mxu0 0.0
        %2148 = vmatpush1.msra.mxu0 0.0
        %2149 = vmatprep.subr.mxu0 0.0
        %2150 = vmatpush1.msra.mxu0 0.0
        %2151 = vmatprep.subr.mxu0 0.0
        %2152 = vmatpush1.msra.mxu0 0.0
        %2153 = vmatprep.subr.mxu0 0.0
        %2154 = vmatpush1.msra.mxu0 0.0
        %2155 = vmatprep.subr.mxu0 0.0
        %2156 = vmatpush1.msra.mxu0 0.0
        %2157 = vmatprep.subr.mxu0 0.0
        %2158 = vmatpush1.msra.mxu0 0.0
        %2159 = vmatprep.subr.mxu0 0.0
        %2160 = vmatpush1.msra.mxu0 0.0
        %2161 = vmatprep.subr.mxu0 0.0
        %2162 = vmatpush1.msra.mxu0 0.0
        %2163 = vmatprep.subr.mxu0 0.0
        %2164 = vmatpush1.msra.mxu0 0.0
        %2165 = vmatprep.subr.mxu0 0.0
        %2166 = vmatpush1.msra.mxu0 0.0
        %2167 = vmatprep.subr.mxu0 0.0
        %2168 = vmatpush1.msra.mxu0 0.0
        %2169 = vmatprep.subr.mxu0 0.0
        %2170 = vmatpush1.msra.mxu0 0.0
        %2171 = vmatprep.subr.mxu0 0.0
        %2172 = vmatpush1.msra.mxu0 0.0
        %2173 = vmatprep.subr.mxu0 0.0
        %2174 = vmatpush1.msra.mxu0 0.0
        %2175 = vmatprep.subr.mxu0 0.0
        %2176 = vmatpush1.msra.mxu0 0.0
        %2177 = vmatprep.subr.mxu0 0.0
        %2178 = vmatpush1.msra.mxu0 0.0
        %2179 = vmatprep.subr.mxu0 0.0
        %2180 = vmatpush1.msra.mxu0 0.0
        %2181 = vmatprep.subr.mxu0 0.0
        %2182 = vmatpush1.msra.mxu0 0.0
        %2183 = vmatprep.subr.mxu0 0.0
        %2184 = vmatpush1.msra.mxu0 0.0
        %2185 = vmatprep.subr.mxu0 0.0
        %2186 = vmatpush1.msra.mxu0 0.0
        %2187 = vmatprep.subr.mxu0 0.0
        %2188 = vmatpush1.msra.mxu0 0.0
        %2189 = vmatprep.mubr.f32.mxu0 0.0
        %2190 = vmatmul.mubr.f32.gmra.mrb[0].mxu0 %v2123
        %v2191 = vpop.f32.mrb[0].mxu0
        %v2192 = vadd.f32 0.0, %v2191
        %v2193 = vpop.f32.mrb[0].mxu0
        %2194 = vdwg.mxu0
        %v2196 = vsel %vm1708, %v2047, 0
        %2198 = vmatprep.subr.mxu0 0.0
        %2199 = vmatpush1.msra.mxu0 %v1706
        %2200 = vmatprep.subr.mxu0 0.0
        %2201 = vmatpush1.msra.mxu0 0.0
        %2202 = vmatprep.subr.mxu0 0.0
        %2203 = vmatpush1.msra.mxu0 0.0
        %2204 = vmatprep.subr.mxu0 0.0
        %2205 = vmatpush1.msra.mxu0 0.0
        %2206 = vmatprep.subr.mxu0 0.0
        %2207 = vmatpush1.msra.mxu0 0.0
        %2208 = vmatprep.subr.mxu0 0.0
        %2209 = vmatpush1.msra.mxu0 0.0
        %2210 = vmatprep.subr.mxu0 0.0
        %2211 = vmatpush1.msra.mxu0 0.0
        %2212 = vmatprep.subr.mxu0 0.0
        %2213 = vmatpush1.msra.mxu0 0.0
        %2214 = vmatprep.subr.mxu0 0.0
        %2215 = vmatpush1.msra.mxu0 0.0
        %2216 = vmatprep.subr.mxu0 0.0
        %2217 = vmatpush1.msra.mxu0 0.0
        %2218 = vmatprep.subr.mxu0 0.0
        %2219 = vmatpush1.msra.mxu0 0.0
        %2220 = vmatprep.subr.mxu0 0.0
        %2221 = vmatpush1.msra.mxu0 0.0
        %2222 = vmatprep.subr.mxu0 0.0
        %2223 = vmatpush1.msra.mxu0 0.0
        %2224 = vmatprep.subr.mxu0 0.0
        %2225 = vmatpush1.msra.mxu0 0.0
        %2226 = vmatprep.subr.mxu0 0.0
        %2227 = vmatpush1.msra.mxu0 0.0
        %2228 = vmatprep.subr.mxu0 0.0
        %2229 = vmatpush1.msra.mxu0 0.0
        %2230 = vmatprep.subr.mxu0 0.0
        %2231 = vmatpush1.msra.mxu0 0.0
        %2232 = vmatprep.subr.mxu0 0.0
        %2233 = vmatpush1.msra.mxu0 0.0
        %2234 = vmatprep.subr.mxu0 0.0
        %2235 = vmatpush1.msra.mxu0 0.0
        %2236 = vmatprep.subr.mxu0 0.0
        %2237 = vmatpush1.msra.mxu0 0.0
        %2238 = vmatprep.subr.mxu0 0.0
        %2239 = vmatpush1.msra.mxu0 0.0
        %2240 = vmatprep.subr.mxu0 0.0
        %2241 = vmatpush1.msra.mxu0 0.0
        %2242 = vmatprep.subr.mxu0 0.0
        %2243 = vmatpush1.msra.mxu0 0.0
        %2244 = vmatprep.subr.mxu0 0.0
        %2245 = vmatpush1.msra.mxu0 0.0
        %2246 = vmatprep.subr.mxu0 0.0
        %2247 = vmatpush1.msra.mxu0 0.0
        %2248 = vmatprep.subr.mxu0 0.0
        %2249 = vmatpush1.msra.mxu0 0.0
        %2250 = vmatprep.subr.mxu0 0.0
        %2251 = vmatpush1.msra.mxu0 0.0
        %2252 = vmatprep.subr.mxu0 0.0
        %2253 = vmatpush1.msra.mxu0 0.0
        %2254 = vmatprep.subr.mxu0 0.0
        %2255 = vmatpush1.msra.mxu0 0.0
        %2256 = vmatprep.subr.mxu0 0.0
        %2257 = vmatpush1.msra.mxu0 0.0
        %2258 = vmatprep.subr.mxu0 0.0
        %2259 = vmatpush1.msra.mxu0 0.0
        %2260 = vmatprep.subr.mxu0 0.0
        %2261 = vmatpush1.msra.mxu0 0.0
        %2262 = vmatprep.mubr.f32.mxu0 0.0
        %2263 = vmatmul.mubr.f32.gmra.mrb[0].mxu0 %v2196
        %v2264 = vpop.f32.mrb[0].mxu0
        %v2265 = vadd.f32 0.0, %v2264
        %v2266 = vpop.f32.mrb[0].mxu0
        %2267 = vdwg.mxu0
        %v2269 = vsel %vm1708, %v2048, 0
        %2271 = vmatprep.subr.mxu0 0.0
        %2272 = vmatpush1.msra.mxu0 %v1707
        %2273 = vmatprep.subr.mxu0 0.0
        %2274 = vmatpush1.msra.mxu0 0.0
        %2275 = vmatprep.subr.mxu0 0.0
        %2276 = vmatpush1.msra.mxu0 0.0
        %2277 = vmatprep.subr.mxu0 0.0
        %2278 = vmatpush1.msra.mxu0 0.0
        %2279 = vmatprep.subr.mxu0 0.0
        %2280 = vmatpush1.msra.mxu0 0.0
        %2281 = vmatprep.subr.mxu0 0.0
        %2282 = vmatpush1.msra.mxu0 0.0
        %2283 = vmatprep.subr.mxu0 0.0
        %2284 = vmatpush1.msra.mxu0 0.0
        %2285 = vmatprep.subr.mxu0 0.0
        %2286 = vmatpush1.msra.mxu0 0.0
        %2287 = vmatprep.subr.mxu0 0.0
        %2288 = vmatpush1.msra.mxu0 0.0
        %2289 = vmatprep.subr.mxu0 0.0
        %2290 = vmatpush1.msra.mxu0 0.0
        %2291 = vmatprep.subr.mxu0 0.0
        %2292 = vmatpush1.msra.mxu0 0.0
        %2293 = vmatprep.subr.mxu0 0.0
        %2294 = vmatpush1.msra.mxu0 0.0
        %2295 = vmatprep.subr.mxu0 0.0
        %2296 = vmatpush1.msra.mxu0 0.0
        %2297 = vmatprep.subr.mxu0 0.0
        %2298 = vmatpush1.msra.mxu0 0.0
        %2299 = vmatprep.subr.mxu0 0.0
        %2300 = vmatpush1.msra.mxu0 0.0
        %2301 = vmatprep.subr.mxu0 0.0
        %2302 = vmatpush1.msra.mxu0 0.0
        %2303 = vmatprep.subr.mxu0 0.0
        %2304 = vmatpush1.msra.mxu0 0.0
        %2305 = vmatprep.subr.mxu0 0.0
        %2306 = vmatpush1.msra.mxu0 0.0
        %2307 = vmatprep.subr.mxu0 0.0
        %2308 = vmatpush1.msra.mxu0 0.0
        %2309 = vmatprep.subr.mxu0 0.0
        %2310 = vmatpush1.msra.mxu0 0.0
        %2311 = vmatprep.subr.mxu0 0.0
        %2312 = vmatpush1.msra.mxu0 0.0
        %2313 = vmatprep.subr.mxu0 0.0
        %2314 = vmatpush1.msra.mxu0 0.0
        %2315 = vmatprep.subr.mxu0 0.0
        %2316 = vmatpush1.msra.mxu0 0.0
        %2317 = vmatprep.subr.mxu0 0.0
        %2318 = vmatpush1.msra.mxu0 0.0
        %2319 = vmatprep.subr.mxu0 0.0
        %2320 = vmatpush1.msra.mxu0 0.0
        %2321 = vmatprep.subr.mxu0 0.0
        %2322 = vmatpush1.msra.mxu0 0.0
        %2323 = vmatprep.subr.mxu0 0.0
        %2324 = vmatpush1.msra.mxu0 0.0
        %2325 = vmatprep.subr.mxu0 0.0
        %2326 = vmatpush1.msra.mxu0 0.0
        %2327 = vmatprep.subr.mxu0 0.0
        %2328 = vmatpush1.msra.mxu0 0.0
        %2329 = vmatprep.subr.mxu0 0.0
        %2330 = vmatpush1.msra.mxu0 0.0
        %2331 = vmatprep.subr.mxu0 0.0
        %2332 = vmatpush1.msra.mxu0 0.0
        %2333 = vmatprep.subr.mxu0 0.0
        %2334 = vmatpush1.msra.mxu0 0.0
        %2335 = vmatprep.mubr.f32.mxu0 0.0
        %2336 = vmatmul.mubr.f32.gmra.mrb[0].mxu0 %v2269
        %v2337 = vpop.f32.mrb[0].mxu0
        %v2338 = vadd.f32 0.0, %v2337
        %v2339 = vpop.f32.mrb[0].mxu0
        %2340 = vdwg.mxu0
        %v2341 = vcombine.low %v2119, %v2265
        %v2342 = vcombine.high %v2119, %v2265
        %v2344 = vunpack.c.l.s4 1983009808
        %v2345 = vunpack.c.0.s8 %v2344
        %v2346 = vlaneseq
        %v2347 = vshrl.u32 %v2346, 7
        %v2348 = vsub.s32 %v2345, %v2347
        %v2349 = vrot.slane %v2341, %v2348
        %v2351 = vunpack.c.l.s4 1983009808
        %v2352 = vunpack.c.0.s8 %v2351
        %v2353 = vlaneseq
        %v2354 = vshrl.u32 %v2353, 7
        %v2355 = vsub.s32 %v2352, %v2354
        %v2356 = vrot.slane %v2342, %v2355
        %v2357 = vcombine.low %v2192, %v2338
        %v2358 = vcombine.high %v2192, %v2338
        %v2360 = vunpack.c.l.s4 1983009808
        %v2361 = vunpack.c.0.s8 %v2360
        %v2362 = vlaneseq
        %v2363 = vshrl.u32 %v2362, 7
        %v2364 = vsub.s32 %v2361, %v2363
        %v2365 = vrot.slane %v2357, %v2364
        %v2367 = vunpack.c.l.s4 1983009808
        %v2368 = vunpack.c.0.s8 %v2367
        %v2369 = vlaneseq
        %v2370 = vshrl.u32 %v2369, 7
        %v2371 = vsub.s32 %v2368, %v2370
        %v2372 = vrot.slane %v2358, %v2371
        %v2373 = vcombine.low %v2349, %v2365
        %v2374 = vcombine.high %v2349, %v2365
        %v2376 = vunpack.c.l.s4 1934713408
        %v2377 = vunpack.c.0.s8 %v2376
        %v2378 = vlaneseq
        %v2379 = vshrl.u32 %v2378, 7
        %v2380 = vsub.s32 %v2377, %v2379
        %v2381 = vrot.slane %v2373, %v2380
        %v2383 = vunpack.c.l.s4 1934713408
        %v2384 = vunpack.c.0.s8 %v2383
        %v2385 = vlaneseq
        %v2386 = vshrl.u32 %v2385, 7
        %v2387 = vsub.s32 %v2384, %v2386
        %v2388 = vrot.slane %v2374, %v2387
        %v2389 = vcombine.low %v2356, %v2372
        %v2390 = vcombine.high %v2356, %v2372
        %v2392 = vunpack.c.l.s4 1934713408
        %v2393 = vunpack.c.0.s8 %v2392
        %v2394 = vlaneseq
        %v2395 = vshrl.u32 %v2394, 7
        %v2396 = vsub.s32 %v2393, %v2395
        %v2397 = vrot.slane %v2389, %v2396
        %v2399 = vunpack.c.l.s4 1934713408
        %v2400 = vunpack.c.0.s8 %v2399
        %v2401 = vlaneseq
        %v2402 = vshrl.u32 %v2401, 7
        %v2403 = vsub.s32 %v2400, %v2402
        %v2404 = vrot.slane %v2390, %v2403
        %v2405 = vcombine.high %v2381, 0.0
        %v2406 = vcombine.high %v2388, 0.0
        %v2407 = vcombine.high %v2397, 0.0
        %v2408 = vcombine.high %v2404, 0.0
        %v2409 = vcombine.low %v2381, %v2388
        %v2411 = vunpack.c.l.s4 1983009808
        %v2412 = vunpack.c.0.s8 %v2411
        %v2413 = vlaneseq
        %v2414 = vshrl.u32 %v2413, 7
        %v2415 = vsub.s32 %v2412, %v2414
        %v2416 = vrot.slane %v2409, %v2415
        %v2417 = vcombine.low %v2405, %v2406
        %v2419 = vunpack.c.l.s4 1983009808
        %v2420 = vunpack.c.0.s8 %v2419
        %v2421 = vlaneseq
        %v2422 = vshrl.u32 %v2421, 7
        %v2423 = vsub.s32 %v2420, %v2422
        %v2424 = vrot.slane %v2417, %v2423
        %v2425 = vcombine.low %v2397, %v2404
        %v2427 = vunpack.c.l.s4 1983009808
        %v2428 = vunpack.c.0.s8 %v2427
        %v2429 = vlaneseq
        %v2430 = vshrl.u32 %v2429, 7
        %v2431 = vsub.s32 %v2428, %v2430
        %v2432 = vrot.slane %v2425, %v2431
        %v2433 = vcombine.low %v2407, %v2408
        %v2435 = vunpack.c.l.s4 1983009808
        %v2436 = vunpack.c.0.s8 %v2435
        %v2437 = vlaneseq
        %v2438 = vshrl.u32 %v2437, 7
        %v2439 = vsub.s32 %v2436, %v2438
        %v2440 = vrot.slane %v2433, %v2439
        %v2441 = vcombine.low %v2416, %v2424
        %v2442 = vcombine.high %v2416, %v2424
        %v2444 = vunpack.c.l.s4 1934713408
        %v2445 = vunpack.c.0.s8 %v2444
        %v2446 = vlaneseq
        %v2447 = vshrl.u32 %v2446, 7
        %v2448 = vsub.s32 %v2445, %v2447
        %v2449 = vrot.slane %v2441, %v2448
        %v2451 = vunpack.c.l.s4 1934713408
        %v2452 = vunpack.c.0.s8 %v2451
        %v2453 = vlaneseq
        %v2454 = vshrl.u32 %v2453, 7
        %v2455 = vsub.s32 %v2452, %v2454
        %v2456 = vrot.slane %v2442, %v2455
        %v2457 = vcombine.low %v2432, %v2440
        %v2458 = vcombine.high %v2432, %v2440
        %v2460 = vunpack.c.l.s4 1934713408
        %v2461 = vunpack.c.0.s8 %v2460
        %v2462 = vlaneseq
        %v2463 = vshrl.u32 %v2462, 7
        %v2464 = vsub.s32 %v2461, %v2463
        %v2465 = vrot.slane %v2457, %v2464
        %v2467 = vunpack.c.l.s4 1934713408
        %v2468 = vunpack.c.0.s8 %v2467
        %v2469 = vlaneseq
        %v2470 = vshrl.u32 %v2469, 7
        %v2471 = vsub.s32 %v2468, %v2470
        %v2472 = vrot.slane %v2458, %v2471
        %v2473 = vcombine.low %v2449, %v2465
        %v2474 = vcombine.high %v2449, %v2465
        %v2475 = vcombine.low %v2456, %v2472
        %v2476 = vcombine.high %v2456, %v2472
        %2478 = vrot.lane.b32.xlu0 %v2474, 8
        %v2479 = vpop.permute.xlu0 %2478
        %2482 = vrot.lane.b32.xlu0 %v2475, 16
        %v2483 = vpop.permute.xlu0 %2482
        %2486 = vrot.lane.b32.xlu0 %v2476, 24
        %v2487 = vpop.permute.xlu0 %2486
        %v2489 = vsel %vm1708, %v2473, %v2479
        %vm2490 = vcmask 130048
        %v2491 = vsel %vm2490, %v2489, %v2483
        %vm2492 = vcmask 195584
        %v2493 = vsel %vm2492, %v2491, %v2487
        %v2494 = vld [vmem:[%s3] sm:$0xff]
        %v2495 = vld [vmem:[%s3 + $0x8] sm:$0xff]
        %v2496 = vld [vmem:[%s3 + $0x10] sm:$0xff]
        %v2497 = vld [vmem:[%s3 + $0x18] sm:$0xff]
        %v2498 = vld [vmem:[%s4] sm:$0x1]
        %v2500 = vlaneseq
        %v2501 = vshrl.u32 %v2500, 7
        %v2502 = vsub.s32 0, %v2501
        %v2503 = vrot.slane %v2498, %v2502
        %v2506 = vsel %vm544, %v2493, 0
        %2508 = vmatprep.subr.mxu0 0.0
        %2509 = vmatpush1.msra.mxu0 %v2494
        %2510 = vmatprep.subr.mxu0 0.0
        %2511 = vmatpush1.msra.mxu0 %v2495
        %2512 = vmatprep.subr.mxu0 0.0
        %2513 = vmatpush1.msra.mxu0 %v2496
        %2514 = vmatprep.subr.mxu0 0.0
        %2515 = vmatpush1.msra.mxu0 %v2497
        %2516 = vmatprep.subr.mxu0 0.0
        %2517 = vmatpush1.msra.mxu0 0.0
        %2518 = vmatprep.subr.mxu0 0.0
        %2519 = vmatpush1.msra.mxu0 0.0
        %2520 = vmatprep.subr.mxu0 0.0
        %2521 = vmatpush1.msra.mxu0 0.0
        %2522 = vmatprep.subr.mxu0 0.0
        %2523 = vmatpush1.msra.mxu0 0.0
        %2524 = vmatprep.subr.mxu0 0.0
        %2525 = vmatpush1.msra.mxu0 0.0
        %2526 = vmatprep.subr.mxu0 0.0
        %2527 = vmatpush1.msra.mxu0 0.0
        %2528 = vmatprep.subr.mxu0 0.0
        %2529 = vmatpush1.msra.mxu0 0.0
        %2530 = vmatprep.subr.mxu0 0.0
        %2531 = vmatpush1.msra.mxu0 0.0
        %2532 = vmatprep.subr.mxu0 0.0
        %2533 = vmatpush1.msra.mxu0 0.0
        %2534 = vmatprep.subr.mxu0 0.0
        %2535 = vmatpush1.msra.mxu0 0.0
        %2536 = vmatprep.subr.mxu0 0.0
        %2537 = vmatpush1.msra.mxu0 0.0
        %2538 = vmatprep.subr.mxu0 0.0
        %2539 = vmatpush1.msra.mxu0 0.0
        %2540 = vmatprep.subr.mxu0 0.0
        %2541 = vmatpush1.msra.mxu0 0.0
        %2542 = vmatprep.subr.mxu0 0.0
        %2543 = vmatpush1.msra.mxu0 0.0
        %2544 = vmatprep.subr.mxu0 0.0
        %2545 = vmatpush1.msra.mxu0 0.0
        %2546 = vmatprep.subr.mxu0 0.0
        %2547 = vmatpush1.msra.mxu0 0.0
        %2548 = vmatprep.subr.mxu0 0.0
        %2549 = vmatpush1.msra.mxu0 0.0
        %2550 = vmatprep.subr.mxu0 0.0
        %2551 = vmatpush1.msra.mxu0 0.0
        %2552 = vmatprep.subr.mxu0 0.0
        %2553 = vmatpush1.msra.mxu0 0.0
        %2554 = vmatprep.subr.mxu0 0.0
        %2555 = vmatpush1.msra.mxu0 0.0
        %2556 = vmatprep.subr.mxu0 0.0
        %2557 = vmatpush1.msra.mxu0 0.0
        %2558 = vmatprep.subr.mxu0 0.0
        %2559 = vmatpush1.msra.mxu0 0.0
        %2560 = vmatprep.subr.mxu0 0.0
        %2561 = vmatpush1.msra.mxu0 0.0
        %2562 = vmatprep.subr.mxu0 0.0
        %2563 = vmatpush1.msra.mxu0 0.0
        %2564 = vmatprep.subr.mxu0 0.0
        %2565 = vmatpush1.msra.mxu0 0.0
        %2566 = vmatprep.subr.mxu0 0.0
        %2567 = vmatpush1.msra.mxu0 0.0
        %2568 = vmatprep.subr.mxu0 0.0
        %2569 = vmatpush1.msra.mxu0 0.0
        %2570 = vmatprep.subr.mxu0 0.0
        %2571 = vmatpush1.msra.mxu0 0.0
        %2572 = vmatprep.mubr.f32.mxu0 0.0
        %2573 = vmatmul.mubr.f32.gmra.mrb[0].mxu0 %v2506
        %v2574 = vpop.f32.mrb[0].mxu0
        %v2575 = vadd.f32 %v2503, %v2574
        %v2576 = vpop.f32.mrb[0].mxu0
        %2577 = vdwg.mxu0
        %v2578 = vadd.f32 %v2575, %v532
        %v2579 = vld [vmem:[#allocation5] sm:$0x1]
        %v2580 = vld [vmem:[#allocation7] sm:$0x1]
        %v2581 = vsel %vm544, %v2578, 0.0
        %2582 = vadd.xlane.f32.xlu0 %v2581
        %v2583 = vpop.xlane.xlu0 %2582
        %v2584 = vrcp.pop 32.0
        %v2585 = vmul.f32 %v2583, %v2584
        %v2586 = vsub.f32 %v2578, %v2585
        %v2587 = vmul.f32 %v2586, %v2586
        %v2588 = vsel %vm544, %v2587, 0.0
        %2589 = vadd.xlane.f32.xlu0 %v2588
        %v2590 = vpop.xlane.xlu0 %2589
        %v2591 = vmul.f32 %v2590, %v2584
        %v2592 = vadd.f32 %v2591, 1e-05
        %v2593 = vrsqrt.pop %v2592
        %v2594 = vmul.f32 %v2586, %v2593
        %v2596 = vlaneseq
        %v2597 = vshrl.u32 %v2596, 7
        %v2598 = vsub.s32 0, %v2597
        %v2599 = vrot.slane %v2579, %v2598
        %v2601 = vmul.f32 %v2594, %v2599
        %v2603 = vlaneseq
        %v2604 = vshrl.u32 %v2603, 7
        %v2605 = vsub.s32 0, %v2604
        %v2606 = vrot.slane %v2580, %v2605
        %v2608 = vadd.f32 %v2601, %v2606
        %v2609 = vld [vmem:[%s7] sm:$0xff]
        %v2610 = vld [vmem:[%s7 + $0x8] sm:$0xff]
        %v2611 = vld [vmem:[%s7 + $0x10] sm:$0xff]
        %v2612 = vld [vmem:[%s7 + $0x18] sm:$0xff]
        %v2613 = vld [vmem:[#allocation8] sm:$0x1]
        %v2615 = vlaneseq
        %v2616 = vshrl.u32 %v2615, 7
        %v2617 = vsub.s32 0, %v2616
        %v2618 = vrot.slane %v2613, %v2617
        %v2621 = vsel %vm544, %v2608, 0
        %2623 = vmatprep.subr.mxu0 0.0
        %2624 = vmatpush1.msra.mxu0 %v2609
        %2625 = vmatprep.subr.mxu0 0.0
        %2626 = vmatpush1.msra.mxu0 %v2610
        %2627 = vmatprep.subr.mxu0 0.0
        %2628 = vmatpush1.msra.mxu0 %v2611
        %2629 = vmatprep.subr.mxu0 0.0
        %2630 = vmatpush1.msra.mxu0 %v2612
        %2631 = vmatprep.subr.mxu0 0.0
        %2632 = vmatpush1.msra.mxu0 0.0
        %2633 = vmatprep.subr.mxu0 0.0
        %2634 = vmatpush1.msra.mxu0 0.0
        %2635 = vmatprep.subr.mxu0 0.0
        %2636 = vmatpush1.msra.mxu0 0.0
        %2637 = vmatprep.subr.mxu0 0.0
        %2638 = vmatpush1.msra.mxu0 0.0
        %2639 = vmatprep.subr.mxu0 0.0
        %2640 = vmatpush1.msra.mxu0 0.0
        %2641 = vmatprep.subr.mxu0 0.0
        %2642 = vmatpush1.msra.mxu0 0.0
        %2643 = vmatprep.subr.mxu0 0.0
        %2644 = vmatpush1.msra.mxu0 0.0
        %2645 = vmatprep.subr.mxu0 0.0
        %2646 = vmatpush1.msra.mxu0 0.0
        %2647 = vmatprep.subr.mxu0 0.0
        %2648 = vmatpush1.msra.mxu0 0.0
        %2649 = vmatprep.subr.mxu0 0.0
        %2650 = vmatpush1.msra.mxu0 0.0
        %2651 = vmatprep.subr.mxu0 0.0
        %2652 = vmatpush1.msra.mxu0 0.0
        %2653 = vmatprep.subr.mxu0 0.0
        %2654 = vmatpush1.msra.mxu0 0.0
        %2655 = vmatprep.subr.mxu0 0.0
        %2656 = vmatpush1.msra.mxu0 0.0
        %2657 = vmatprep.subr.mxu0 0.0
        %2658 = vmatpush1.msra.mxu0 0.0
        %2659 = vmatprep.subr.mxu0 0.0
        %2660 = vmatpush1.msra.mxu0 0.0
        %2661 = vmatprep.subr.mxu0 0.0
        %2662 = vmatpush1.msra.mxu0 0.0
        %2663 = vmatprep.subr.mxu0 0.0
        %2664 = vmatpush1.msra.mxu0 0.0
        %2665 = vmatprep.subr.mxu0 0.0
        %2666 = vmatpush1.msra.mxu0 0.0
        %2667 = vmatprep.subr.mxu0 0.0
        %2668 = vmatpush1.msra.mxu0 0.0
        %2669 = vmatprep.subr.mxu0 0.0
        %2670 = vmatpush1.msra.mxu0 0.0
        %2671 = vmatprep.subr.mxu0 0.0
        %2672 = vmatpush1.msra.mxu0 0.0
        %2673 = vmatprep.subr.mxu0 0.0
        %2674 = vmatpush1.msra.mxu0 0.0
        %2675 = vmatprep.subr.mxu0 0.0
        %2676 = vmatpush1.msra.mxu0 0.0
        %2677 = vmatprep.subr.mxu0 0.0
        %2678 = vmatpush1.msra.mxu0 0.0
        %2679 = vmatprep.subr.mxu0 0.0
        %2680 = vmatpush1.msra.mxu0 0.0
        %2681 = vmatprep.subr.mxu0 0.0
        %2682 = vmatpush1.msra.mxu0 0.0
        %2683 = vmatprep.subr.mxu0 0.0
        %2684 = vmatpush1.msra.mxu0 0.0
        %2685 = vmatprep.subr.mxu0 0.0
        %2686 = vmatpush1.msra.mxu0 0.0
        %2687 = vmatprep.mubr.f32.mxu0 0.0
        %2688 = vmatmul.mubr.f32.gmra.mrb[0].mxu0 %v2621
        %v2689 = vpop.f32.mrb[0].mxu0
        %v2690 = vadd.f32 %v2618, %v2689
        %v2691 = vpop.f32.mrb[0].mxu0
        %2692 = vdwg.mxu0
        %v2693 = vmax.f32 %v2690, 0.0
        %v2694 = vld [vmem:[%s9] sm:$0xff]
        %v2695 = vld [vmem:[%s9 + $0x8] sm:$0xff]
        %v2696 = vld [vmem:[%s9 + $0x10] sm:$0xff]
        %v2697 = vld [vmem:[%s9 + $0x18] sm:$0xff]
        %v2698 = vld [vmem:[%s9 + $0x20] sm:$0xff]
        %v2699 = vld [vmem:[%s9 + $0x28] sm:$0xff]
        %v2700 = vld [vmem:[%s9 + $0x30] sm:$0xff]
        %v2701 = vld [vmem:[%s9 + $0x38] sm:$0xff]
        %v2702 = vld [vmem:[%s10] sm:$0x1]
        %v2704 = vlaneseq
        %v2705 = vshrl.u32 %v2704, 7
        %v2706 = vsub.s32 0, %v2705
        %v2707 = vrot.slane %v2702, %v2706
        %vm2709 = vcmask 523264
        %v2711 = vsel %vm2709, %v2693, 0
        %2713 = vmatprep.subr.mxu0 0.0
        %2714 = vmatpush1.msra.mxu0 %v2694
        %2715 = vmatprep.subr.mxu0 0.0
        %2716 = vmatpush1.msra.mxu0 %v2695
        %2717 = vmatprep.subr.mxu0 0.0
        %2718 = vmatpush1.msra.mxu0 %v2696
        %2719 = vmatprep.subr.mxu0 0.0
        %2720 = vmatpush1.msra.mxu0 %v2697
        %2721 = vmatprep.subr.mxu0 0.0
        %2722 = vmatpush1.msra.mxu0 %v2698
        %2723 = vmatprep.subr.mxu0 0.0
        %2724 = vmatpush1.msra.mxu0 %v2699
        %2725 = vmatprep.subr.mxu0 0.0
        %2726 = vmatpush1.msra.mxu0 %v2700
        %2727 = vmatprep.subr.mxu0 0.0
        %2728 = vmatpush1.msra.mxu0 %v2701
        %2729 = vmatprep.subr.mxu0 0.0
        %2730 = vmatpush1.msra.mxu0 0.0
        %2731 = vmatprep.subr.mxu0 0.0
        %2732 = vmatpush1.msra.mxu0 0.0
        %2733 = vmatprep.subr.mxu0 0.0
        %2734 = vmatpush1.msra.mxu0 0.0
        %2735 = vmatprep.subr.mxu0 0.0
        %2736 = vmatpush1.msra.mxu0 0.0
        %2737 = vmatprep.subr.mxu0 0.0
        %2738 = vmatpush1.msra.mxu0 0.0
        %2739 = vmatprep.subr.mxu0 0.0
        %2740 = vmatpush1.msra.mxu0 0.0
        %2741 = vmatprep.subr.mxu0 0.0
        %2742 = vmatpush1.msra.mxu0 0.0
        %2743 = vmatprep.subr.mxu0 0.0
        %2744 = vmatpush1.msra.mxu0 0.0
        %2745 = vmatprep.subr.mxu0 0.0
        %2746 = vmatpush1.msra.mxu0 0.0
        %2747 = vmatprep.subr.mxu0 0.0
        %2748 = vmatpush1.msra.mxu0 0.0
        %2749 = vmatprep.subr.mxu0 0.0
        %2750 = vmatpush1.msra.mxu0 0.0
        %2751 = vmatprep.subr.mxu0 0.0
        %2752 = vmatpush1.msra.mxu0 0.0
        %2753 = vmatprep.subr.mxu0 0.0
        %2754 = vmatpush1.msra.mxu0 0.0
        %2755 = vmatprep.subr.mxu0 0.0
        %2756 = vmatpush1.msra.mxu0 0.0
        %2757 = vmatprep.subr.mxu0 0.0
        %2758 = vmatpush1.msra.mxu0 0.0
        %2759 = vmatprep.subr.mxu0 0.0
        %2760 = vmatpush1.msra.mxu0 0.0
        %2761 = vmatprep.subr.mxu0 0.0
        %2762 = vmatpush1.msra.mxu0 0.0
        %2763 = vmatprep.subr.mxu0 0.0
        %2764 = vmatpush1.msra.mxu0 0.0
        %2765 = vmatprep.subr.mxu0 0.0
        %2766 = vmatpush1.msra.mxu0 0.0
        %2767 = vmatprep.subr.mxu0 0.0
        %2768 = vmatpush1.msra.mxu0 0.0
        %2769 = vmatprep.subr.mxu0 0.0
        %2770 = vmatpush1.msra.mxu0 0.0
        %2771 = vmatprep.subr.mxu0 0.0
        %2772 = vmatpush1.msra.mxu0 0.0
        %2773 = vmatprep.subr.mxu0 0.0
        %2774 = vmatpush1.msra.mxu0 0.0
        %2775 = vmatprep.subr.mxu0 0.0
        %2776 = vmatpush1.msra.mxu0 0.0
        %2777 = vmatprep.mubr.f32.mxu0 0.0
        %2778 = vmatmul.mubr.f32.gmra.mrb[0].mxu0 %v2711
        %v2779 = vpop.f32.mrb[0].mxu0
        %v2780 = vadd.f32 %v2707, %v2779
        %v2781 = vpop.f32.mrb[0].mxu0
        %2782 = vdwg.mxu0
        %v2783 = vadd.f32 %v2780, %v2608
        %v2784 = vld [vmem:[%s11] sm:$0x1]
        %v2785 = vld [vmem:[%s12] sm:$0x1]
        %v2786 = vsel %vm544, %v2783, 0.0
        %2787 = vadd.xlane.f32.xlu0 %v2786
        %v2788 = vpop.xlane.xlu0 %2787
        %v2789 = vmul.f32 %v2788, %v2584
        %v2790 = vsub.f32 %v2783, %v2789
        %v2791 = vmul.f32 %v2790, %v2790
        %v2792 = vsel %vm544, %v2791, 0.0
        %2793 = vadd.xlane.f32.xlu0 %v2792
        %v2794 = vpop.xlane.xlu0 %2793
        %v2795 = vmul.f32 %v2794, %v2584
        %v2796 = vadd.f32 %v2795, 1e-05
        %v2797 = vrsqrt.pop %v2796
        %v2798 = vmul.f32 %v2790, %v2797
        %v2800 = vlaneseq
        %v2801 = vshrl.u32 %v2800, 7
        %v2802 = vsub.s32 0, %v2801
        %v2803 = vrot.slane %v2784, %v2802
        %v2805 = vmul.f32 %v2798, %v2803
        %v2807 = vlaneseq
        %v2808 = vshrl.u32 %v2807, 7
        %v2809 = vsub.s32 0, %v2808
        %v2810 = vrot.slane %v2785, %v2809
        %v2812 = vadd.f32 %v2805, %v2810
        %2813 = vst.msk [vmem:[%s524] sm:$0xff] %vm544, %v2812
        %s2814 = sand.u32 %s323, 1
        %s2815 = scalar_lea.sflag [#allocation4], %s2814
        %s2816 = sand.u32 %s323, 1
        %s2817 = smul.addr %s2816, 8
        %s2818 = scalar_lea.vmem [#allocation10], %s2817
        %s2819 = sand.u32 %s349, 1
        %s2820 = scalar_lea.sflag [#allocation12], %s2819
        %s2821 = sand.u32 %s349, 1
        %s2822 = smul.addr %s2821, 32
        %s2823 = scalar_lea.vmem [#allocation11], %s2822
        // Predicated region
        $region89: #{tpu_custom_call.1} parent=71 // pred_check
          %p2824 = pneg %p333
        $region90: #{tpu_custom_call.1} parent=71 // pred_check_branch
          %2826 = sbr.rel (%p2824) target = $region92
        $region91: #{tpu_custom_call.1} parent=71 // pred_region
          %s2828 = ssub.s32 128, 128
          %2829 = vsyncadd %s2815, %s2828
          %s2830 = smul.addr %s37, 128
          %s2831 = scalar_lea.hbm %s13, %s2830
          %s2833 = sshll.u32 %s2818, 4
          %s2834 = int_to_ptr.vmem [resolvable:$true] %s2833
          %2836 = dma.vmem_to_hbm [thread:$0]  %s2834, 128, %s2831, %s2815
        $region92: #{tpu_custom_call.1} parent=71 // pred_fallthru
          _
        // Predicated region
        $region93: #{tpu_custom_call.1} parent=71 // pred_check
          %p2837 = pneg %p359
        $region94: #{tpu_custom_call.1} parent=71 // pred_check_branch
          %2839 = sbr.rel (%p2837) target = $region96
        $region95: #{tpu_custom_call.1} parent=71 // pred_region
          %s2841 = ssub.s32 512, 512
          %2842 = vsyncadd %s2820, %s2841
          %s2843 = smul.addr %s37, 128
          %s2844 = scalar_lea.hbm %s14, %s2843
          %s2845 = sshll.u32 %s2823, 4
          %s2846 = int_to_ptr.vmem [resolvable:$true] %s2845
          %2851 = dma.vmem_to_hbm [thread:$0]  %s2846, 512, %s2844, %s2820, 128, 256, 8
        $region96: #{tpu_custom_call.1} parent=71 // pred_fallthru
          _
      $region72: #{tpu_custom_call.1} parent=5 // pred_fallthru
        _
      %p2852 = scmp.le.s32.totalorder 2, %s32
      // Predicated region
      $region97: #{tpu_custom_call.1} parent=5 // pred_check
        %p2853 = pneg %p2852
      $region98: #{tpu_custom_call.1} parent=5 // pred_check_branch
        %2855 = sbr.rel (%p2853) target = $region100
      $region99: #{tpu_custom_call.1} parent=5 // pred_region
        %s2856 = ssub.s32 %s32, 2
        // Predicated region
        $region101: #{tpu_custom_call.1} parent=99 // pred_check
          %p2857 = pneg %p339
        $region102: #{tpu_custom_call.1} parent=99 // pred_check_branch
          %2859 = sbr.rel (%p2857) target = $region104
        $region103: #{tpu_custom_call.1} parent=99 // pred_region
          %s2860 = sand.u32 %s324, 1
          %s2861 = scalar_lea.sflag [#allocation4], %s2860
          %s2862 = sand.u32 %s324, 1
          %s2863 = smul.addr %s2862, 8
          %s2864 = scalar_lea.vmem [#allocation10], %s2863
          %2865 = dma.done %s2861, 128
        $region104: #{tpu_custom_call.1} parent=99 // pred_fallthru
          _
        // Predicated region
        $region105: #{tpu_custom_call.1} parent=99 // pred_check
          %p2866 = pneg %p365
        $region106: #{tpu_custom_call.1} parent=99 // pred_check_branch
          %2868 = sbr.rel (%p2866) target = $region108
        $region107: #{tpu_custom_call.1} parent=99 // pred_region
          %s2869 = sand.u32 %s350, 1
          %s2870 = scalar_lea.sflag [#allocation12], %s2869
          %s2871 = sand.u32 %s350, 1
          %s2872 = smul.addr %s2871, 32
          %s2873 = scalar_lea.vmem [#allocation11], %s2872
          %2874 = dma.done %s2870, 512
        $region108: #{tpu_custom_call.1} parent=99 // pred_fallthru
          _
      $region100: #{tpu_custom_call.1} parent=5 // pred_fallthru
        _
    $region6: #{tpu_custom_call.1} parent=1 // loop_footer
      %s36 = sadd.s32 1, %s32
    $region7: #{tpu_custom_call.1} parent=1 // loop_footer_branch
      %31 = sbr.rel target = $region3
    $region8: #{tpu_custom_call.1} parent=1 // loop_exit
      _
    %2875 = vsyncpa [#allocation3], 1
    %s2876 = scalar_lea.sflag [#allocation3], 1
    %2877 = vsyncpa %s2876, 1
    %2878 = vsyncpa [#allocation6], 1
    %2879 = vsyncpa [#allocation9], 1
    %2880 = vsyncpa [#allocation4], 1
    %s2881 = scalar_lea.sflag [#allocation4], 1
    %2882 = vsyncpa %s2881, 1
    %2883 = vsyncpa [#allocation12], 1
    %s2884 = scalar_lea.sflag [#allocation12], 1
    %2885 = vsyncpa %s2884, 1

</llo_original>
